<compile_context>
chip_gen: v7x
topology: tpu7x:2x2x1
jax: 0.10.0
libtpu: 0.0.40
codegen_flags: <defaults>
</compile_context>

<pallas_src>
import functools

import jax
import jax.numpy as jnp
from jax.experimental import pallas as pl
from jax.experimental.pallas import tpu as pltpu

_W_DTYPE = jnp.bfloat16     # MXU operand dtype for weights
_ACT_DTYPE = jnp.bfloat16   # inter-kernel activation dtype


# ----------------------------------------------------------------------------
# Generation-dependent knobs (VMEM limit, row-tile cap, single-buffer probe)
# ----------------------------------------------------------------------------

def _vmem_capacity_bytes():
    try:
        return int(pltpu.get_tpu_info().vmem_capacity_bytes)
    except Exception:
        return 64 * 1024 * 1024   # conservative (v7x-sized) fallback


_VMEM_BYTES = _vmem_capacity_bytes()
# v7x (64 MiB VMEM): smaller row tiles + ~48 MiB scoped limit.
# v5e/v6e (128 MiB): larger row tiles + ~96 MiB scoped limit.
_ROW_TILE_CAP = 256 if _VMEM_BYTES <= (64 << 20) else 512
_VMEM_LIMIT = int(min(96 << 20, (_VMEM_BYTES * 3) // 4))


def _probe_single_buffering():
    """True iff pipeline_mode=pl.Buffered(1) works end-to-end on this install."""
    try:
        spec = pl.BlockSpec((8, 128), lambda i: (0, 0),
                            pipeline_mode=pl.Buffered(1))

        def _k(c_ref, x_ref, o_ref):
            o_ref[...] = x_ref[...] + c_ref[...]

        out = pl.pallas_call(
            _k,
            out_shape=jax.ShapeDtypeStruct((16, 128), jnp.float32),
            grid=(2,),
            in_specs=[spec, pl.BlockSpec((8, 128), lambda i: (i, 0))],
            out_specs=pl.BlockSpec((8, 128), lambda i: (i, 0)),
        )(jnp.ones((8, 128), jnp.float32), jnp.zeros((16, 128), jnp.float32))
        jax.block_until_ready(out)
        return True
    except Exception:
        return False


_SINGLE_BUFFER_CONSTS = _probe_single_buffering()


def _const_spec(block_shape):
    """BlockSpec for a grid-constant (resident) operand; single-buffered when
    supported (constant blocks are never re-fetched, so the 2nd buffer is waste)."""
    index_map = lambda *_: (0,) * len(block_shape)
    if _SINGLE_BUFFER_CONSTS:
        return pl.BlockSpec(block_shape, index_map, pipeline_mode=pl.Buffered(1))
    return pl.BlockSpec(block_shape, index_map)


def _row_tile(m):
    """Largest row tile <= cap that divides m with >= 2 grid steps (pipelining
    + dual-TensorCore sharding on v7x); falls back to the full extent."""
    for tm in (512, 256, 128, 64, 32, 16, 8):
        if tm <= _ROW_TILE_CAP and m % tm == 0 and m // tm >= 2:
            return tm
    return m


def _ffn_k_tile(dff):
    """d_ff reduction tile: full width when small, else a 128-multiple (K>=512
    keeps the MXU filled while bounding the (tm, tk) hidden activation)."""
    if dff <= 2048:
        return dff
    for tk in (2048, 1024, 512, 256, 128):
        if dff % tk == 0:
            return tk
    return dff


def _mosaic_params(semantics):
    return pltpu.CompilerParams(dimension_semantics=semantics,
                                vmem_limit_bytes=_VMEM_LIMIT)


# ----------------------------------------------------------------------------
# In-kernel helpers
# ----------------------------------------------------------------------------

def _mxu_dot(a, b):
    # bf16 MXU operands, f32 accumulation (intentional downcast of softmax
    # probs / ReLU activations before the MXU).
    return jnp.dot(a.astype(jnp.bfloat16), b.astype(jnp.bfloat16),
                   preferred_element_type=jnp.float32)


def _dot_nt(a, b):
    # a (m, k), b (n, k) -> (m, n); contracts last dims, no XLU transpose.
    return jax.lax.dot_general(a.astype(jnp.bfloat16), b.astype(jnp.bfloat16),
                               (((1,), (1,)), ((), ())),
                               preferred_element_type=jnp.float32)


def _layernorm_f32(y, g, b, eps=1e-5):
    mu = jnp.mean(y, axis=-1, keepdims=True)
    var = jnp.mean((y - mu) * (y - mu), axis=-1, keepdims=True)
    return (y - mu) * jax.lax.rsqrt(var + eps) * g + b


def _softmax_rows(s):
    s = s - jnp.max(s, axis=-1, keepdims=True)
    p = jnp.exp(s)
    return p * pl.reciprocal(jnp.sum(p, axis=-1, keepdims=True), approx=True)


def _mha_out(q, k, v, wo, bo, n_heads, keep_mask):
    """Per-head softmax attention; heads concatenated, ONE K=D output matmul."""
    d_model = q.shape[-1]
    dh = d_model // n_heads
    heads = []
    for h in range(n_heads):
        sl = slice(h * dh, (h + 1) * dh)
        s = _dot_nt(q[:, sl], k[:, sl])              # (tq, Lk) f32
        if keep_mask is not None:
            s = jnp.where(keep_mask, s, -1e30)
        p = _softmax_rows(s)
        heads.append(_mxu_dot(p, v[:, sl]))          # (tq, dh) f32
    attn = jnp.concatenate(heads, axis=-1)           # (tq, D) f32
    return _mxu_dot(attn, wo) + bo                   # (tq, D) f32


# ----------------------------------------------------------------------------
# Self-attention block kernel:  LN(x + OutProj(MHA(x, x)))   (causal optional)
# ----------------------------------------------------------------------------

def _self_attn_kernel(x_ref, wqkv_ref, bqkv_ref, wo_ref, bo_ref, g_ref, b_ref,
                      o_ref, *, n_heads, tq, causal):
    qi = pl.program_id(1)
    row0 = pl.multiple_of(qi * tq, tq)

    x_full = x_ref[0]                                # (L, D) bf16
    seq_len, d_model = x_full.shape
    wqkv = wqkv_ref[...]                             # (D, 3D) bf16
    bqkv = bqkv_ref[...]                             # (1, 3D) f32

    if tq == seq_len:
        # Single q tile: one packed N=3D projection matmul fills the MXU.
        x_tile = x_full
        qkv = _mxu_dot(x_full, wqkv) + bqkv          # (L, 3D) f32
        q = qkv[:, :d_model]
        k = qkv[:, d_model:2 * d_model]
        v = qkv[:, 2 * d_model:]
    else:
        # Tiled q rows: project q only for this tile, k/v for the full sequence.
        x_tile = x_ref[0, pl.ds(row0, tq), :]        # (tq, D)
        q = _mxu_dot(x_tile, wqkv[:, :d_model]) + bqkv[:, :d_model]
        kv = _mxu_dot(x_full, wqkv[:, d_model:]) + bqkv[:, d_model:]
        k = kv[:, :d_model]
        v = kv[:, d_model:]

    keep = None
    if causal:
        rows = row0 + jax.lax.broadcasted_iota(jnp.int32, (tq, seq_len), 0)
        cols = jax.lax.broadcasted_iota(jnp.int32, (tq, seq_len), 1)
        keep = cols <= rows                          # True = attend

    o = _mha_out(q, k, v, wo_ref[...], bo_ref[...], n_heads, keep)
    y = x_tile.astype(jnp.float32) + o               # residual (f32)
    o_ref[0] = _layernorm_f32(y, g_ref[...], b_ref[...]).astype(o_ref.dtype)


def self_attn_block_pallas(x, attn_p, ln_p, n_heads, causal):
    B, L, D = x.shape
    tq = _row_tile(L)
    kernel = functools.partial(_self_attn_kernel, n_heads=n_heads, tq=tq,
                               causal=causal)
    return pl.pallas_call(
        kernel,
        out_shape=jax.ShapeDtypeStruct((B, L, D), x.dtype),
        grid=(B, L // tq),
        in_specs=[
            pl.BlockSpec((1, L, D), lambda b, qi: (b, 0, 0)),  # x (resident per b)
            _const_spec((D, 3 * D)),                           # packed Wqkv
            _const_spec((1, 3 * D)),
            _const_spec((D, D)),                               # Wo
            _const_spec((1, D)),
            _const_spec((1, D)),                               # LN gamma
            _const_spec((1, D)),                               # LN beta
        ],
        out_specs=pl.BlockSpec((1, tq, D), lambda b, qi: (b, qi, 0)),
        compiler_params=_mosaic_params(("parallel", "parallel")),
    )(x, attn_p["wqkv"], attn_p["bqkv"], attn_p["wo"], attn_p["bo"],
      ln_p["g"], ln_p["b"])


# ----------------------------------------------------------------------------
# Cross-attention block kernel:  LN(x + OutProj(MHA(x, cross)))
# ----------------------------------------------------------------------------

def _cross_attn_kernel(xq_ref, xkv_ref, wq_ref, bq_ref, wkv_ref, bkv_ref,
                       wo_ref, bo_ref, g_ref, b_ref, o_ref, *, n_heads):
    xq = xq_ref[0]                                   # (tq, D)
    xkv = xkv_ref[0]                                 # (Lk, D)
    d_model = xq.shape[-1]

    # scale is pre-folded into Wq / bq at init
    q = _mxu_dot(xq, wq_ref[...]) + bq_ref[...]          # (tq, D)
    kv = _mxu_dot(xkv, wkv_ref[...]) + bkv_ref[...]      # (Lk, 2D)
    k = kv[:, :d_model]
    v = kv[:, d_model:]

    o = _mha_out(q, k, v, wo_ref[...], bo_ref[...], n_heads, keep_mask=None)
    y = xq.astype(jnp.float32) + o
    o_ref[0] = _layernorm_f32(y, g_ref[...], b_ref[...]).astype(o_ref.dtype)


def cross_attn_block_pallas(x, cross, attn_p, ln_p, n_heads):
    B, L, D = x.shape
    Lk = cross.shape[1]
    tq = _row_tile(L)
    kernel = functools.partial(_cross_attn_kernel, n_heads=n_heads)
    return pl.pallas_call(
        kernel,
        out_shape=jax.ShapeDtypeStruct((B, L, D), x.dtype),
        grid=(B, L // tq),
        in_specs=[
            pl.BlockSpec((1, tq, D), lambda b, qi: (b, qi, 0)),   # decoder stream tile
            pl.BlockSpec((1, Lk, D), lambda b, qi: (b, 0, 0)),    # encoder memory (resident per b)
            _const_spec((D, D)),                                  # Wq (scale folded in)
            _const_spec((1, D)),
            _const_spec((D, 2 * D)),                              # packed Wkv
            _const_spec((1, 2 * D)),
            _const_spec((D, D)),                                  # Wo
            _const_spec((1, D)),
            _const_spec((1, D)),                                  # LN gamma
            _const_spec((1, D)),                                  # LN beta
        ],
        out_specs=pl.BlockSpec((1, tq, D), lambda b, qi: (b, qi, 0)),
        compiler_params=_mosaic_params(("parallel", "parallel")),
    )(x, cross, attn_p["wq"], attn_p["bq"], attn_p["wkv"], attn_p["bkv"],
      attn_p["wo"], attn_p["bo"], ln_p["g"], ln_p["b"])


# ----------------------------------------------------------------------------
# FFN block kernel (K-tiled over d_ff):  LN(x + W2 @ relu(W1 @ x))
# ----------------------------------------------------------------------------

def _ffn_block_kernel(x_ref, w1_ref, b1_ref, w2_ref, b2_ref, g_ref, b_ref,
                      o_ref, acc_ref):
    k = pl.program_id(1)

    @pl.when(k == 0)
    def _():
        acc_ref[...] = jnp.zeros_like(acc_ref)

    x = x_ref[...]                                   # (tm, D) bf16
    h = _mxu_dot(x, w1_ref[...]) + b1_ref[...]       # (tm, tk) f32
    h = jnp.maximum(h, 0.0)
    acc_ref[...] += _mxu_dot(h, w2_ref[...])         # (tm, D) f32

    @pl.when(k == pl.num_programs(1) - 1)
    def _():
        y = x.astype(jnp.float32) + acc_ref[...] + b2_ref[...]
        o_ref[...] = _layernorm_f32(y, g_ref[...], b_ref[...]).astype(o_ref.dtype)


def ffn_block_pallas(x2d, ffn_p, ln_p):
    M, D = x2d.shape
    Dff = ffn_p["w1"].shape[1]
    tm = _row_tile(M)
    tk = _ffn_k_tile(Dff)
    kt = Dff // tk
    if kt == 1:   # single K step -> weights are grid-constant, single-buffer them
        w1_spec = _const_spec((D, tk))
        b1_spec = _const_spec((1, tk))
        w2_spec = _const_spec((tk, D))
    else:
        w1_spec = pl.BlockSpec((D, tk), lambda i, k: (0, k))
        b1_spec = pl.BlockSpec((1, tk), lambda i, k: (0, k))
        w2_spec = pl.BlockSpec((tk, D), lambda i, k: (k, 0))
    return pl.pallas_call(
        _ffn_block_kernel,
        out_shape=jax.ShapeDtypeStruct((M, D), x2d.dtype),
        grid=(M // tm, kt),
        in_specs=[
            pl.BlockSpec((tm, D), lambda i, k: (i, 0)),
            w1_spec, b1_spec, w2_spec,
            _const_spec((1, D)),     # b2
            _const_spec((1, D)),     # LN gamma
            _const_spec((1, D)),     # LN beta
        ],
        out_specs=pl.BlockSpec((tm, D), lambda i, k: (i, 0)),
        scratch_shapes=[pltpu.VMEM((tm, D), jnp.float32)],
        compiler_params=_mosaic_params(("parallel", "arbitrary")),
    )(x2d, ffn_p["w1"], ffn_p["b1"], ffn_p["w2"], ffn_p["b2"],
      ln_p["g"], ln_p["b"])


# ----------------------------------------------------------------------------
# Final LayerNorm + projection (lane-dense padded output, weights pre-padded)
# ----------------------------------------------------------------------------

def _norm_proj_kernel(x_ref, g_ref, b_ref, wp_ref, bp_ref, o_ref):
    x = x_ref[...].astype(jnp.float32)
    y = _layernorm_f32(x, g_ref[...], b_ref[...])
    o_ref[...] = (_mxu_dot(y, wp_ref[...]) + bp_ref[...]).astype(o_ref.dtype)


def norm_proj_pallas(x2d, ln_p, proj_p, c_out):
    M, D = x2d.shape
    c_pad = proj_p["w_pad"].shape[1]
    tm = _row_tile(M)
    out = pl.pallas_call(
        _norm_proj_kernel,
        out_shape=jax.ShapeDtypeStruct((M, c_pad), jnp.float32),
        grid=(M // tm,),
        in_specs=[
            pl.BlockSpec((tm, D), lambda i: (i, 0)),
            _const_spec((1, D)),
            _const_spec((1, D)),
            _const_spec((D, c_pad)),
            _const_spec((1, c_pad)),
        ],
        out_specs=pl.BlockSpec((tm, c_pad), lambda i: (i, 0)),
        compiler_params=_mosaic_params(("parallel",)),
    )(x2d, ln_p["g"], ln_p["b"], proj_p["w_pad"], proj_p["b_pad"])
    return out[:, :c_out]


# ----------------------------------------------------------------------------
# Model glue
# ----------------------------------------------------------------------------

def decoder_forward(x, cross, params, n_heads, c_out, xMask=None, crossMask=None):
    if crossMask is not None:
        # TODO(synk): arbitrary additive cross-attention masks.
        raise NotImplementedError("crossMask is not supported by the Pallas path")
    # xMask, when provided, is interpreted as the standard causal mask and is
    # regenerated in-kernel (no HBM/VMEM-resident bias).
    causal = xMask is not None

    x = x.astype(_ACT_DTYPE)
    cross = cross.astype(_ACT_DTYPE)
    B, L, D = x.shape

    for lp in params["layers"]:
        x = self_attn_block_pallas(x, lp["self_attn"], lp["ln1"], n_heads, causal)
        x = cross_attn_block_pallas(x, cross, lp["cross_attn"], lp["ln2"], n_heads)
        x = ffn_block_pallas(x.reshape(B * L, D), lp["ffn"], lp["ln3"]).reshape(B, L, D)

    out = norm_proj_pallas(x.reshape(B * L, D), params["norm"], params["proj"], c_out)
    return out.reshape(B, L, c_out)


# ----------------------------------------------------------------------------
# Deterministic parameter init (bf16 matmul weights, f32 biases / LN params;
# attention scale folded into Wq/bq; projection pre-padded to lane width)
# ----------------------------------------------------------------------------

def _init_w(key, din, dout, scale=1.0):
    w = jax.random.normal(key, (din, dout), jnp.float32) / jnp.sqrt(float(din))
    return (w * scale).astype(_W_DTYPE)


def init_self_attn(key, d_model, n_heads):
    kq, kk, kv, ko = jax.random.split(key, 4)
    scale = 1.0 / float(d_model // n_heads) ** 0.5
    wq = _init_w(kq, d_model, d_model, scale=scale)   # 1/sqrt(dh) folded into Wq
    wk = _init_w(kk, d_model, d_model)
    wv = _init_w(kv, d_model, d_model)
    return {
        "wqkv": jnp.concatenate([wq, wk, wv], axis=1),        # packed (D, 3D)
        "bqkv": jnp.zeros((1, 3 * d_model), jnp.float32),     # q-part pre-scaled (zeros)
        "wo": _init_w(ko, d_model, d_model),
        "bo": jnp.zeros((1, d_model), jnp.float32),
    }


def init_cross_attn(key, d_model, n_heads):
    kq, kk, kv, ko = jax.random.split(key, 4)
    scale = 1.0 / float(d_model // n_heads) ** 0.5
    wk = _init_w(kk, d_model, d_model)
    wv = _init_w(kv, d_model, d_model)
    return {
        "wq": _init_w(kq, d_model, d_model, scale=scale),     # scale folded in
        "bq": jnp.zeros((1, d_model), jnp.float32),
        "wkv": jnp.concatenate([wk, wv], axis=1),             # packed (D, 2D)
        "bkv": jnp.zeros((1, 2 * d_model), jnp.float32),
        "wo": _init_w(ko, d_model, d_model),
        "bo": jnp.zeros((1, d_model), jnp.float32),
    }


def init_ln(d_model):
    return {"g": jnp.ones((1, d_model), jnp.float32),
            "b": jnp.zeros((1, d_model), jnp.float32)}


def init_params(key, n_layers, d_model, n_heads, d_ff, c_out):
    layers = []
    keys = jax.random.split(key, n_layers + 1)
    for lk in keys[:-1]:
        k1, k2, k3, k4 = jax.random.split(lk, 4)
        layers.append({
            "self_attn": init_self_attn(k1, d_model, n_heads),
            "cross_attn": init_cross_attn(k2, d_model, n_heads),
            "ffn": {"w1": _init_w(k3, d_model, d_ff),
                    "b1": jnp.zeros((1, d_ff), jnp.float32),
                    "w2": _init_w(k4, d_ff, d_model),
                    "b2": jnp.zeros((1, d_model), jnp.float32)},
            "ln1": init_ln(d_model),
            "ln2": init_ln(d_model),
            "ln3": init_ln(d_model),
        })
    kp = keys[-1]
    c_pad = max(128, ((c_out + 127) // 128) * 128)   # lane-dense output width
    wp = jax.random.normal(kp, (d_model, c_out), jnp.float32) / jnp.sqrt(float(d_model))
    wp = jnp.pad(wp, ((0, 0), (0, c_pad - c_out))).astype(_W_DTYPE)
    return {
        "layers": layers,
        "norm": init_ln(d_model),
        "proj": {"w_pad": wp, "b_pad": jnp.zeros((1, c_pad), jnp.float32)},
    }


# ----------------------------------------------------------------------------
# Main
# ----------------------------------------------------------------------------

if __name__ == "__main__":
    B, L, Lc = 2, 8, 8
    # NOTE: demo sizes (d_model=32, dh=8) are intentionally tiny; production
    # configs should use d_model / head_dim multiples of 128 for full-lane tiles.
    d_model, n_heads, d_ff, c_out, n_layers = 32, 4, 64, 16, 2

    key = jax.random.PRNGKey(0)
    kx, kc, kp = jax.random.split(key, 3)
    x = jax.random.normal(kx, (B, L, d_model), jnp.float32)
    cross = jax.random.normal(kc, (B, Lc, d_model), jnp.float32)
    params = init_params(kp, n_layers, d_model, n_heads, d_ff, c_out)

    # causal self-attention mask (True = attend); regenerated in-kernel
    xMask = jnp.tril(jnp.ones((L, L), dtype=bool))

    fwd = jax.jit(functools.partial(decoder_forward, n_heads=n_heads, c_out=c_out))
    out = fwd(x, cross, params, xMask=xMask, crossMask=None)
    out = jax.block_until_ready(out)
    assert out.shape == (B, L, c_out), out.shape
    assert jnp.all(jnp.isfinite(out))
    print("KERNEL_OK")
</pallas_src>

<mosaic_0001>
module attributes {stable_mosaic.version = 11 : i64} {
  func.func @_k(%arg0: i32, %arg1: memref<8x128xf32, #tpu.memory_space<vmem>>, %arg2: memref<8x128xf32, #tpu.memory_space<vmem>>, %arg3: memref<8x128xf32, #tpu.memory_space<vmem>>) attributes {dimension_semantics = [#tpu.dimension_semantics<arbitrary>], iteration_bounds = array<i64: 2>, scalar_prefetch = 0 : i64, scratch_operands = 0 : i64, tpu.core_type = #tpu.core_type<tc>, window_params = [{pipeline_mode = #tpu.pipeline_mode<synchronous>, transform_indices = @transform_0, window_bounds = array<i64: 8, 128>}, {transform_indices = @transform_1, window_bounds = array<i64: 8, 128>}, {transform_indices = @transform_2, window_bounds = array<i64: 8, 128>}]} {
    %c0 = arith.constant 0 : index
    %c0_0 = arith.constant 0 : index
    %0 = vector.load %arg2[%c0, %c0_0] : memref<8x128xf32, #tpu.memory_space<vmem>>, vector<8x128xf32>
    %c0_1 = arith.constant 0 : index
    %c0_2 = arith.constant 0 : index
    %1 = vector.load %arg1[%c0_1, %c0_2] : memref<8x128xf32, #tpu.memory_space<vmem>>, vector<8x128xf32>
    %2 = arith.addf %0, %1 : vector<8x128xf32>
    %c0_3 = arith.constant 0 : index
    %c0_4 = arith.constant 0 : index
    %3 = vector.load %arg3[%c0_3, %c0_4] : memref<8x128xf32, #tpu.memory_space<vmem>>, vector<8x128xf32>
    tpu.vector_store %arg3[%c0_3, %c0_4], %2 {strides = array<i32>} : memref<8x128xf32, #tpu.memory_space<vmem>>, vector<8x128xf32>,
    return
  }
  func.func @transform_0(%arg0: i32) -> (i32, i32) {
    %c0_i32 = arith.constant 0 : i32
    %c0_i32_0 = arith.constant 0 : i32
    %c0_i32_1 = arith.constant 0 : i32
    return %c0_i32, %c0_i32_0 : i32, i32
  }
  func.func @transform_1(%arg0: i32) -> (i32, i32) {
    %c0_i32 = arith.constant 0 : i32
    %c0_i32_0 = arith.constant 0 : i32
    return %arg0, %c0_i32 : i32, i32
  }
  func.func @transform_2(%arg0: i32) -> (i32, i32) {
    %c0_i32 = arith.constant 0 : i32
    %c0_i32_0 = arith.constant 0 : i32
    return %arg0, %c0_i32 : i32, i32
  }
}

module attributes {stable_mosaic.version = 11 : i64} {
  func.func @_cross_attn_kernel(%arg0: i32, %arg1: i32, %arg2: memref<1x8x32xbf16, #tpu.memory_space<vmem>>, %arg3: memref<1x8x32xbf16, #tpu.memory_space<vmem>>, %arg4: memref<32x32xbf16, #tpu.memory_space<vmem>>, %arg5: memref<1x32xf32, #tpu.memory_space<vmem>>, %arg6: memref<32x64xbf16, #tpu.memory_space<vmem>>, %arg7: memref<1x64xf32, #tpu.memory_space<vmem>>, %arg8: memref<32x32xbf16, #tpu.memory_space<vmem>>, %arg9: memref<1x32xf32, #tpu.memory_space<vmem>>, %arg10: memref<1x32xf32, #tpu.memory_space<vmem>>, %arg11: memref<1x32xf32, #tpu.memory_space<vmem>>, %arg12: memref<1x8x32xbf16, #tpu.memory_space<vmem>>) attributes {dimension_semantics = [#tpu.dimension_semantics<parallel>, #tpu.dimension_semantics<parallel>], iteration_bounds = array<i64: 2, 1>, scalar_prefetch = 0 : i64, scratch_operands = 0 : i64, tpu.core_type = #tpu.core_type<tc>, window_params = [{transform_indices = @transform_0, window_bounds = array<i64: 1, 8, 32>}, {transform_indices = @transform_1, window_bounds = array<i64: 1, 8, 32>}, {pipeline_mode = #tpu.pipeline_mode<synchronous>, transform_indices = @transform_2, window_bounds = array<i64: 32, 32>}, {pipeline_mode = #tpu.pipeline_mode<synchronous>, transform_indices = @transform_3, window_bounds = array<i64: 1, 32>}, {pipeline_mode = #tpu.pipeline_mode<synchronous>, transform_indices = @transform_4, window_bounds = array<i64: 32, 64>}, {pipeline_mode = #tpu.pipeline_mode<synchronous>, transform_indices = @transform_5, window_bounds = array<i64: 1, 64>}, {pipeline_mode = #tpu.pipeline_mode<synchronous>, transform_indices = @transform_6, window_bounds = array<i64: 32, 32>}, {pipeline_mode = #tpu.pipeline_mode<synchronous>, transform_indices = @transform_7, window_bounds = array<i64: 1, 32>}, {pipeline_mode = #tpu.pipeline_mode<synchronous>, transform_indices = @transform_8, window_bounds = array<i64: 1, 32>}, {pipeline_mode = #tpu.pipeline_mode<synchronous>, transform_indices = @transform_9, window_bounds = array<i64: 1, 32>}, {transform_indices = @transform_10, window_bounds = array<i64: 1, 8, 32>}]} {
    %c0 = arith.constant 0 : index
    %c0_0 = arith.constant 0 : index
    %c0_1 = arith.constant 0 : index
    %0 = vector.load %arg2[%c0, %c0_0, %c0_1] : memref<1x8x32xbf16, #tpu.memory_space<vmem>>, vector<1x8x32xbf16>
    %1 = vector.shape_cast %0 : vector<1x8x32xbf16> to vector<8x32xbf16>
    %c0_2 = arith.constant 0 : index
    %c0_3 = arith.constant 0 : index
    %c0_4 = arith.constant 0 : index
    %2 = vector.load %arg3[%c0_2, %c0_3, %c0_4] : memref<1x8x32xbf16, #tpu.memory_space<vmem>>, vector<1x8x32xbf16>
    %3 = vector.shape_cast %2 : vector<1x8x32xbf16> to vector<8x32xbf16>
    %c0_5 = arith.constant 0 : index
    %c0_6 = arith.constant 0 : index
    %4 = vector.load %arg4[%c0_5, %c0_6] : memref<32x32xbf16, #tpu.memory_space<vmem>>, vector<32x32xbf16>
    %cst = arith.constant dense<0.000000e+00> : vector<8x32xf32>
    %5 = tpu.matmul %1, %4, %cst {dimension_numbers = #tpu.dot_dimension_numbers<[1], [0], [0], [1], [0, 0, 1, 1], [], []>} : vector<8x32xbf16>, vector<32x32xbf16>, vector<8x32xf32> -> vector<8x32xf32>
    %c0_7 = arith.constant 0 : index
    %c0_8 = arith.constant 0 : index
    %6 = vector.load %arg5[%c0_7, %c0_8] : memref<1x32xf32, #tpu.memory_space<vmem>>, vector<1x32xf32>
    %7 = vector.broadcast %6 : vector<1x32xf32> to vector<8x32xf32>
    %8 = arith.addf %5, %7 : vector<8x32xf32>
    %c0_9 = arith.constant 0 : index
    %c0_10 = arith.constant 0 : index
    %9 = vector.load %arg6[%c0_9, %c0_10] : memref<32x64xbf16, #tpu.memory_space<vmem>>, vector<32x64xbf16>
    %cst_11 = arith.constant dense<0.000000e+00> : vector<8x64xf32>
    %10 = tpu.matmul %3, %9, %cst_11 {dimension_numbers = #tpu.dot_dimension_numbers<[1], [0], [0], [1], [0, 0, 1, 1], [], []>} : vector<8x32xbf16>, vector<32x64xbf16>, vector<8x64xf32> -> vector<8x64xf32>
    %c0_12 = arith.constant 0 : index
    %c0_13 = arith.constant 0 : index
    %11 = vector.load %arg7[%c0_12, %c0_13] : memref<1x64xf32, #tpu.memory_space<vmem>>, vector<1x64xf32>
    %12 = vector.broadcast %11 : vector<1x64xf32> to vector<8x64xf32>
    %13 = arith.addf %10, %12 : vector<8x64xf32>
    %14 = vector.extract_strided_slice %13 {offsets = [0, 0], sizes = [8, 32], strides = [1, 1]} : vector<8x64xf32> to vector<8x32xf32>
    %15 = vector.extract_strided_slice %13 {offsets = [0, 32], sizes = [8, 32], strides = [1, 1]} : vector<8x64xf32> to vector<8x32xf32>
    %c0_14 = arith.constant 0 : index
    %c0_15 = arith.constant 0 : index
    %16 = vector.load %arg8[%c0_14, %c0_15] : memref<32x32xbf16, #tpu.memory_space<vmem>>, vector<32x32xbf16>
    %c0_16 = arith.constant 0 : index
    %c0_17 = arith.constant 0 : index
    %17 = vector.load %arg9[%c0_16, %c0_17] : memref<1x32xf32, #tpu.memory_space<vmem>>, vector<1x32xf32>
    %18 = vector.extract_strided_slice %8 {offsets = [0, 0], sizes = [8, 8], strides = [1, 1]} : vector<8x32xf32> to vector<8x8xf32>
    %19 = vector.extract_strided_slice %14 {offsets = [0, 0], sizes = [8, 8], strides = [1, 1]} : vector<8x32xf32> to vector<8x8xf32>
    %20 = arith.truncf %18 : vector<8x8xf32> to vector<8x8xbf16>
    %21 = arith.truncf %19 : vector<8x8xf32> to vector<8x8xbf16>
    %cst_18 = arith.constant dense<0.000000e+00> : vector<8x8xf32>
    %22 = tpu.matmul %20, %21, %cst_18 {dimension_numbers = #tpu.dot_dimension_numbers<[1], [1], [0], [0], [0, 0, 1, 0], [], []>} : vector<8x8xbf16>, vector<8x8xbf16>, vector<8x8xf32> -> vector<8x8xf32>
    %cst_19 = arith.constant dense<0xFF800000> : vector<8xf32>
    %23 = vector.multi_reduction <maximumf>, %22, %cst_19 [1] : vector<8x8xf32> to vector<8xf32>
    %24 = vector.shape_cast %23 : vector<8xf32> to vector<8x1xf32>
    %25 = vector.broadcast %24 : vector<8x1xf32> to vector<8x8xf32>
    %26 = arith.subf %22, %25 : vector<8x8xf32>
    %27 = math.exp %26 : vector<8x8xf32>
    %cst_20 = arith.constant dense<0.000000e+00> : vector<8xf32>
    %28 = vector.multi_reduction <add>, %27, %cst_20 [1] : vector<8x8xf32> to vector<8xf32>
    %29 = vector.shape_cast %28 : vector<8xf32> to vector<8x1xf32>
    %30 = tpu.reciprocal %29 {approx = true} : vector<8x1xf32> -> vector<8x1xf32>
    %31 = vector.broadcast %30 : vector<8x1xf32> to vector<8x8xf32>
    %32 = arith.mulf %27, %31 : vector<8x8xf32>
    %33 = vector.extract_strided_slice %15 {offsets = [0, 0], sizes = [8, 8], strides = [1, 1]} : vector<8x32xf32> to vector<8x8xf32>
    %34 = arith.truncf %32 : vector<8x8xf32> to vector<8x8xbf16>
    %35 = arith.truncf %33 : vector<8x8xf32> to vector<8x8xbf16>
    %cst_21 = arith.constant dense<0.000000e+00> : vector<8x8xf32>
    %36 = tpu.matmul %34, %35, %cst_21 {dimension_numbers = #tpu.dot_dimension_numbers<[1], [0], [0], [1], [0, 0, 1, 1], [], []>} : vector<8x8xbf16>, vector<8x8xbf16>, vector<8x8xf32> -> vector<8x8xf32>
    %37 = vector.extract_strided_slice %8 {offsets = [0, 8], sizes = [8, 8], strides = [1, 1]} : vector<8x32xf32> to vector<8x8xf32>
    %38 = vector.extract_strided_slice %14 {offsets = [0, 8], sizes = [8, 8], strides = [1, 1]} : vector<8x32xf32> to vector<8x8xf32>
    %39 = arith.truncf %37 : vector<8x8xf32> to vector<8x8xbf16>
    %40 = arith.truncf %38 : vector<8x8xf32> to vector<8x8xbf16>
    %cst_22 = arith.constant dense<0.000000e+00> : vector<8x8xf32>
    %41 = tpu.matmul %39, %40, %cst_22 {dimension_numbers = #tpu.dot_dimension_numbers<[1], [1], [0], [0], [0, 0, 1, 0], [], []>} : vector<8x8xbf16>, vector<8x8xbf16>, vector<8x8xf32> -> vector<8x8xf32>
    %cst_23 = arith.constant dense<0xFF800000> : vector<8xf32>
    %42 = vector.multi_reduction <maximumf>, %41, %cst_23 [1] : vector<8x8xf32> to vector<8xf32>
    %43 = vector.shape_cast %42 : vector<8xf32> to vector<8x1xf32>
    %44 = vector.broadcast %43 : vector<8x1xf32> to vector<8x8xf32>
    %45 = arith.subf %41, %44 : vector<8x8xf32>
    %46 = math.exp %45 : vector<8x8xf32>
    %cst_24 = arith.constant dense<0.000000e+00> : vector<8xf32>
    %47 = vector.multi_reduction <add>, %46, %cst_24 [1] : vector<8x8xf32> to vector<8xf32>
    %48 = vector.shape_cast %47 : vector<8xf32> to vector<8x1xf32>
    %49 = tpu.reciprocal %48 {approx = true} : vector<8x1xf32> -> vector<8x1xf32>
    %50 = vector.broadcast %49 : vector<8x1xf32> to vector<8x8xf32>
    %51 = arith.mulf %46, %50 : vector<8x8xf32>
    %52 = vector.extract_strided_slice %15 {offsets = [0, 8], sizes = [8, 8], strides = [1, 1]} : vector<8x32xf32> to vector<8x8xf32>
    %53 = arith.truncf %51 : vector<8x8xf32> to vector<8x8xbf16>
    %54 = arith.truncf %52 : vector<8x8xf32> to vector<8x8xbf16>
    %cst_25 = arith.constant dense<0.000000e+00> : vector<8x8xf32>
    %55 = tpu.matmul %53, %54, %cst_25 {dimension_numbers = #tpu.dot_dimension_numbers<[1], [0], [0], [1], [0, 0, 1, 1], [], []>} : vector<8x8xbf16>, vector<8x8xbf16>, vector<8x8xf32> -> vector<8x8xf32>
    %56 = vector.extract_strided_slice %8 {offsets = [0, 16], sizes = [8, 8], strides = [1, 1]} : vector<8x32xf32> to vector<8x8xf32>
    %57 = vector.extract_strided_slice %14 {offsets = [0, 16], sizes = [8, 8], strides = [1, 1]} : vector<8x32xf32> to vector<8x8xf32>
    %58 = arith.truncf %56 : vector<8x8xf32> to vector<8x8xbf16>
    %59 = arith.truncf %57 : vector<8x8xf32> to vector<8x8xbf16>
    %cst_26 = arith.constant dense<0.000000e+00> : vector<8x8xf32>
    %60 = tpu.matmul %58, %59, %cst_26 {dimension_numbers = #tpu.dot_dimension_numbers<[1], [1], [0], [0], [0, 0, 1, 0], [], []>} : vector<8x8xbf16>, vector<8x8xbf16>, vector<8x8xf32> -> vector<8x8xf32>
    %cst_27 = arith.constant dense<0xFF800000> : vector<8xf32>
    %61 = vector.multi_reduction <maximumf>, %60, %cst_27 [1] : vector<8x8xf32> to vector<8xf32>
    %62 = vector.shape_cast %61 : vector<8xf32> to vector<8x1xf32>
    %63 = vector.broadcast %62 : vector<8x1xf32> to vector<8x8xf32>
    %64 = arith.subf %60, %63 : vector<8x8xf32>
    %65 = math.exp %64 : vector<8x8xf32>
    %cst_28 = arith.constant dense<0.000000e+00> : vector<8xf32>
    %66 = vector.multi_reduction <add>, %65, %cst_28 [1] : vector<8x8xf32> to vector<8xf32>
    %67 = vector.shape_cast %66 : vector<8xf32> to vector<8x1xf32>
    %68 = tpu.reciprocal %67 {approx = true} : vector<8x1xf32> -> vector<8x1xf32>
    %69 = vector.broadcast %68 : vector<8x1xf32> to vector<8x8xf32>
    %70 = arith.mulf %65, %69 : vector<8x8xf32>
    %71 = vector.extract_strided_slice %15 {offsets = [0, 16], sizes = [8, 8], strides = [1, 1]} : vector<8x32xf32> to vector<8x8xf32>
    %72 = arith.truncf %70 : vector<8x8xf32> to vector<8x8xbf16>
    %73 = arith.truncf %71 : vector<8x8xf32> to vector<8x8xbf16>
    %cst_29 = arith.constant dense<0.000000e+00> : vector<8x8xf32>
    %74 = tpu.matmul %72, %73, %cst_29 {dimension_numbers = #tpu.dot_dimension_numbers<[1], [0], [0], [1], [0, 0, 1, 1], [], []>} : vector<8x8xbf16>, vector<8x8xbf16>, vector<8x8xf32> -> vector<8x8xf32>
    %75 = vector.extract_strided_slice %8 {offsets = [0, 24], sizes = [8, 8], strides = [1, 1]} : vector<8x32xf32> to vector<8x8xf32>
    %76 = vector.extract_strided_slice %14 {offsets = [0, 24], sizes = [8, 8], strides = [1, 1]} : vector<8x32xf32> to vector<8x8xf32>
    %77 = arith.truncf %75 : vector<8x8xf32> to vector<8x8xbf16>
    %78 = arith.truncf %76 : vector<8x8xf32> to vector<8x8xbf16>
    %cst_30 = arith.constant dense<0.000000e+00> : vector<8x8xf32>
    %79 = tpu.matmul %77, %78, %cst_30 {dimension_numbers = #tpu.dot_dimension_numbers<[1], [1], [0], [0], [0, 0, 1, 0], [], []>} : vector<8x8xbf16>, vector<8x8xbf16>, vector<8x8xf32> -> vector<8x8xf32>
    %cst_31 = arith.constant dense<0xFF800000> : vector<8xf32>
    %80 = vector.multi_reduction <maximumf>, %79, %cst_31 [1] : vector<8x8xf32> to vector<8xf32>
    %81 = vector.shape_cast %80 : vector<8xf32> to vector<8x1xf32>
    %82 = vector.broadcast %81 : vector<8x1xf32> to vector<8x8xf32>
    %83 = arith.subf %79, %82 : vector<8x8xf32>
    %84 = math.exp %83 : vector<8x8xf32>
    %cst_32 = arith.constant dense<0.000000e+00> : vector<8xf32>
    %85 = vector.multi_reduction <add>, %84, %cst_32 [1] : vector<8x8xf32> to vector<8xf32>
    %86 = vector.shape_cast %85 : vector<8xf32> to vector<8x1xf32>
    %87 = tpu.reciprocal %86 {approx = true} : vector<8x1xf32> -> vector<8x1xf32>
    %88 = vector.broadcast %87 : vector<8x1xf32> to vector<8x8xf32>
    %89 = arith.mulf %84, %88 : vector<8x8xf32>
    %90 = vector.extract_strided_slice %15 {offsets = [0, 24], sizes = [8, 8], strides = [1, 1]} : vector<8x32xf32> to vector<8x8xf32>
    %91 = arith.truncf %89 : vector<8x8xf32> to vector<8x8xbf16>
    %92 = arith.truncf %90 : vector<8x8xf32> to vector<8x8xbf16>
    %cst_33 = arith.constant dense<0.000000e+00> : vector<8x8xf32>
    %93 = tpu.matmul %91, %92, %cst_33 {dimension_numbers = #tpu.dot_dimension_numbers<[1], [0], [0], [1], [0, 0, 1, 1], [], []>} : vector<8x8xbf16>, vector<8x8xbf16>, vector<8x8xf32> -> vector<8x8xf32>
    %94 = tpu.concatenate %36, %55, %74, %93 in 1 : vector<8x8xf32>, vector<8x8xf32>, vector<8x8xf32>, vector<8x8xf32> -> vector<8x32xf32>
    %95 = arith.truncf %94 : vector<8x32xf32> to vector<8x32xbf16>
    %cst_34 = arith.constant dense<0.000000e+00> : vector<8x32xf32>
    %96 = tpu.matmul %95, %16, %cst_34 {dimension_numbers = #tpu.dot_dimension_numbers<[1], [0], [0], [1], [0, 0, 1, 1], [], []>} : vector<8x32xbf16>, vector<32x32xbf16>, vector<8x32xf32> -> vector<8x32xf32>
    %97 = vector.broadcast %17 : vector<1x32xf32> to vector<8x32xf32>
    %98 = arith.addf %96, %97 : vector<8x32xf32>
    %99 = arith.extf %1 : vector<8x32xbf16> to vector<8x32xf32>
    %100 = arith.addf %99, %98 : vector<8x32xf32>
    %c0_35 = arith.constant 0 : index
    %c0_36 = arith.constant 0 : index
    %101 = vector.load %arg10[%c0_35, %c0_36] : memref<1x32xf32, #tpu.memory_space<vmem>>, vector<1x32xf32>
    %c0_37 = arith.constant 0 : index
    %c0_38 = arith.constant 0 : index
    %102 = vector.load %arg11[%c0_37, %c0_38] : memref<1x32xf32, #tpu.memory_space<vmem>>, vector<1x32xf32>
    %cst_39 = arith.constant dense<0.000000e+00> : vector<8xf32>
    %103 = vector.multi_reduction <add>, %100, %cst_39 [1] : vector<8x32xf32> to vector<8xf32>
    %104 = vector.shape_cast %103 : vector<8xf32> to vector<8x1xf32>
    %cst_40 = arith.constant 3.200000e+01 : f32
    %105 = vector.broadcast %cst_40 : f32 to vector<8x1xf32>
    %106 = arith.divf %104, %105 : vector<8x1xf32>
    %107 = vector.broadcast %106 : vector<8x1xf32> to vector<8x32xf32>
    %108 = arith.subf %100, %107 : vector<8x32xf32>
    %109 = vector.broadcast %106 : vector<8x1xf32> to vector<8x32xf32>
    %110 = arith.subf %100, %109 : vector<8x32xf32>
    %111 = arith.mulf %108, %110 : vector<8x32xf32>
    %cst_41 = arith.constant dense<0.000000e+00> : vector<8xf32>
    %112 = vector.multi_reduction <add>, %111, %cst_41 [1] : vector<8x32xf32> to vector<8xf32>
    %113 = vector.shape_cast %112 : vector<8xf32> to vector<8x1xf32>
    %cst_42 = arith.constant 3.200000e+01 : f32
    %114 = vector.broadcast %cst_42 : f32 to vector<8x1xf32>
    %115 = arith.divf %113, %114 : vector<8x1xf32>
    %116 = vector.broadcast %106 : vector<8x1xf32> to vector<8x32xf32>
    %117 = arith.subf %100, %116 : vector<8x32xf32>
    %cst_43 = arith.constant 9.99999974E-6 : f32
    %118 = vector.broadcast %cst_43 : f32 to vector<8x1xf32>
    %119 = arith.addf %115, %118 : vector<8x1xf32>
    %120 = math.rsqrt %119 : vector<8x1xf32>
    %121 = vector.broadcast %120 : vector<8x1xf32> to vector<8x32xf32>
    %122 = arith.mulf %117, %121 : vector<8x32xf32>
    %123 = vector.broadcast %101 : vector<1x32xf32> to vector<8x32xf32>
    %124 = arith.mulf %122, %123 : vector<8x32xf32>
    %125 = vector.broadcast %102 : vector<1x32xf32> to vector<8x32xf32>
    %126 = arith.addf %124, %125 : vector<8x32xf32>
    %127 = arith.truncf %126 : vector<8x32xf32> to vector<8x32xbf16>
    %c0_44 = arith.constant 0 : index
    %c0_45 = arith.constant 0 : index
    %c0_46 = arith.constant 0 : index
    %128 = vector.load %arg12[%c0_44, %c0_45, %c0_46] : memref<1x8x32xbf16, #tpu.memory_space<vmem>>, vector<1x8x32xbf16>
    %129 = vector.shape_cast %128 : vector<1x8x32xbf16> to vector<8x32xbf16>
    %130 = vector.shape_cast %127 : vector<8x32xbf16> to vector<1x8x32xbf16>
    tpu.vector_store %arg12[%c0_44, %c0_45, %c0_46], %130 {strides = array<i32>} : memref<1x8x32xbf16, #tpu.memory_space<vmem>>, vector<1x8x32xbf16>,
    return
  }
  func.func @transform_0(%arg0: i32, %arg1: i32) -> (i32, i32, i32) {
    %c0_i32 = arith.constant 0 : i32
    %c0_i32_0 = arith.constant 0 : i32
    return %arg0, %arg1, %c0_i32 : i32, i32, i32
  }
  func.func @transform_1(%arg0: i32, %arg1: i32) -> (i32, i32, i32) {
    %c0_i32 = arith.constant 0 : i32
    %c0_i32_0 = arith.constant 0 : i32
    %c0_i32_1 = arith.constant 0 : i32
    return %arg0, %c0_i32, %c0_i32_0 : i32, i32, i32
  }
  func.func @transform_2(%arg0: i32, %arg1: i32) -> (i32, i32) {
    %c0_i32 = arith.constant 0 : i32
    %c0_i32_0 = arith.constant 0 : i32
    %c0_i32_1 = arith.constant 0 : i32
    return %c0_i32, %c0_i32_0 : i32, i32
  }
  func.func @transform_3(%arg0: i32, %arg1: i32) -> (i32, i32) {
    %c0_i32 = arith.constant 0 : i32
    %c0_i32_0 = arith.constant 0 : i32
    %c0_i32_1 = arith.constant 0 : i32
    return %c0_i32, %c0_i32_0 : i32, i32
  }
  func.func @transform_4(%arg0: i32, %arg1: i32) -> (i32, i32) {
    %c0_i32 = arith.constant 0 : i32
    %c0_i32_0 = arith.constant 0 : i32
    %c0_i32_1 = arith.constant 0 : i32
    return %c0_i32, %c0_i32_0 : i32, i32
  }
  func.func @transform_5(%arg0: i32, %arg1: i32) -> (i32, i32) {
    %c0_i32 = arith.constant 0 : i32
    %c0_i32_0 = arith.constant 0 : i32
    %c0_i32_1 = arith.constant 0 : i32
    return %c0_i32, %c0_i32_0 : i32, i32
  }
  func.func @transform_6(%arg0: i32, %arg1: i32) -> (i32, i32) {
    %c0_i32 = arith.constant 0 : i32
    %c0_i32_0 = arith.constant 0 : i32
    %c0_i32_1 = arith.constant 0 : i32
    return %c0_i32, %c0_i32_0 : i32, i32
  }
  func.func @transform_7(%arg0: i32, %arg1: i32) -> (i32, i32) {
    %c0_i32 = arith.constant 0 : i32
    %c0_i32_0 = arith.constant 0 : i32
    %c0_i32_1 = arith.constant 0 : i32
    return %c0_i32, %c0_i32_0 : i32, i32
  }
  func.func @transform_8(%arg0: i32, %arg1: i32) -> (i32, i32) {
    %c0_i32 = arith.constant 0 : i32
    %c0_i32_0 = arith.constant 0 : i32
    %c0_i32_1 = arith.constant 0 : i32
    return %c0_i32, %c0_i32_0 : i32, i32
  }
  func.func @transform_9(%arg0: i32, %arg1: i32) -> (i32, i32) {
    %c0_i32 = arith.constant 0 : i32
    %c0_i32_0 = arith.constant 0 : i32
    %c0_i32_1 = arith.constant 0 : i32
    return %c0_i32, %c0_i32_0 : i32, i32
  }
  func.func @transform_10(%arg0: i32, %arg1: i32) -> (i32, i32, i32) {
    %c0_i32 = arith.constant 0 : i32
    %c0_i32_0 = arith.constant 0 : i32
    return %arg0, %arg1, %c0_i32 : i32, i32, i32
  }
}

module attributes {stable_mosaic.version = 11 : i64} {
  func.func @_self_attn_kernel(%arg0: i32, %arg1: i32, %arg2: memref<1x8x32xbf16, #tpu.memory_space<vmem>>, %arg3: memref<32x96xbf16, #tpu.memory_space<vmem>>, %arg4: memref<1x96xf32, #tpu.memory_space<vmem>>, %arg5: memref<32x32xbf16, #tpu.memory_space<vmem>>, %arg6: memref<1x32xf32, #tpu.memory_space<vmem>>, %arg7: memref<1x32xf32, #tpu.memory_space<vmem>>, %arg8: memref<1x32xf32, #tpu.memory_space<vmem>>, %arg9: memref<1x8x32xbf16, #tpu.memory_space<vmem>>) attributes {dimension_semantics = [#tpu.dimension_semantics<parallel>, #tpu.dimension_semantics<parallel>], iteration_bounds = array<i64: 2, 1>, scalar_prefetch = 0 : i64, scratch_operands = 0 : i64, tpu.core_type = #tpu.core_type<tc>, window_params = [{transform_indices = @transform_0, window_bounds = array<i64: 1, 8, 32>}, {pipeline_mode = #tpu.pipeline_mode<synchronous>, transform_indices = @transform_1, window_bounds = array<i64: 32, 96>}, {pipeline_mode = #tpu.pipeline_mode<synchronous>, transform_indices = @transform_2, window_bounds = array<i64: 1, 96>}, {pipeline_mode = #tpu.pipeline_mode<synchronous>, transform_indices = @transform_3, window_bounds = array<i64: 32, 32>}, {pipeline_mode = #tpu.pipeline_mode<synchronous>, transform_indices = @transform_4, window_bounds = array<i64: 1, 32>}, {pipeline_mode = #tpu.pipeline_mode<synchronous>, transform_indices = @transform_5, window_bounds = array<i64: 1, 32>}, {pipeline_mode = #tpu.pipeline_mode<synchronous>, transform_indices = @transform_6, window_bounds = array<i64: 1, 32>}, {transform_indices = @transform_7, window_bounds = array<i64: 1, 8, 32>}]} {
    %c8_i32 = arith.constant 8 : i32
    %0 = arith.muli %arg1, %c8_i32 : i32
    %1 = tpu.assume_multiple %0, 8 : i32
    %c0 = arith.constant 0 : index
    %c0_0 = arith.constant 0 : index
    %c0_1 = arith.constant 0 : index
    %2 = vector.load %arg2[%c0, %c0_0, %c0_1] : memref<1x8x32xbf16, #tpu.memory_space<vmem>>, vector<1x8x32xbf16>
    %3 = vector.shape_cast %2 : vector<1x8x32xbf16> to vector<8x32xbf16>
    %c0_2 = arith.constant 0 : index
    %c0_3 = arith.constant 0 : index
    %4 = vector.load %arg3[%c0_2, %c0_3] : memref<32x96xbf16, #tpu.memory_space<vmem>>, vector<32x96xbf16>
    %c0_4 = arith.constant 0 : index
    %c0_5 = arith.constant 0 : index
    %5 = vector.load %arg4[%c0_4, %c0_5] : memref<1x96xf32, #tpu.memory_space<vmem>>, vector<1x96xf32>
    %cst = arith.constant dense<0.000000e+00> : vector<8x96xf32>
    %6 = tpu.matmul %3, %4, %cst {dimension_numbers = #tpu.dot_dimension_numbers<[1], [0], [0], [1], [0, 0, 1, 1], [], []>} : vector<8x32xbf16>, vector<32x96xbf16>, vector<8x96xf32> -> vector<8x96xf32>
    %7 = vector.broadcast %5 : vector<1x96xf32> to vector<8x96xf32>
    %8 = arith.addf %6, %7 : vector<8x96xf32>
    %9 = vector.extract_strided_slice %8 {offsets = [0, 0], sizes = [8, 32], strides = [1, 1]} : vector<8x96xf32> to vector<8x32xf32>
    %10 = vector.extract_strided_slice %8 {offsets = [0, 32], sizes = [8, 32], strides = [1, 1]} : vector<8x96xf32> to vector<8x32xf32>
    %11 = vector.extract_strided_slice %8 {offsets = [0, 64], sizes = [8, 32], strides = [1, 1]} : vector<8x96xf32> to vector<8x32xf32>
    %12 = tpu.iota {dimensions = array<i32: 0>} : vector<8x8xi32>
    %13 = vector.broadcast %1 : i32 to vector<8x8xi32>
    %14 = arith.addi %13, %12 : vector<8x8xi32>
    %15 = tpu.iota {dimensions = array<i32: 1>} : vector<8x8xi32>
    %16 = arith.cmpi sle, %15, %14 : vector<8x8xi32>
    %c0_6 = arith.constant 0 : index
    %c0_7 = arith.constant 0 : index
    %17 = vector.load %arg5[%c0_6, %c0_7] : memref<32x32xbf16, #tpu.memory_space<vmem>>, vector<32x32xbf16>
    %c0_8 = arith.constant 0 : index
    %c0_9 = arith.constant 0 : index
    %18 = vector.load %arg6[%c0_8, %c0_9] : memref<1x32xf32, #tpu.memory_space<vmem>>, vector<1x32xf32>
    %19 = vector.extract_strided_slice %9 {offsets = [0, 0], sizes = [8, 8], strides = [1, 1]} : vector<8x32xf32> to vector<8x8xf32>
    %20 = vector.extract_strided_slice %10 {offsets = [0, 0], sizes = [8, 8], strides = [1, 1]} : vector<8x32xf32> to vector<8x8xf32>
    %21 = arith.truncf %19 : vector<8x8xf32> to vector<8x8xbf16>
    %22 = arith.truncf %20 : vector<8x8xf32> to vector<8x8xbf16>
    %cst_10 = arith.constant dense<0.000000e+00> : vector<8x8xf32>
    %23 = tpu.matmul %21, %22, %cst_10 {dimension_numbers = #tpu.dot_dimension_numbers<[1], [1], [0], [0], [0, 0, 1, 0], [], []>} : vector<8x8xbf16>, vector<8x8xbf16>, vector<8x8xf32> -> vector<8x8xf32>
    %cst_11 = arith.constant -1.000000e+30 : f32
    %24 = vector.broadcast %cst_11 : f32 to vector<8x8xf32>
    %25 = arith.select %16, %23, %24 : vector<8x8xi1>, vector<8x8xf32>
    %cst_12 = arith.constant dense<0xFF800000> : vector<8xf32>
    %26 = vector.multi_reduction <maximumf>, %25, %cst_12 [1] : vector<8x8xf32> to vector<8xf32>
    %27 = vector.shape_cast %26 : vector<8xf32> to vector<8x1xf32>
    %28 = vector.broadcast %27 : vector<8x1xf32> to vector<8x8xf32>
    %29 = arith.subf %25, %28 : vector<8x8xf32>
    %30 = math.exp %29 : vector<8x8xf32>
    %cst_13 = arith.constant dense<0.000000e+00> : vector<8xf32>
    %31 = vector.multi_reduction <add>, %30, %cst_13 [1] : vector<8x8xf32> to vector<8xf32>
    %32 = vector.shape_cast %31 : vector<8xf32> to vector<8x1xf32>
    %33 = tpu.reciprocal %32 {approx = true} : vector<8x1xf32> -> vector<8x1xf32>
    %34 = vector.broadcast %33 : vector<8x1xf32> to vector<8x8xf32>
    %35 = arith.mulf %30, %34 : vector<8x8xf32>
    %36 = vector.extract_strided_slice %11 {offsets = [0, 0], sizes = [8, 8], strides = [1, 1]} : vector<8x32xf32> to vector<8x8xf32>
    %37 = arith.truncf %35 : vector<8x8xf32> to vector<8x8xbf16>
    %38 = arith.truncf %36 : vector<8x8xf32> to vector<8x8xbf16>
    %cst_14 = arith.constant dense<0.000000e+00> : vector<8x8xf32>
    %39 = tpu.matmul %37, %38, %cst_14 {dimension_numbers = #tpu.dot_dimension_numbers<[1], [0], [0], [1], [0, 0, 1, 1], [], []>} : vector<8x8xbf16>, vector<8x8xbf16>, vector<8x8xf32> -> vector<8x8xf32>
    %40 = vector.extract_strided_slice %9 {offsets = [0, 8], sizes = [8, 8], strides = [1, 1]} : vector<8x32xf32> to vector<8x8xf32>
    %41 = vector.extract_strided_slice %10 {offsets = [0, 8], sizes = [8, 8], strides = [1, 1]} : vector<8x32xf32> to vector<8x8xf32>
    %42 = arith.truncf %40 : vector<8x8xf32> to vector<8x8xbf16>
    %43 = arith.truncf %41 : vector<8x8xf32> to vector<8x8xbf16>
    %cst_15 = arith.constant dense<0.000000e+00> : vector<8x8xf32>
    %44 = tpu.matmul %42, %43, %cst_15 {dimension_numbers = #tpu.dot_dimension_numbers<[1], [1], [0], [0], [0, 0, 1, 0], [], []>} : vector<8x8xbf16>, vector<8x8xbf16>, vector<8x8xf32> -> vector<8x8xf32>
    %cst_16 = arith.constant -1.000000e+30 : f32
    %45 = vector.broadcast %cst_16 : f32 to vector<8x8xf32>
    %46 = arith.select %16, %44, %45 : vector<8x8xi1>, vector<8x8xf32>
    %cst_17 = arith.constant dense<0xFF800000> : vector<8xf32>
    %47 = vector.multi_reduction <maximumf>, %46, %cst_17 [1] : vector<8x8xf32> to vector<8xf32>
    %48 = vector.shape_cast %47 : vector<8xf32> to vector<8x1xf32>
    %49 = vector.broadcast %48 : vector<8x1xf32> to vector<8x8xf32>
    %50 = arith.subf %46, %49 : vector<8x8xf32>
    %51 = math.exp %50 : vector<8x8xf32>
    %cst_18 = arith.constant dense<0.000000e+00> : vector<8xf32>
    %52 = vector.multi_reduction <add>, %51, %cst_18 [1] : vector<8x8xf32> to vector<8xf32>
    %53 = vector.shape_cast %52 : vector<8xf32> to vector<8x1xf32>
    %54 = tpu.reciprocal %53 {approx = true} : vector<8x1xf32> -> vector<8x1xf32>
    %55 = vector.broadcast %54 : vector<8x1xf32> to vector<8x8xf32>
    %56 = arith.mulf %51, %55 : vector<8x8xf32>
    %57 = vector.extract_strided_slice %11 {offsets = [0, 8], sizes = [8, 8], strides = [1, 1]} : vector<8x32xf32> to vector<8x8xf32>
    %58 = arith.truncf %56 : vector<8x8xf32> to vector<8x8xbf16>
    %59 = arith.truncf %57 : vector<8x8xf32> to vector<8x8xbf16>
    %cst_19 = arith.constant dense<0.000000e+00> : vector<8x8xf32>
    %60 = tpu.matmul %58, %59, %cst_19 {dimension_numbers = #tpu.dot_dimension_numbers<[1], [0], [0], [1], [0, 0, 1, 1], [], []>} : vector<8x8xbf16>, vector<8x8xbf16>, vector<8x8xf32> -> vector<8x8xf32>
    %61 = vector.extract_strided_slice %9 {offsets = [0, 16], sizes = [8, 8], strides = [1, 1]} : vector<8x32xf32> to vector<8x8xf32>
    %62 = vector.extract_strided_slice %10 {offsets = [0, 16], sizes = [8, 8], strides = [1, 1]} : vector<8x32xf32> to vector<8x8xf32>
    %63 = arith.truncf %61 : vector<8x8xf32> to vector<8x8xbf16>
    %64 = arith.truncf %62 : vector<8x8xf32> to vector<8x8xbf16>
    %cst_20 = arith.constant dense<0.000000e+00> : vector<8x8xf32>
    %65 = tpu.matmul %63, %64, %cst_20 {dimension_numbers = #tpu.dot_dimension_numbers<[1], [1], [0], [0], [0, 0, 1, 0], [], []>} : vector<8x8xbf16>, vector<8x8xbf16>, vector<8x8xf32> -> vector<8x8xf32>
    %cst_21 = arith.constant -1.000000e+30 : f32
    %66 = vector.broadcast %cst_21 : f32 to vector<8x8xf32>
    %67 = arith.select %16, %65, %66 : vector<8x8xi1>, vector<8x8xf32>
    %cst_22 = arith.constant dense<0xFF800000> : vector<8xf32>
    %68 = vector.multi_reduction <maximumf>, %67, %cst_22 [1] : vector<8x8xf32> to vector<8xf32>
    %69 = vector.shape_cast %68 : vector<8xf32> to vector<8x1xf32>
    %70 = vector.broadcast %69 : vector<8x1xf32> to vector<8x8xf32>
    %71 = arith.subf %67, %70 : vector<8x8xf32>
    %72 = math.exp %71 : vector<8x8xf32>
    %cst_23 = arith.constant dense<0.000000e+00> : vector<8xf32>
    %73 = vector.multi_reduction <add>, %72, %cst_23 [1] : vector<8x8xf32> to vector<8xf32>
    %74 = vector.shape_cast %73 : vector<8xf32> to vector<8x1xf32>
    %75 = tpu.reciprocal %74 {approx = true} : vector<8x1xf32> -> vector<8x1xf32>
    %76 = vector.broadcast %75 : vector<8x1xf32> to vector<8x8xf32>
    %77 = arith.mulf %72, %76 : vector<8x8xf32>
    %78 = vector.extract_strided_slice %11 {offsets = [0, 16], sizes = [8, 8], strides = [1, 1]} : vector<8x32xf32> to vector<8x8xf32>
    %79 = arith.truncf %77 : vector<8x8xf32> to vector<8x8xbf16>
    %80 = arith.truncf %78 : vector<8x8xf32> to vector<8x8xbf16>
    %cst_24 = arith.constant dense<0.000000e+00> : vector<8x8xf32>
    %81 = tpu.matmul %79, %80, %cst_24 {dimension_numbers = #tpu.dot_dimension_numbers<[1], [0], [0], [1], [0, 0, 1, 1], [], []>} : vector<8x8xbf16>, vector<8x8xbf16>, vector<8x8xf32> -> vector<8x8xf32>
    %82 = vector.extract_strided_slice %9 {offsets = [0, 24], sizes = [8, 8], strides = [1, 1]} : vector<8x32xf32> to vector<8x8xf32>
    %83 = vector.extract_strided_slice %10 {offsets = [0, 24], sizes = [8, 8], strides = [1, 1]} : vector<8x32xf32> to vector<8x8xf32>
    %84 = arith.truncf %82 : vector<8x8xf32> to vector<8x8xbf16>
    %85 = arith.truncf %83 : vector<8x8xf32> to vector<8x8xbf16>
    %cst_25 = arith.constant dense<0.000000e+00> : vector<8x8xf32>
    %86 = tpu.matmul %84, %85, %cst_25 {dimension_numbers = #tpu.dot_dimension_numbers<[1], [1], [0], [0], [0, 0, 1, 0], [], []>} : vector<8x8xbf16>, vector<8x8xbf16>, vector<8x8xf32> -> vector<8x8xf32>
    %cst_26 = arith.constant -1.000000e+30 : f32
    %87 = vector.broadcast %cst_26 : f32 to vector<8x8xf32>
    %88 = arith.select %16, %86, %87 : vector<8x8xi1>, vector<8x8xf32>
    %cst_27 = arith.constant dense<0xFF800000> : vector<8xf32>
    %89 = vector.multi_reduction <maximumf>, %88, %cst_27 [1] : vector<8x8xf32> to vector<8xf32>
    %90 = vector.shape_cast %89 : vector<8xf32> to vector<8x1xf32>
    %91 = vector.broadcast %90 : vector<8x1xf32> to vector<8x8xf32>
    %92 = arith.subf %88, %91 : vector<8x8xf32>
    %93 = math.exp %92 : vector<8x8xf32>
    %cst_28 = arith.constant dense<0.000000e+00> : vector<8xf32>
    %94 = vector.multi_reduction <add>, %93, %cst_28 [1] : vector<8x8xf32> to vector<8xf32>
    %95 = vector.shape_cast %94 : vector<8xf32> to vector<8x1xf32>
    %96 = tpu.reciprocal %95 {approx = true} : vector<8x1xf32> -> vector<8x1xf32>
    %97 = vector.broadcast %96 : vector<8x1xf32> to vector<8x8xf32>
    %98 = arith.mulf %93, %97 : vector<8x8xf32>
    %99 = vector.extract_strided_slice %11 {offsets = [0, 24], sizes = [8, 8], strides = [1, 1]} : vector<8x32xf32> to vector<8x8xf32>
    %100 = arith.truncf %98 : vector<8x8xf32> to vector<8x8xbf16>
    %101 = arith.truncf %99 : vector<8x8xf32> to vector<8x8xbf16>
    %cst_29 = arith.constant dense<0.000000e+00> : vector<8x8xf32>
    %102 = tpu.matmul %100, %101, %cst_29 {dimension_numbers = #tpu.dot_dimension_numbers<[1], [0], [0], [1], [0, 0, 1, 1], [], []>} : vector<8x8xbf16>, vector<8x8xbf16>, vector<8x8xf32> -> vector<8x8xf32>
    %103 = tpu.concatenate %39, %60, %81, %102 in 1 : vector<8x8xf32>, vector<8x8xf32>, vector<8x8xf32>, vector<8x8xf32> -> vector<8x32xf32>
    %104 = arith.truncf %103 : vector<8x32xf32> to vector<8x32xbf16>
    %cst_30 = arith.constant dense<0.000000e+00> : vector<8x32xf32>
    %105 = tpu.matmul %104, %17, %cst_30 {dimension_numbers = #tpu.dot_dimension_numbers<[1], [0], [0], [1], [0, 0, 1, 1], [], []>} : vector<8x32xbf16>, vector<32x32xbf16>, vector<8x32xf32> -> vector<8x32xf32>
    %106 = vector.broadcast %18 : vector<1x32xf32> to vector<8x32xf32>
    %107 = arith.addf %105, %106 : vector<8x32xf32>
    %108 = arith.extf %3 : vector<8x32xbf16> to vector<8x32xf32>
    %109 = arith.addf %108, %107 : vector<8x32xf32>
    %c0_31 = arith.constant 0 : index
    %c0_32 = arith.constant 0 : index
    %110 = vector.load %arg7[%c0_31, %c0_32] : memref<1x32xf32, #tpu.memory_space<vmem>>, vector<1x32xf32>
    %c0_33 = arith.constant 0 : index
    %c0_34 = arith.constant 0 : index
    %111 = vector.load %arg8[%c0_33, %c0_34] : memref<1x32xf32, #tpu.memory_space<vmem>>, vector<1x32xf32>
    %cst_35 = arith.constant dense<0.000000e+00> : vector<8xf32>
    %112 = vector.multi_reduction <add>, %109, %cst_35 [1] : vector<8x32xf32> to vector<8xf32>
    %113 = vector.shape_cast %112 : vector<8xf32> to vector<8x1xf32>
    %cst_36 = arith.constant 3.200000e+01 : f32
    %114 = vector.broadcast %cst_36 : f32 to vector<8x1xf32>
    %115 = arith.divf %113, %114 : vector<8x1xf32>
    %116 = vector.broadcast %115 : vector<8x1xf32> to vector<8x32xf32>
    %117 = arith.subf %109, %116 : vector<8x32xf32>
    %118 = vector.broadcast %115 : vector<8x1xf32> to vector<8x32xf32>
    %119 = arith.subf %109, %118 : vector<8x32xf32>
    %120 = arith.mulf %117, %119 : vector<8x32xf32>
    %cst_37 = arith.constant dense<0.000000e+00> : vector<8xf32>
    %121 = vector.multi_reduction <add>, %120, %cst_37 [1] : vector<8x32xf32> to vector<8xf32>
    %122 = vector.shape_cast %121 : vector<8xf32> to vector<8x1xf32>
    %cst_38 = arith.constant 3.200000e+01 : f32
    %123 = vector.broadcast %cst_38 : f32 to vector<8x1xf32>
    %124 = arith.divf %122, %123 : vector<8x1xf32>
    %125 = vector.broadcast %115 : vector<8x1xf32> to vector<8x32xf32>
    %126 = arith.subf %109, %125 : vector<8x32xf32>
    %cst_39 = arith.constant 9.99999974E-6 : f32
    %127 = vector.broadcast %cst_39 : f32 to vector<8x1xf32>
    %128 = arith.addf %124, %127 : vector<8x1xf32>
    %129 = math.rsqrt %128 : vector<8x1xf32>
    %130 = vector.broadcast %129 : vector<8x1xf32> to vector<8x32xf32>
    %131 = arith.mulf %126, %130 : vector<8x32xf32>
    %132 = vector.broadcast %110 : vector<1x32xf32> to vector<8x32xf32>
    %133 = arith.mulf %131, %132 : vector<8x32xf32>
    %134 = vector.broadcast %111 : vector<1x32xf32> to vector<8x32xf32>
    %135 = arith.addf %133, %134 : vector<8x32xf32>
    %136 = arith.truncf %135 : vector<8x32xf32> to vector<8x32xbf16>
    %c0_40 = arith.constant 0 : index
    %c0_41 = arith.constant 0 : index
    %c0_42 = arith.constant 0 : index
    %137 = vector.load %arg9[%c0_40, %c0_41, %c0_42] : memref<1x8x32xbf16, #tpu.memory_space<vmem>>, vector<1x8x32xbf16>
    %138 = vector.shape_cast %137 : vector<1x8x32xbf16> to vector<8x32xbf16>
    %139 = vector.shape_cast %136 : vector<8x32xbf16> to vector<1x8x32xbf16>
    tpu.vector_store %arg9[%c0_40, %c0_41, %c0_42], %139 {strides = array<i32>} : memref<1x8x32xbf16, #tpu.memory_space<vmem>>, vector<1x8x32xbf16>,
    return
  }
  func.func @transform_0(%arg0: i32, %arg1: i32) -> (i32, i32, i32) {
    %c0_i32 = arith.constant 0 : i32
    %c0_i32_0 = arith.constant 0 : i32
    %c0_i32_1 = arith.constant 0 : i32
    return %arg0, %c0_i32, %c0_i32_0 : i32, i32, i32
  }
  func.func @transform_1(%arg0: i32, %arg1: i32) -> (i32, i32) {
    %c0_i32 = arith.constant 0 : i32
    %c0_i32_0 = arith.constant 0 : i32
    %c0_i32_1 = arith.constant 0 : i32
    return %c0_i32, %c0_i32_0 : i32, i32
  }
  func.func @transform_2(%arg0: i32, %arg1: i32) -> (i32, i32) {
    %c0_i32 = arith.constant 0 : i32
    %c0_i32_0 = arith.constant 0 : i32
    %c0_i32_1 = arith.constant 0 : i32
    return %c0_i32, %c0_i32_0 : i32, i32
  }
  func.func @transform_3(%arg0: i32, %arg1: i32) -> (i32, i32) {
    %c0_i32 = arith.constant 0 : i32
    %c0_i32_0 = arith.constant 0 : i32
    %c0_i32_1 = arith.constant 0 : i32
    return %c0_i32, %c0_i32_0 : i32, i32
  }
  func.func @transform_4(%arg0: i32, %arg1: i32) -> (i32, i32) {
    %c0_i32 = arith.constant 0 : i32
    %c0_i32_0 = arith.constant 0 : i32
    %c0_i32_1 = arith.constant 0 : i32
    return %c0_i32, %c0_i32_0 : i32, i32
  }
  func.func @transform_5(%arg0: i32, %arg1: i32) -> (i32, i32) {
    %c0_i32 = arith.constant 0 : i32
    %c0_i32_0 = arith.constant 0 : i32
    %c0_i32_1 = arith.constant 0 : i32
    return %c0_i32, %c0_i32_0 : i32, i32
  }
  func.func @transform_6(%arg0: i32, %arg1: i32) -> (i32, i32) {
    %c0_i32 = arith.constant 0 : i32
    %c0_i32_0 = arith.constant 0 : i32
    %c0_i32_1 = arith.constant 0 : i32
    return %c0_i32, %c0_i32_0 : i32, i32
  }
  func.func @transform_7(%arg0: i32, %arg1: i32) -> (i32, i32, i32) {
    %c0_i32 = arith.constant 0 : i32
    %c0_i32_0 = arith.constant 0 : i32
    return %arg0, %arg1, %c0_i32 : i32, i32, i32
  }
}

module attributes {stable_mosaic.version = 11 : i64} {
  func.func @_ffn_block_kernel(%arg0: i32, %arg1: i32, %arg2: memref<8x32xbf16, #tpu.memory_space<vmem>>, %arg3: memref<32x64xbf16, #tpu.memory_space<vmem>>, %arg4: memref<1x64xf32, #tpu.memory_space<vmem>>, %arg5: memref<64x32xbf16, #tpu.memory_space<vmem>>, %arg6: memref<1x32xf32, #tpu.memory_space<vmem>>, %arg7: memref<1x32xf32, #tpu.memory_space<vmem>>, %arg8: memref<1x32xf32, #tpu.memory_space<vmem>>, %arg9: memref<8x32xbf16, #tpu.memory_space<vmem>>, %arg10: memref<8x32xf32, #tpu.memory_space<vmem>>) attributes {dimension_semantics = [#tpu.dimension_semantics<parallel>, #tpu.dimension_semantics<arbitrary>], iteration_bounds = array<i64: 2, 1>, scalar_prefetch = 0 : i64, scratch_operands = 1 : i64, tpu.core_type = #tpu.core_type<tc>, window_params = [{transform_indices = @transform_0, window_bounds = array<i64: 8, 32>}, {pipeline_mode = #tpu.pipeline_mode<synchronous>, transform_indices = @transform_1, window_bounds = array<i64: 32, 64>}, {pipeline_mode = #tpu.pipeline_mode<synchronous>, transform_indices = @transform_2, window_bounds = array<i64: 1, 64>}, {pipeline_mode = #tpu.pipeline_mode<synchronous>, transform_indices = @transform_3, window_bounds = array<i64: 64, 32>}, {pipeline_mode = #tpu.pipeline_mode<synchronous>, transform_indices = @transform_4, window_bounds = array<i64: 1, 32>}, {pipeline_mode = #tpu.pipeline_mode<synchronous>, transform_indices = @transform_5, window_bounds = array<i64: 1, 32>}, {pipeline_mode = #tpu.pipeline_mode<synchronous>, transform_indices = @transform_6, window_bounds = array<i64: 1, 32>}, {transform_indices = @transform_7, window_bounds = array<i64: 8, 32>}]} {
    %c0_i32 = arith.constant 0 : i32
    %0 = arith.cmpi eq, %arg1, %c0_i32 : i32
    %1 = arith.extui %0 : i1 to i32
    %c0_i32_0 = arith.constant 0 : i32
    %2 = arith.cmpi ne, %1, %c0_i32_0 : i32
    scf.if %2 {
      %cst_16 = arith.constant 0.000000e+00 : f32
      %20 = vector.broadcast %cst_16 : f32 to vector<8x32xf32>
      %c0_17 = arith.constant 0 : index
      %c0_18 = arith.constant 0 : index
      %21 = vector.load %arg10[%c0_17, %c0_18] : memref<8x32xf32, #tpu.memory_space<vmem>>, vector<8x32xf32>
      tpu.vector_store %arg10[%c0_17, %c0_18], %20 {strides = array<i32>} : memref<8x32xf32, #tpu.memory_space<vmem>>, vector<8x32xf32>,
    } else {
    }
    %c0 = arith.constant 0 : index
    %c0_1 = arith.constant 0 : index
    %3 = vector.load %arg2[%c0, %c0_1] : memref<8x32xbf16, #tpu.memory_space<vmem>>, vector<8x32xbf16>
    %c0_2 = arith.constant 0 : index
    %c0_3 = arith.constant 0 : index
    %4 = vector.load %arg3[%c0_2, %c0_3] : memref<32x64xbf16, #tpu.memory_space<vmem>>, vector<32x64xbf16>
    %cst = arith.constant dense<0.000000e+00> : vector<8x64xf32>
    %5 = tpu.matmul %3, %4, %cst {dimension_numbers = #tpu.dot_dimension_numbers<[1], [0], [0], [1], [0, 0, 1, 1], [], []>} : vector<8x32xbf16>, vector<32x64xbf16>, vector<8x64xf32> -> vector<8x64xf32>
    %c0_4 = arith.constant 0 : index
    %c0_5 = arith.constant 0 : index
    %6 = vector.load %arg4[%c0_4, %c0_5] : memref<1x64xf32, #tpu.memory_space<vmem>>, vector<1x64xf32>
    %7 = vector.broadcast %6 : vector<1x64xf32> to vector<8x64xf32>
    %8 = arith.addf %5, %7 : vector<8x64xf32>
    %cst_6 = arith.constant 0.000000e+00 : f32
    %9 = vector.broadcast %cst_6 : f32 to vector<8x64xf32>
    %10 = arith.maximumf %8, %9 : vector<8x64xf32>
    %c0_7 = arith.constant 0 : index
    %c0_8 = arith.constant 0 : index
    %11 = vector.load %arg10[%c0_7, %c0_8] : memref<8x32xf32, #tpu.memory_space<vmem>>, vector<8x32xf32>
    %c0_9 = arith.constant 0 : index
    %c0_10 = arith.constant 0 : index
    %12 = vector.load %arg5[%c0_9, %c0_10] : memref<64x32xbf16, #tpu.memory_space<vmem>>, vector<64x32xbf16>
    %13 = arith.truncf %10 : vector<8x64xf32> to vector<8x64xbf16>
    %cst_11 = arith.constant dense<0.000000e+00> : vector<8x32xf32>
    %14 = tpu.matmul %13, %12, %cst_11 {dimension_numbers = #tpu.dot_dimension_numbers<[1], [0], [0], [1], [0, 0, 1, 1], [], []>} : vector<8x64xbf16>, vector<64x32xbf16>, vector<8x32xf32> -> vector<8x32xf32>
    %15 = arith.addf %11, %14 : vector<8x32xf32>
    %c0_12 = arith.constant 0 : index
    %c0_13 = arith.constant 0 : index
    %16 = vector.load %arg10[%c0_12, %c0_13] : memref<8x32xf32, #tpu.memory_space<vmem>>, vector<8x32xf32>
    tpu.vector_store %arg10[%c0_12, %c0_13], %15 {strides = array<i32>} : memref<8x32xf32, #tpu.memory_space<vmem>>, vector<8x32xf32>,
    %c0_i32_14 = arith.constant 0 : i32
    %17 = arith.cmpi eq, %arg1, %c0_i32_14 : i32
    %18 = arith.extui %17 : i1 to i32
    %c0_i32_15 = arith.constant 0 : i32
    %19 = arith.cmpi ne, %18, %c0_i32_15 : i32
    scf.if %19 {
      %20 = arith.extf %3 : vector<8x32xbf16> to vector<8x32xf32>
      %c0_16 = arith.constant 0 : index
      %c0_17 = arith.constant 0 : index
      %21 = vector.load %arg10[%c0_16, %c0_17] : memref<8x32xf32, #tpu.memory_space<vmem>>, vector<8x32xf32>
      %22 = arith.addf %20, %21 : vector<8x32xf32>
      %c0_18 = arith.constant 0 : index
      %c0_19 = arith.constant 0 : index
      %23 = vector.load %arg6[%c0_18, %c0_19] : memref<1x32xf32, #tpu.memory_space<vmem>>, vector<1x32xf32>
      %24 = vector.broadcast %23 : vector<1x32xf32> to vector<8x32xf32>
      %25 = arith.addf %22, %24 : vector<8x32xf32>
      %c0_20 = arith.constant 0 : index
      %c0_21 = arith.constant 0 : index
      %26 = vector.load %arg7[%c0_20, %c0_21] : memref<1x32xf32, #tpu.memory_space<vmem>>, vector<1x32xf32>
      %c0_22 = arith.constant 0 : index
      %c0_23 = arith.constant 0 : index
      %27 = vector.load %arg8[%c0_22, %c0_23] : memref<1x32xf32, #tpu.memory_space<vmem>>, vector<1x32xf32>
      %cst_24 = arith.constant dense<0.000000e+00> : vector<8xf32>
      %28 = vector.multi_reduction <add>, %25, %cst_24 [1] : vector<8x32xf32> to vector<8xf32>
      %29 = vector.shape_cast %28 : vector<8xf32> to vector<8x1xf32>
      %cst_25 = arith.constant 3.200000e+01 : f32
      %30 = vector.broadcast %cst_25 : f32 to vector<8x1xf32>
      %31 = arith.divf %29, %30 : vector<8x1xf32>
      %32 = vector.broadcast %31 : vector<8x1xf32> to vector<8x32xf32>
      %33 = arith.subf %25, %32 : vector<8x32xf32>
      %34 = vector.broadcast %31 : vector<8x1xf32> to vector<8x32xf32>
      %35 = arith.subf %25, %34 : vector<8x32xf32>
      %36 = arith.mulf %33, %35 : vector<8x32xf32>
      %cst_26 = arith.constant dense<0.000000e+00> : vector<8xf32>
      %37 = vector.multi_reduction <add>, %36, %cst_26 [1] : vector<8x32xf32> to vector<8xf32>
      %38 = vector.shape_cast %37 : vector<8xf32> to vector<8x1xf32>
      %cst_27 = arith.constant 3.200000e+01 : f32
      %39 = vector.broadcast %cst_27 : f32 to vector<8x1xf32>
      %40 = arith.divf %38, %39 : vector<8x1xf32>
      %41 = vector.broadcast %31 : vector<8x1xf32> to vector<8x32xf32>
      %42 = arith.subf %25, %41 : vector<8x32xf32>
      %cst_28 = arith.constant 9.99999974E-6 : f32
      %43 = vector.broadcast %cst_28 : f32 to vector<8x1xf32>
      %44 = arith.addf %40, %43 : vector<8x1xf32>
      %45 = math.rsqrt %44 : vector<8x1xf32>
      %46 = vector.broadcast %45 : vector<8x1xf32> to vector<8x32xf32>
      %47 = arith.mulf %42, %46 : vector<8x32xf32>
      %48 = vector.broadcast %26 : vector<1x32xf32> to vector<8x32xf32>
      %49 = arith.mulf %47, %48 : vector<8x32xf32>
      %50 = vector.broadcast %27 : vector<1x32xf32> to vector<8x32xf32>
      %51 = arith.addf %49, %50 : vector<8x32xf32>
      %52 = arith.truncf %51 : vector<8x32xf32> to vector<8x32xbf16>
      %c0_29 = arith.constant 0 : index
      %c0_30 = arith.constant 0 : index
      %53 = vector.load %arg9[%c0_29, %c0_30] : memref<8x32xbf16, #tpu.memory_space<vmem>>, vector<8x32xbf16>
      tpu.vector_store %arg9[%c0_29, %c0_30], %52 {strides = array<i32>} : memref<8x32xbf16, #tpu.memory_space<vmem>>, vector<8x32xbf16>,
    } else {
    }
    return
  }
  func.func @transform_0(%arg0: i32, %arg1: i32) -> (i32, i32) {
    %c0_i32 = arith.constant 0 : i32
    %c0_i32_0 = arith.constant 0 : i32
    return %arg0, %c0_i32 : i32, i32
  }
  func.func @transform_1(%arg0: i32, %arg1: i32) -> (i32, i32) {
    %c0_i32 = arith.constant 0 : i32
    %c0_i32_0 = arith.constant 0 : i32
    %c0_i32_1 = arith.constant 0 : i32
    return %c0_i32, %c0_i32_0 : i32, i32
  }
  func.func @transform_2(%arg0: i32, %arg1: i32) -> (i32, i32) {
    %c0_i32 = arith.constant 0 : i32
    %c0_i32_0 = arith.constant 0 : i32
    %c0_i32_1 = arith.constant 0 : i32
    return %c0_i32, %c0_i32_0 : i32, i32
  }
  func.func @transform_3(%arg0: i32, %arg1: i32) -> (i32, i32) {
    %c0_i32 = arith.constant 0 : i32
    %c0_i32_0 = arith.constant 0 : i32
    %c0_i32_1 = arith.constant 0 : i32
    return %c0_i32, %c0_i32_0 : i32, i32
  }
  func.func @transform_4(%arg0: i32, %arg1: i32) -> (i32, i32) {
    %c0_i32 = arith.constant 0 : i32
    %c0_i32_0 = arith.constant 0 : i32
    %c0_i32_1 = arith.constant 0 : i32
    return %c0_i32, %c0_i32_0 : i32, i32
  }
  func.func @transform_5(%arg0: i32, %arg1: i32) -> (i32, i32) {
    %c0_i32 = arith.constant 0 : i32
    %c0_i32_0 = arith.constant 0 : i32
    %c0_i32_1 = arith.constant 0 : i32
    return %c0_i32, %c0_i32_0 : i32, i32
  }
  func.func @transform_6(%arg0: i32, %arg1: i32) -> (i32, i32) {
    %c0_i32 = arith.constant 0 : i32
    %c0_i32_0 = arith.constant 0 : i32
    %c0_i32_1 = arith.constant 0 : i32
    return %c0_i32, %c0_i32_0 : i32, i32
  }
  func.func @transform_7(%arg0: i32, %arg1: i32) -> (i32, i32) {
    %c0_i32 = arith.constant 0 : i32
    %c0_i32_0 = arith.constant 0 : i32
    return %arg0, %c0_i32 : i32, i32
  }
}

module attributes {stable_mosaic.version = 11 : i64} {
  func.func @_norm_proj_kernel(%arg0: i32, %arg1: memref<8x32xbf16, #tpu.memory_space<vmem>>, %arg2: memref<1x32xf32, #tpu.memory_space<vmem>>, %arg3: memref<1x32xf32, #tpu.memory_space<vmem>>, %arg4: memref<32x128xbf16, #tpu.memory_space<vmem>>, %arg5: memref<1x128xf32, #tpu.memory_space<vmem>>, %arg6: memref<8x128xf32, #tpu.memory_space<vmem>>) attributes {dimension_semantics = [#tpu.dimension_semantics<parallel>], iteration_bounds = array<i64: 2>, scalar_prefetch = 0 : i64, scratch_operands = 0 : i64, tpu.core_type = #tpu.core_type<tc>, window_params = [{transform_indices = @transform_0, window_bounds = array<i64: 8, 32>}, {pipeline_mode = #tpu.pipeline_mode<synchronous>, transform_indices = @transform_1, window_bounds = array<i64: 1, 32>}, {pipeline_mode = #tpu.pipeline_mode<synchronous>, transform_indices = @transform_2, window_bounds = array<i64: 1, 32>}, {pipeline_mode = #tpu.pipeline_mode<synchronous>, transform_indices = @transform_3, window_bounds = array<i64: 32, 128>}, {pipeline_mode = #tpu.pipeline_mode<synchronous>, transform_indices = @transform_4, window_bounds = array<i64: 1, 128>}, {transform_indices = @transform_5, window_bounds = array<i64: 8, 128>}]} {
    %c0 = arith.constant 0 : index
    %c0_0 = arith.constant 0 : index
    %0 = vector.load %arg1[%c0, %c0_0] : memref<8x32xbf16, #tpu.memory_space<vmem>>, vector<8x32xbf16>
    %1 = arith.extf %0 : vector<8x32xbf16> to vector<8x32xf32>
    %c0_1 = arith.constant 0 : index
    %c0_2 = arith.constant 0 : index
    %2 = vector.load %arg2[%c0_1, %c0_2] : memref<1x32xf32, #tpu.memory_space<vmem>>, vector<1x32xf32>
    %c0_3 = arith.constant 0 : index
    %c0_4 = arith.constant 0 : index
    %3 = vector.load %arg3[%c0_3, %c0_4] : memref<1x32xf32, #tpu.memory_space<vmem>>, vector<1x32xf32>
    %cst = arith.constant dense<0.000000e+00> : vector<8xf32>
    %4 = vector.multi_reduction <add>, %1, %cst [1] : vector<8x32xf32> to vector<8xf32>
    %5 = vector.shape_cast %4 : vector<8xf32> to vector<8x1xf32>
    %cst_5 = arith.constant 3.200000e+01 : f32
    %6 = vector.broadcast %cst_5 : f32 to vector<8x1xf32>
    %7 = arith.divf %5, %6 : vector<8x1xf32>
    %8 = vector.broadcast %7 : vector<8x1xf32> to vector<8x32xf32>
    %9 = arith.subf %1, %8 : vector<8x32xf32>
    %10 = vector.broadcast %7 : vector<8x1xf32> to vector<8x32xf32>
    %11 = arith.subf %1, %10 : vector<8x32xf32>
    %12 = arith.mulf %9, %11 : vector<8x32xf32>
    %cst_6 = arith.constant dense<0.000000e+00> : vector<8xf32>
    %13 = vector.multi_reduction <add>, %12, %cst_6 [1] : vector<8x32xf32> to vector<8xf32>
    %14 = vector.shape_cast %13 : vector<8xf32> to vector<8x1xf32>
    %cst_7 = arith.constant 3.200000e+01 : f32
    %15 = vector.broadcast %cst_7 : f32 to vector<8x1xf32>
    %16 = arith.divf %14, %15 : vector<8x1xf32>
    %17 = vector.broadcast %7 : vector<8x1xf32> to vector<8x32xf32>
    %18 = arith.subf %1, %17 : vector<8x32xf32>
    %cst_8 = arith.constant 9.99999974E-6 : f32
    %19 = vector.broadcast %cst_8 : f32 to vector<8x1xf32>
    %20 = arith.addf %16, %19 : vector<8x1xf32>
    %21 = math.rsqrt %20 : vector<8x1xf32>
    %22 = vector.broadcast %21 : vector<8x1xf32> to vector<8x32xf32>
    %23 = arith.mulf %18, %22 : vector<8x32xf32>
    %24 = vector.broadcast %2 : vector<1x32xf32> to vector<8x32xf32>
    %25 = arith.mulf %23, %24 : vector<8x32xf32>
    %26 = vector.broadcast %3 : vector<1x32xf32> to vector<8x32xf32>
    %27 = arith.addf %25, %26 : vector<8x32xf32>
    %c0_9 = arith.constant 0 : index
    %c0_10 = arith.constant 0 : index
    %28 = vector.load %arg4[%c0_9, %c0_10] : memref<32x128xbf16, #tpu.memory_space<vmem>>, vector<32x128xbf16>
    %29 = arith.truncf %27 : vector<8x32xf32> to vector<8x32xbf16>
    %cst_11 = arith.constant dense<0.000000e+00> : vector<8x128xf32>
    %30 = tpu.matmul %29, %28, %cst_11 {dimension_numbers = #tpu.dot_dimension_numbers<[1], [0], [0], [1], [0, 0, 1, 1], [], []>} : vector<8x32xbf16>, vector<32x128xbf16>, vector<8x128xf32> -> vector<8x128xf32>
    %c0_12 = arith.constant 0 : index
    %c0_13 = arith.constant 0 : index
    %31 = vector.load %arg5[%c0_12, %c0_13] : memref<1x128xf32, #tpu.memory_space<vmem>>, vector<1x128xf32>
    %32 = vector.broadcast %31 : vector<1x128xf32> to vector<8x128xf32>
    %33 = arith.addf %30, %32 : vector<8x128xf32>
    %c0_14 = arith.constant 0 : index
    %c0_15 = arith.constant 0 : index
    %34 = vector.load %arg6[%c0_14, %c0_15] : memref<8x128xf32, #tpu.memory_space<vmem>>, vector<8x128xf32>
    tpu.vector_store %arg6[%c0_14, %c0_15], %33 {strides = array<i32>} : memref<8x128xf32, #tpu.memory_space<vmem>>, vector<8x128xf32>,
    return
  }
  func.func @transform_0(%arg0: i32) -> (i32, i32) {
    %c0_i32 = arith.constant 0 : i32
    %c0_i32_0 = arith.constant 0 : i32
    return %arg0, %c0_i32 : i32, i32
  }
  func.func @transform_1(%arg0: i32) -> (i32, i32) {
    %c0_i32 = arith.constant 0 : i32
    %c0_i32_0 = arith.constant 0 : i32
    %c0_i32_1 = arith.constant 0 : i32
    return %c0_i32, %c0_i32_0 : i32, i32
  }
  func.func @transform_2(%arg0: i32) -> (i32, i32) {
    %c0_i32 = arith.constant 0 : i32
    %c0_i32_0 = arith.constant 0 : i32
    %c0_i32_1 = arith.constant 0 : i32
    return %c0_i32, %c0_i32_0 : i32, i32
  }
  func.func @transform_3(%arg0: i32) -> (i32, i32) {
    %c0_i32 = arith.constant 0 : i32
    %c0_i32_0 = arith.constant 0 : i32
    %c0_i32_1 = arith.constant 0 : i32
    return %c0_i32, %c0_i32_0 : i32, i32
  }
  func.func @transform_4(%arg0: i32) -> (i32, i32) {
    %c0_i32 = arith.constant 0 : i32
    %c0_i32_0 = arith.constant 0 : i32
    %c0_i32_1 = arith.constant 0 : i32
    return %c0_i32, %c0_i32_0 : i32, i32
  }
  func.func @transform_5(%arg0: i32) -> (i32, i32) {
    %c0_i32 = arith.constant 0 : i32
    %c0_i32_0 = arith.constant 0 : i32
    return %arg0, %c0_i32 : i32, i32
  }
}

</mosaic_0001>

<llo_original>
// kernel: tpu_custom_call.1
$region0: #{tpu_custom_call.1}
  #allocation0 [shape = 'u32[]', space=smem, size = 0x4, offset = 0x4, fixed_abs, tag = 'smem constant byte address 0x4 - core index']
  #allocation1 [shape = 'u32[144,128]{1,0:T(1,128)}', space=vmem, size = 0x12000, scoped, tag = 'internal scratch']
  %s0 = inlined_call_operand.hbm [shape: f32[8,128], index: 0, kind: input, shape index: {}]
  %s1 = inlined_call_operand.hbm [shape: f32[16,128], index: 1, kind: input, shape index: {}]
  %s2 = inlined_call_operand.hbm [shape: f32[16,128], index: 2, kind: output, shape index: {}]
  %s3 = sld [smem:[#allocation0]]
  $region49: #{tpu_custom_call.1} parent=0
    _
  %s5 = ssub.s32 1, %s3
  %s6 = scalar_select 0, %s5, %s3
  $region1: #{tpu_custom_call.1} parent=0
    #allocation2 [shape = 'u8[4096]{0}', space=vmem, size = 0x1000, scoped, tag = 'input window, operand 0, single buffered']
    #allocation3 [shape = 's32[2]{0}', space=sflag, size = 0x8, scoped, tag = 'scoped memory for tpu_custom_call.1']
    #allocation4 [shape = 's32[2]{0}', space=sflag, size = 0x8, scoped, tag = 'scoped memory for tpu_custom_call.1']
    #allocation5 [shape = 'u8[8192]{0}', space=vmem, size = 0x2000, scoped, tag = 'input window, operand 1']
    #allocation6 [shape = 's32[2]{0}', space=sflag, size = 0x8, scoped, tag = 'scoped memory for tpu_custom_call.1']
    #allocation7 [shape = 'u8[8192]{0}', space=vmem, size = 0x2000, scoped, tag = 'output window, operand 0']
    %7 = vsyncpa [#allocation3], 0
    %8 = vsyncpa [#allocation6], 0
    %s9 = scalar_lea.sflag [#allocation6], 1
    %10 = vsyncpa %s9, 0
    %11 = vsyncpa [#allocation4], 0
    %s12 = scalar_lea.sflag [#allocation4], 1
    %13 = vsyncpa %s12, 0
    loop: start=0, step=1, limit=4
    $region2: #{tpu_custom_call.1} parent=1 // loop_pre_header
      _
    $region3: #{tpu_custom_call.1} parent=1 // loop_header
      %s15 = sphi 0, %s19
      %p16 = scmp.ge.s32.totalorder %s15, 4
      %s23 = sphi 0, %s23
      %s25 = sphi 0, %s23
      %s26 = sphi 0, %s25
      %s40 = sphi 0, %s26
      %s46 = sphi 0, %s48
      %s49 = sphi 0, %s46
      %s50 = sphi 0, %s49
      %s66 = sphi 0, %s50
      %s72 = sphi 0, %s74
      %s75 = sphi 0, %s72
      %s76 = sphi 0, %s75
      %s92 = sphi 0, %s76
    $region4: #{tpu_custom_call.1} parent=1 // loop_header_branch
      %18 = sbr.rel (%p16) target = $region8
    $region5: #{tpu_custom_call.1} parent=1 // loop_body
      %s20 = ssub.s32 %s15, 1
      %s21 = ssub.s32 %s15, 2
      %s22 = sadd.s32 %s15, 1
      %s24 = sadd.s32 %s23, 1
      %p27 = scmp.eq.s32.totalorder %s15, 1
      %p28 = scmp.ne.s32.totalorder %s23, %s25
      %p29 = scmp.eq.s32.totalorder %s15, 0
      %p30 = por %p28, %p29
      %p31 = scmp.ne.s32.totalorder %s23, %s25
      %p32 = scmp.eq.s32.totalorder %s20, 1
      %p33 = por %p31, %p32
      %p34 = scmp.ne.s32.totalorder %s25, %s26
      %p35 = scmp.eq.s32.totalorder %s20, 0
      %p36 = por %p34, %p35
      %p37 = scmp.ne.s32.totalorder %s25, %s26
      %p38 = scmp.eq.s32.totalorder %s21, 1
      %p39 = por %p37, %p38
      %p41 = scmp.ne.s32.totalorder %s26, %s40
      %p42 = scmp.eq.s32.totalorder %s21, 0
      %p43 = por %p41, %p42
      %s44 = ssub.s32 %s15, %s22
      %p45 = scmp.eq.s32.totalorder %s44, 0
      %s47 = sadd.s32 %s46, 1
      %s48 = scalar_select %p45, %s46, %s47
      %p51 = pneg %p45
      %p52 = scmp.eq.s32.totalorder %s15, 1
      %p53 = por %p51, %p52
      %p54 = scmp.ne.s32.totalorder %s46, %s49
      %p55 = scmp.eq.s32.totalorder %s15, 0
      %p56 = por %p54, %p55
      %p57 = scmp.ne.s32.totalorder %s46, %s49
      %p58 = scmp.eq.s32.totalorder %s20, 1
      %p59 = por %p57, %p58
      %p60 = scmp.ne.s32.totalorder %s49, %s50
      %p61 = scmp.eq.s32.totalorder %s20, 0
      %p62 = por %p60, %p61
      %p63 = scmp.ne.s32.totalorder %s49, %s50
      %p64 = scmp.eq.s32.totalorder %s21, 1
      %p65 = por %p63, %p64
      %p67 = scmp.ne.s32.totalorder %s50, %s66
      %p68 = scmp.eq.s32.totalorder %s21, 0
      %p69 = por %p67, %p68
      %s70 = ssub.s32 %s15, %s22
      %p71 = scmp.eq.s32.totalorder %s70, 0
      %s73 = sadd.s32 %s72, 1
      %s74 = scalar_select %p71, %s72, %s73
      %p77 = pneg %p71
      %p78 = scmp.eq.s32.totalorder %s15, 1
      %p79 = por %p77, %p78
      %p80 = scmp.ne.s32.totalorder %s72, %s75
      %p81 = scmp.eq.s32.totalorder %s15, 0
      %p82 = por %p80, %p81
      %p83 = scmp.ne.s32.totalorder %s72, %s75
      %p84 = scmp.eq.s32.totalorder %s20, 1
      %p85 = por %p83, %p84
      %p86 = scmp.ne.s32.totalorder %s75, %s76
      %p87 = scmp.eq.s32.totalorder %s20, 0
      %p88 = por %p86, %p87
      %p89 = scmp.ne.s32.totalorder %s75, %s76
      %p90 = scmp.eq.s32.totalorder %s21, 1
      %p91 = por %p89, %p90
      %p93 = scmp.ne.s32.totalorder %s76, %s92
      %p94 = scmp.eq.s32.totalorder %s21, 0
      %p95 = por %p93, %p94
      %p96 = scmp.le.s32.totalorder 1, %s15
      %p97 = scmp.lt.s32.totalorder %s15, 3
      %p98 = pnand %p96, %p97
      %p99 = pneg %p98
      // Predicated region
      $region9: #{tpu_custom_call.1} parent=5 // pred_check
        _
      $region10: #{tpu_custom_call.1} parent=5 // pred_check_branch
        %101 = sbr.rel (%p98) target = $region12
      $region11: #{tpu_custom_call.1} parent=5 // pred_region
        %s102 = ssub.s32 %s15, 1
        // Predicated region
        $region13: #{tpu_custom_call.1} parent=11 // pred_check
          %p103 = pneg %p36
        $region14: #{tpu_custom_call.1} parent=11 // pred_check_branch
          %105 = sbr.rel (%p103) target = $region16
        $region15: #{tpu_custom_call.1} parent=11 // pred_region
          %s107 = ssub.s32 128, 128
          %108 = vsyncadd [#allocation3], %s107
          %s110 = sshll.u32 [#allocation2], 4
          %s111 = int_to_ptr.vmem [resolvable:$true] %s110
          %113 = dma.hbm_to_vmem [thread:$0]  %s0, 128, %s111, [#allocation3]
        $region16: #{tpu_custom_call.1} parent=11 // pred_fallthru
          _
      $region12: #{tpu_custom_call.1} parent=5 // pred_fallthru
        _
      %p114 = scmp.lt.s32.totalorder %s15, 2
      // Predicated region
      $region17: #{tpu_custom_call.1} parent=5 // pred_check
        %p115 = pneg %p114
      $region18: #{tpu_custom_call.1} parent=5 // pred_check_branch
        %117 = sbr.rel (%p115) target = $region20
      $region19: #{tpu_custom_call.1} parent=5 // pred_region
        // Predicated region
        $region21: #{tpu_custom_call.1} parent=19 // pred_check
          %p118 = pneg %p56
        $region22: #{tpu_custom_call.1} parent=19 // pred_check_branch
          %120 = sbr.rel (%p118) target = $region24
        $region23: #{tpu_custom_call.1} parent=19 // pred_region
          %s121 = sand.u32 %s46, 1
          %s122 = scalar_lea.sflag [#allocation6], %s121
          %s123 = sand.u32 %s46, 1
          %s124 = smul.addr %s123, 8
          %s125 = scalar_lea.vmem [#allocation5], %s124
          %s127 = ssub.s32 128, 128
          %128 = vsyncadd %s122, %s127
          %s129 = smul.addr %s15, 128
          %s130 = scalar_lea.hbm %s1, %s129
          %s132 = sshll.u32 %s125, 4
          %s133 = int_to_ptr.vmem [resolvable:$true] %s132
          %135 = dma.hbm_to_vmem [thread:$0]  %s130, 128, %s133, %s122
        $region24: #{tpu_custom_call.1} parent=19 // pred_fallthru
          _
      $region20: #{tpu_custom_call.1} parent=5 // pred_fallthru
        _
      %p136 = scmp.le.s32.totalorder 1, %s15
      %p137 = scmp.lt.s32.totalorder %s15, 3
      %p138 = pnand %p136, %p137
      %p139 = pneg %p138
      // Predicated region
      $region25: #{tpu_custom_call.1} parent=5 // pred_check
        _
      $region26: #{tpu_custom_call.1} parent=5 // pred_check_branch
        %141 = sbr.rel (%p138) target = $region28
      $region27: #{tpu_custom_call.1} parent=5 // pred_region
        %s142 = ssub.s32 %s15, 1
        // Predicated region
        $region29: #{tpu_custom_call.1} parent=27 // pred_check
          %p143 = pneg %p36
        $region30: #{tpu_custom_call.1} parent=27 // pred_check_branch
          %145 = sbr.rel (%p143) target = $region32
        $region31: #{tpu_custom_call.1} parent=27 // pred_region
          %146 = dma.done [#allocation3], 128
        $region32: #{tpu_custom_call.1} parent=27 // pred_fallthru
          _
        %s147 = sand.u32 %s49, 1
        %s148 = scalar_lea.sflag [#allocation6], %s147
        %s149 = sand.u32 %s49, 1
        %s150 = smul.addr %s149, 8
        %s151 = scalar_lea.vmem [#allocation5], %s150
        // Predicated region
        $region33: #{tpu_custom_call.1} parent=27 // pred_check
          %p152 = pneg %p62
        $region34: #{tpu_custom_call.1} parent=27 // pred_check_branch
          %154 = sbr.rel (%p152) target = $region36
        $region35: #{tpu_custom_call.1} parent=27 // pred_region
          %155 = dma.done %s148, 128
        $region36: #{tpu_custom_call.1} parent=27 // pred_fallthru
          _
        %p156 = pneg %p36
        %p157 = pneg %p33
        %s158 = sand.u32 %s49, 1
        %s159 = scalar_lea.sflag [#allocation6], %s158
        %s160 = sand.u32 %s49, 1
        %s161 = smul.addr %s160, 8
        %s162 = scalar_lea.vmem [#allocation5], %s161
        %p163 = pneg %p62
        %p164 = pneg %p59
        %p165 = pneg %p88
        %p166 = pneg %p85
        %s167 = sand.u32 %s75, 1
        %s168 = scalar_lea.sflag [#allocation4], %s167
        %s169 = sand.u32 %s75, 1
        %s170 = smul.addr %s169, 8
        %s171 = scalar_lea.vmem [#allocation7], %s170
        %v172 = vld [vmem:[%s151] sm:$0xff]
        %v173 = vld [vmem:[#allocation2] sm:$0xff]
        %v174 = vadd.f32 %v172, %v173
        %175 = vst [vmem:[%s171] sm:$0xff] %v174
        %s176 = sand.u32 %s75, 1
        %s177 = scalar_lea.sflag [#allocation4], %s176
        %s178 = sand.u32 %s75, 1
        %s179 = smul.addr %s178, 8
        %s180 = scalar_lea.vmem [#allocation7], %s179
        // Predicated region
        $region37: #{tpu_custom_call.1} parent=27 // pred_check
          %p181 = pneg %p85
        $region38: #{tpu_custom_call.1} parent=27 // pred_check_branch
          %183 = sbr.rel (%p181) target = $region40
        $region39: #{tpu_custom_call.1} parent=27 // pred_region
          %s185 = ssub.s32 128, 128
          %186 = vsyncadd %s177, %s185
          %s187 = smul.addr %s20, 128
          %s188 = scalar_lea.hbm %s2, %s187
          %s190 = sshll.u32 %s180, 4
          %s191 = int_to_ptr.vmem [resolvable:$true] %s190
          %193 = dma.vmem_to_hbm [thread:$0]  %s191, 128, %s188, %s177
        $region40: #{tpu_custom_call.1} parent=27 // pred_fallthru
          _
      $region28: #{tpu_custom_call.1} parent=5 // pred_fallthru
        _
      %p194 = scmp.le.s32.totalorder 2, %s15
      // Predicated region
      $region41: #{tpu_custom_call.1} parent=5 // pred_check
        %p195 = pneg %p194
      $region42: #{tpu_custom_call.1} parent=5 // pred_check_branch
        %197 = sbr.rel (%p195) target = $region44
      $region43: #{tpu_custom_call.1} parent=5 // pred_region
        %s198 = ssub.s32 %s15, 2
        // Predicated region
        $region45: #{tpu_custom_call.1} parent=43 // pred_check
          %p199 = pneg %p91
        $region46: #{tpu_custom_call.1} parent=43 // pred_check_branch
          %201 = sbr.rel (%p199) target = $region48
        $region47: #{tpu_custom_call.1} parent=43 // pred_region
          %s202 = sand.u32 %s76, 1
          %s203 = scalar_lea.sflag [#allocation4], %s202
          %s204 = sand.u32 %s76, 1
          %s205 = smul.addr %s204, 8
          %s206 = scalar_lea.vmem [#allocation7], %s205
          %207 = dma.done %s203, 128
        $region48: #{tpu_custom_call.1} parent=43 // pred_fallthru
          _
      $region44: #{tpu_custom_call.1} parent=5 // pred_fallthru
        _
    $region6: #{tpu_custom_call.1} parent=1 // loop_footer
      %s19 = sadd.s32 1, %s15
    $region7: #{tpu_custom_call.1} parent=1 // loop_footer_branch
      %14 = sbr.rel target = $region3
    $region8: #{tpu_custom_call.1} parent=1 // loop_exit
      _
    %208 = vsyncpa [#allocation3], 1
    %s209 = scalar_lea.sflag [#allocation3], 1
    %210 = vsyncpa %s209, 1
    %211 = vsyncpa [#allocation6], 1
    %s212 = scalar_lea.sflag [#allocation6], 1
    %213 = vsyncpa %s212, 1
    %214 = vsyncpa [#allocation4], 1
    %s215 = scalar_lea.sflag [#allocation4], 1
    %216 = vsyncpa %s215, 1

// kernel: decoder_forward.8
$region0: #{decoder_forward.8}
  #allocation0 [shape = 'u32[]', space=smem, size = 0x4, offset = 0x4, fixed_abs, tag = 'smem constant byte address 0x4 - core index']
  #allocation1 [shape = 'u32[144,128]{1,0:T(1,128)}', space=vmem, size = 0x12000, scoped, tag = 'internal scratch']
  %s0 = inlined_call_operand.vmem [shape: bf16[2,8,32], index: 0, kind: input, shape index: {}]
  %s1 = inlined_call_operand.vmem [shape: bf16[2,8,32], index: 1, kind: input, shape index: {}]
  %s2 = inlined_call_operand.vmem [shape: bf16[32,32], index: 2, kind: input, shape index: {}]
  %s3 = inlined_call_operand.vmem [shape: f32[1,32], index: 3, kind: input, shape index: {}]
  %s4 = inlined_call_operand.vmem [shape: bf16[32,64], index: 4, kind: input, shape index: {}]
  %s5 = inlined_call_operand.vmem [shape: f32[1,64], index: 5, kind: input, shape index: {}]
  %s6 = inlined_call_operand.vmem [shape: bf16[32,32], index: 6, kind: input, shape index: {}]
  %s7 = inlined_call_operand.vmem [shape: f32[1,32], index: 7, kind: input, shape index: {}]
  %s8 = inlined_call_operand.vmem [shape: f32[1,32], index: 8, kind: input, shape index: {}]
  %s9 = inlined_call_operand.vmem [shape: f32[1,32], index: 9, kind: input, shape index: {}]
  %s10 = inlined_call_operand.vmem [shape: bf16[2,8,32], index: 10, kind: output, shape index: {}]
  %s11 = sld [smem:[#allocation0]]
  $region73: #{decoder_forward.8} parent=0
    _
  %s13 = ssub.s32 1, %s11
  %s14 = scalar_select 0, %s13, %s11
  loop: start=0, step=1, limit=4
  $region2: #{decoder_forward.8} parent=0 // loop_pre_header
    _
  $region3: #{decoder_forward.8} parent=0 // loop_header
    %s16 = sphi 0, %s20
    %p17 = scmp.ge.s32.totalorder %s16, 4
    %s23 = sphi 0, %s35
    %s24 = sphi 0, %s31
    %s25 = sphi 0, %s23
    %s26 = sphi 0, %s24
    %s27 = sphi 0, %s25
    %s28 = sphi 0, %s26
    %s40 = sphi 0, %s42
    %s43 = sphi 0, %s40
    %s44 = sphi 0, %s43
    %s60 = sphi 0, %s44
    %s66 = sphi 0, %s68
    %s69 = sphi 0, %s66
    %s70 = sphi 0, %s69
    %s86 = sphi 0, %s70
    %s90 = sphi 0, %s90
    %s92 = sphi 0, %s90
    %s93 = sphi 0, %s92
    %s107 = sphi 0, %s93
    %s111 = sphi 0, %s111
    %s113 = sphi 0, %s111
    %s114 = sphi 0, %s113
    %s128 = sphi 0, %s114
    %s132 = sphi 0, %s132
    %s134 = sphi 0, %s132
    %s135 = sphi 0, %s134
    %s149 = sphi 0, %s135
    %s153 = sphi 0, %s153
    %s155 = sphi 0, %s153
    %s156 = sphi 0, %s155
    %s170 = sphi 0, %s156
    %s174 = sphi 0, %s174
    %s176 = sphi 0, %s174
    %s177 = sphi 0, %s176
    %s191 = sphi 0, %s177
    %s195 = sphi 0, %s195
    %s197 = sphi 0, %s195
    %s198 = sphi 0, %s197
    %s212 = sphi 0, %s198
    %s216 = sphi 0, %s216
    %s218 = sphi 0, %s216
    %s219 = sphi 0, %s218
    %s233 = sphi 0, %s219
    %s237 = sphi 0, %s237
    %s239 = sphi 0, %s237
    %s240 = sphi 0, %s239
    %s254 = sphi 0, %s240
    %s262 = sphi 0, %s264
    %s265 = sphi 0, %s262
    %s266 = sphi 0, %s265
    %s282 = sphi 0, %s266
  $region4: #{decoder_forward.8} parent=0 // loop_header_branch
    %19 = sbr.rel (%p17) target = $region8
  $region5: #{decoder_forward.8} parent=0 // loop_body
    %s21 = ssub.s32 %s16, 1
    %s22 = ssub.s32 %s16, 2
    %s29 = sadd.s32 1, %s24
    %p30 = scmp.ge.s32.totalorder %s29, 1
    %s31 = scalar_select %p30, 0, %s29
    %s32 = sadd.s32 1, %s23
    %s33 = scalar_select %p30, %s32, %s23
    %p34 = scmp.ge.s32.totalorder %s33, 2
    %s35 = scalar_select %p34, 0, %s33
    %s36 = ssub.s32 %s23, %s35
    %s37 = ssub.s32 %s24, %s31
    %s38 = sor.u32 %s36, %s37
    %p39 = scmp.eq.s32.totalorder %s38, 0
    %s41 = sadd.s32 %s40, 1
    %s42 = scalar_select %p39, %s40, %s41
    %p45 = pneg %p39
    %p46 = scmp.eq.s32.totalorder %s16, 1
    %p47 = por %p45, %p46
    %p48 = scmp.ne.s32.totalorder %s40, %s43
    %p49 = scmp.eq.s32.totalorder %s16, 0
    %p50 = por %p48, %p49
    %p51 = scmp.ne.s32.totalorder %s40, %s43
    %p52 = scmp.eq.s32.totalorder %s21, 1
    %p53 = por %p51, %p52
    %p54 = scmp.ne.s32.totalorder %s43, %s44
    %p55 = scmp.eq.s32.totalorder %s21, 0
    %p56 = por %p54, %p55
    %p57 = scmp.ne.s32.totalorder %s43, %s44
    %p58 = scmp.eq.s32.totalorder %s22, 1
    %p59 = por %p57, %p58
    %p61 = scmp.ne.s32.totalorder %s44, %s60
    %p62 = scmp.eq.s32.totalorder %s22, 0
    %p63 = por %p61, %p62
    %s64 = ssub.s32 %s23, %s35
    %p65 = scmp.eq.s32.totalorder %s64, 0
    %s67 = sadd.s32 %s66, 1
    %s68 = scalar_select %p65, %s66, %s67
    %p71 = pneg %p65
    %p72 = scmp.eq.s32.totalorder %s16, 1
    %p73 = por %p71, %p72
    %p74 = scmp.ne.s32.totalorder %s66, %s69
    %p75 = scmp.eq.s32.totalorder %s16, 0
    %p76 = por %p74, %p75
    %p77 = scmp.ne.s32.totalorder %s66, %s69
    %p78 = scmp.eq.s32.totalorder %s21, 1
    %p79 = por %p77, %p78
    %p80 = scmp.ne.s32.totalorder %s69, %s70
    %p81 = scmp.eq.s32.totalorder %s21, 0
    %p82 = por %p80, %p81
    %p83 = scmp.ne.s32.totalorder %s69, %s70
    %p84 = scmp.eq.s32.totalorder %s22, 1
    %p85 = por %p83, %p84
    %p87 = scmp.ne.s32.totalorder %s70, %s86
    %p88 = scmp.eq.s32.totalorder %s22, 0
    %p89 = por %p87, %p88
    %s91 = sadd.s32 %s90, 1
    %p94 = scmp.eq.s32.totalorder %s16, 1
    %p95 = scmp.ne.s32.totalorder %s90, %s92
    %p96 = scmp.eq.s32.totalorder %s16, 0
    %p97 = por %p95, %p96
    %p98 = scmp.ne.s32.totalorder %s90, %s92
    %p99 = scmp.eq.s32.totalorder %s21, 1
    %p100 = por %p98, %p99
    %p101 = scmp.ne.s32.totalorder %s92, %s93
    %p102 = scmp.eq.s32.totalorder %s21, 0
    %p103 = por %p101, %p102
    %p104 = scmp.ne.s32.totalorder %s92, %s93
    %p105 = scmp.eq.s32.totalorder %s22, 1
    %p106 = por %p104, %p105
    %p108 = scmp.ne.s32.totalorder %s93, %s107
    %p109 = scmp.eq.s32.totalorder %s22, 0
    %p110 = por %p108, %p109
    %s112 = sadd.s32 %s111, 1
    %p115 = scmp.eq.s32.totalorder %s16, 1
    %p116 = scmp.ne.s32.totalorder %s111, %s113
    %p117 = scmp.eq.s32.totalorder %s16, 0
    %p118 = por %p116, %p117
    %p119 = scmp.ne.s32.totalorder %s111, %s113
    %p120 = scmp.eq.s32.totalorder %s21, 1
    %p121 = por %p119, %p120
    %p122 = scmp.ne.s32.totalorder %s113, %s114
    %p123 = scmp.eq.s32.totalorder %s21, 0
    %p124 = por %p122, %p123
    %p125 = scmp.ne.s32.totalorder %s113, %s114
    %p126 = scmp.eq.s32.totalorder %s22, 1
    %p127 = por %p125, %p126
    %p129 = scmp.ne.s32.totalorder %s114, %s128
    %p130 = scmp.eq.s32.totalorder %s22, 0
    %p131 = por %p129, %p130
    %s133 = sadd.s32 %s132, 1
    %p136 = scmp.eq.s32.totalorder %s16, 1
    %p137 = scmp.ne.s32.totalorder %s132, %s134
    %p138 = scmp.eq.s32.totalorder %s16, 0
    %p139 = por %p137, %p138
    %p140 = scmp.ne.s32.totalorder %s132, %s134
    %p141 = scmp.eq.s32.totalorder %s21, 1
    %p142 = por %p140, %p141
    %p143 = scmp.ne.s32.totalorder %s134, %s135
    %p144 = scmp.eq.s32.totalorder %s21, 0
    %p145 = por %p143, %p144
    %p146 = scmp.ne.s32.totalorder %s134, %s135
    %p147 = scmp.eq.s32.totalorder %s22, 1
    %p148 = por %p146, %p147
    %p150 = scmp.ne.s32.totalorder %s135, %s149
    %p151 = scmp.eq.s32.totalorder %s22, 0
    %p152 = por %p150, %p151
    %s154 = sadd.s32 %s153, 1
    %p157 = scmp.eq.s32.totalorder %s16, 1
    %p158 = scmp.ne.s32.totalorder %s153, %s155
    %p159 = scmp.eq.s32.totalorder %s16, 0
    %p160 = por %p158, %p159
    %p161 = scmp.ne.s32.totalorder %s153, %s155
    %p162 = scmp.eq.s32.totalorder %s21, 1
    %p163 = por %p161, %p162
    %p164 = scmp.ne.s32.totalorder %s155, %s156
    %p165 = scmp.eq.s32.totalorder %s21, 0
    %p166 = por %p164, %p165
    %p167 = scmp.ne.s32.totalorder %s155, %s156
    %p168 = scmp.eq.s32.totalorder %s22, 1
    %p169 = por %p167, %p168
    %p171 = scmp.ne.s32.totalorder %s156, %s170
    %p172 = scmp.eq.s32.totalorder %s22, 0
    %p173 = por %p171, %p172
    %s175 = sadd.s32 %s174, 1
    %p178 = scmp.eq.s32.totalorder %s16, 1
    %p179 = scmp.ne.s32.totalorder %s174, %s176
    %p180 = scmp.eq.s32.totalorder %s16, 0
    %p181 = por %p179, %p180
    %p182 = scmp.ne.s32.totalorder %s174, %s176
    %p183 = scmp.eq.s32.totalorder %s21, 1
    %p184 = por %p182, %p183
    %p185 = scmp.ne.s32.totalorder %s176, %s177
    %p186 = scmp.eq.s32.totalorder %s21, 0
    %p187 = por %p185, %p186
    %p188 = scmp.ne.s32.totalorder %s176, %s177
    %p189 = scmp.eq.s32.totalorder %s22, 1
    %p190 = por %p188, %p189
    %p192 = scmp.ne.s32.totalorder %s177, %s191
    %p193 = scmp.eq.s32.totalorder %s22, 0
    %p194 = por %p192, %p193
    %s196 = sadd.s32 %s195, 1
    %p199 = scmp.eq.s32.totalorder %s16, 1
    %p200 = scmp.ne.s32.totalorder %s195, %s197
    %p201 = scmp.eq.s32.totalorder %s16, 0
    %p202 = por %p200, %p201
    %p203 = scmp.ne.s32.totalorder %s195, %s197
    %p204 = scmp.eq.s32.totalorder %s21, 1
    %p205 = por %p203, %p204
    %p206 = scmp.ne.s32.totalorder %s197, %s198
    %p207 = scmp.eq.s32.totalorder %s21, 0
    %p208 = por %p206, %p207
    %p209 = scmp.ne.s32.totalorder %s197, %s198
    %p210 = scmp.eq.s32.totalorder %s22, 1
    %p211 = por %p209, %p210
    %p213 = scmp.ne.s32.totalorder %s198, %s212
    %p214 = scmp.eq.s32.totalorder %s22, 0
    %p215 = por %p213, %p214
    %s217 = sadd.s32 %s216, 1
    %p220 = scmp.eq.s32.totalorder %s16, 1
    %p221 = scmp.ne.s32.totalorder %s216, %s218
    %p222 = scmp.eq.s32.totalorder %s16, 0
    %p223 = por %p221, %p222
    %p224 = scmp.ne.s32.totalorder %s216, %s218
    %p225 = scmp.eq.s32.totalorder %s21, 1
    %p226 = por %p224, %p225
    %p227 = scmp.ne.s32.totalorder %s218, %s219
    %p228 = scmp.eq.s32.totalorder %s21, 0
    %p229 = por %p227, %p228
    %p230 = scmp.ne.s32.totalorder %s218, %s219
    %p231 = scmp.eq.s32.totalorder %s22, 1
    %p232 = por %p230, %p231
    %p234 = scmp.ne.s32.totalorder %s219, %s233
    %p235 = scmp.eq.s32.totalorder %s22, 0
    %p236 = por %p234, %p235
    %s238 = sadd.s32 %s237, 1
    %p241 = scmp.eq.s32.totalorder %s16, 1
    %p242 = scmp.ne.s32.totalorder %s237, %s239
    %p243 = scmp.eq.s32.totalorder %s16, 0
    %p244 = por %p242, %p243
    %p245 = scmp.ne.s32.totalorder %s237, %s239
    %p246 = scmp.eq.s32.totalorder %s21, 1
    %p247 = por %p245, %p246
    %p248 = scmp.ne.s32.totalorder %s239, %s240
    %p249 = scmp.eq.s32.totalorder %s21, 0
    %p250 = por %p248, %p249
    %p251 = scmp.ne.s32.totalorder %s239, %s240
    %p252 = scmp.eq.s32.totalorder %s22, 1
    %p253 = por %p251, %p252
    %p255 = scmp.ne.s32.totalorder %s240, %s254
    %p256 = scmp.eq.s32.totalorder %s22, 0
    %p257 = por %p255, %p256
    %s258 = ssub.s32 %s23, %s35
    %s259 = ssub.s32 %s24, %s31
    %s260 = sor.u32 %s258, %s259
    %p261 = scmp.eq.s32.totalorder %s260, 0
    %s263 = sadd.s32 %s262, 1
    %s264 = scalar_select %p261, %s262, %s263
    %p267 = pneg %p261
    %p268 = scmp.eq.s32.totalorder %s16, 1
    %p269 = por %p267, %p268
    %p270 = scmp.ne.s32.totalorder %s262, %s265
    %p271 = scmp.eq.s32.totalorder %s16, 0
    %p272 = por %p270, %p271
    %p273 = scmp.ne.s32.totalorder %s262, %s265
    %p274 = scmp.eq.s32.totalorder %s21, 1
    %p275 = por %p273, %p274
    %p276 = scmp.ne.s32.totalorder %s265, %s266
    %p277 = scmp.eq.s32.totalorder %s21, 0
    %p278 = por %p276, %p277
    %p279 = scmp.ne.s32.totalorder %s265, %s266
    %p280 = scmp.eq.s32.totalorder %s22, 1
    %p281 = por %p279, %p280
    %p283 = scmp.ne.s32.totalorder %s266, %s282
    %p284 = scmp.eq.s32.totalorder %s22, 0
    %p285 = por %p283, %p284
    %p286 = scmp.le.s32.totalorder 1, %s16
    %p287 = scmp.lt.s32.totalorder %s16, 3
    %p288 = pnand %p286, %p287
    %p289 = pneg %p288
    // Predicated region
    $region9: #{decoder_forward.8} parent=5 // pred_check
      _
    $region10: #{decoder_forward.8} parent=5 // pred_check_branch
      %291 = sbr.rel (%p288) target = $region12
    $region11: #{decoder_forward.8} parent=5 // pred_region
      %s292 = ssub.s32 %s16, 1
      // Predicated region
      $region13: #{decoder_forward.8} parent=11 // pred_check
        %p293 = pneg %p103
      $region14: #{decoder_forward.8} parent=11 // pred_check_branch
        %295 = sbr.rel (%p293) target = $region16
      $region15: #{decoder_forward.8} parent=11 // pred_region
        _
      $region16: #{decoder_forward.8} parent=11 // pred_fallthru
        _
      // Predicated region
      $region17: #{decoder_forward.8} parent=11 // pred_check
        %p296 = pneg %p124
      $region18: #{decoder_forward.8} parent=11 // pred_check_branch
        %298 = sbr.rel (%p296) target = $region20
      $region19: #{decoder_forward.8} parent=11 // pred_region
        _
      $region20: #{decoder_forward.8} parent=11 // pred_fallthru
        _
      // Predicated region
      $region21: #{decoder_forward.8} parent=11 // pred_check
        %p299 = pneg %p145
      $region22: #{decoder_forward.8} parent=11 // pred_check_branch
        %301 = sbr.rel (%p299) target = $region24
      $region23: #{decoder_forward.8} parent=11 // pred_region
        _
      $region24: #{decoder_forward.8} parent=11 // pred_fallthru
        _
      // Predicated region
      $region25: #{decoder_forward.8} parent=11 // pred_check
        %p302 = pneg %p166
      $region26: #{decoder_forward.8} parent=11 // pred_check_branch
        %304 = sbr.rel (%p302) target = $region28
      $region27: #{decoder_forward.8} parent=11 // pred_region
        _
      $region28: #{decoder_forward.8} parent=11 // pred_fallthru
        _
      // Predicated region
      $region29: #{decoder_forward.8} parent=11 // pred_check
        %p305 = pneg %p187
      $region30: #{decoder_forward.8} parent=11 // pred_check_branch
        %307 = sbr.rel (%p305) target = $region32
      $region31: #{decoder_forward.8} parent=11 // pred_region
        _
      $region32: #{decoder_forward.8} parent=11 // pred_fallthru
        _
      // Predicated region
      $region33: #{decoder_forward.8} parent=11 // pred_check
        %p308 = pneg %p208
      $region34: #{decoder_forward.8} parent=11 // pred_check_branch
        %310 = sbr.rel (%p308) target = $region36
      $region35: #{decoder_forward.8} parent=11 // pred_region
        _
      $region36: #{decoder_forward.8} parent=11 // pred_fallthru
        _
      // Predicated region
      $region37: #{decoder_forward.8} parent=11 // pred_check
        %p311 = pneg %p229
      $region38: #{decoder_forward.8} parent=11 // pred_check_branch
        %313 = sbr.rel (%p311) target = $region40
      $region39: #{decoder_forward.8} parent=11 // pred_region
        _
      $region40: #{decoder_forward.8} parent=11 // pred_fallthru
        _
      // Predicated region
      $region41: #{decoder_forward.8} parent=11 // pred_check
        %p314 = pneg %p250
      $region42: #{decoder_forward.8} parent=11 // pred_check_branch
        %316 = sbr.rel (%p314) target = $region44
      $region43: #{decoder_forward.8} parent=11 // pred_region
        _
      $region44: #{decoder_forward.8} parent=11 // pred_fallthru
        _
    $region12: #{decoder_forward.8} parent=5 // pred_fallthru
      _
    %p317 = scmp.lt.s32.totalorder %s16, 2
    // Predicated region
    $region45: #{decoder_forward.8} parent=5 // pred_check
      %p318 = pneg %p317
    $region46: #{decoder_forward.8} parent=5 // pred_check_branch
      %320 = sbr.rel (%p318) target = $region48
    $region47: #{decoder_forward.8} parent=5 // pred_region
      // Predicated region
      $region49: #{decoder_forward.8} parent=47 // pred_check
        %p321 = pneg %p50
      $region50: #{decoder_forward.8} parent=47 // pred_check_branch
        %323 = sbr.rel (%p321) target = $region52
      $region51: #{decoder_forward.8} parent=47 // pred_region
        %p324 = scmp.lt.s32.totalorder %s23, 1
        %s325 = scalar_select %p324, %s23, 1
        %p326 = scmp.lt.s32.totalorder %s24, 0
        %s327 = scalar_select %p326, %s24, 0
        %s328 = sadd.s32 %s327, %s325
        %s329 = smul.addr %s328, 4
        %s330 = scalar_lea.vmem %s0, %s329
      $region52: #{decoder_forward.8} parent=47 // pred_fallthru
        _
      // Predicated region
      $region53: #{decoder_forward.8} parent=47 // pred_check
        %p331 = pneg %p76
      $region54: #{decoder_forward.8} parent=47 // pred_check_branch
        %333 = sbr.rel (%p331) target = $region56
      $region55: #{decoder_forward.8} parent=47 // pred_region
        %p334 = scmp.lt.s32.totalorder %s23, 1
        %s335 = scalar_select %p334, %s23, 1
        %s336 = smul.addr %s335, 4
        %s337 = scalar_lea.vmem %s1, %s336
      $region56: #{decoder_forward.8} parent=47 // pred_fallthru
        _
    $region48: #{decoder_forward.8} parent=5 // pred_fallthru
      _
    %p338 = scmp.le.s32.totalorder 1, %s16
    %p339 = scmp.lt.s32.totalorder %s16, 3
    %p340 = pnand %p338, %p339
    %p341 = pneg %p340
    // Predicated region
    $region57: #{decoder_forward.8} parent=5 // pred_check
      _
    $region58: #{decoder_forward.8} parent=5 // pred_check_branch
      %343 = sbr.rel (%p340) target = $region60
    $region59: #{decoder_forward.8} parent=5 // pred_region
      %s344 = ssub.s32 %s16, 1
      %p345 = scmp.lt.s32.totalorder %s25, 1
      %s346 = scalar_select %p345, %s25, 1
      %p347 = scmp.lt.s32.totalorder %s26, 0
      %s348 = scalar_select %p347, %s26, 0
      %s349 = sadd.s32 %s348, %s346
      %s350 = smul.addr %s349, 4
      %s351 = scalar_lea.vmem %s0, %s350
      %p352 = pneg %p56
      %p353 = pneg %p53
      %p354 = scmp.lt.s32.totalorder %s25, 1
      %s355 = scalar_select %p354, %s25, 1
      %s356 = smul.addr %s355, 4
      %s357 = scalar_lea.vmem %s1, %s356
      %p358 = pneg %p82
      %p359 = pneg %p79
      %p360 = pneg %p103
      %p361 = pneg %p100
      %p362 = pneg %p124
      %p363 = pneg %p121
      %p364 = pneg %p145
      %p365 = pneg %p142
      %p366 = pneg %p166
      %p367 = pneg %p163
      %p368 = pneg %p187
      %p369 = pneg %p184
      %p370 = pneg %p208
      %p371 = pneg %p205
      %p372 = pneg %p229
      %p373 = pneg %p226
      %p374 = pneg %p250
      %p375 = pneg %p247
      %p376 = pneg %p278
      %p377 = pneg %p275
      %p378 = scmp.lt.s32.totalorder %s25, 1
      %s379 = scalar_select %p378, %s25, 1
      %p380 = scmp.lt.s32.totalorder %s26, 0
      %s381 = scalar_select %p380, %s26, 0
      %s382 = sadd.s32 %s381, %s379
      %s383 = smul.addr %s382, 4
      %s384 = scalar_lea.vmem %s10, %s383
      %p385 = scmp.lt.s32.totalorder %s25, 1
      %s386 = scalar_select %p385, %s25, 1
      %p387 = scmp.lt.s32.totalorder %s26, 0
      %s388 = scalar_select %p387, %s26, 0
      %s389 = sadd.s32 %s388, %s386
      %s390 = smul.addr %s389, 4
      %s391 = scalar_lea.vmem %s0, %s390
      %p392 = scmp.lt.s32.totalorder %s25, 1
      %s393 = scalar_select %p392, %s25, 1
      %s394 = smul.addr %s393, 4
      %s395 = scalar_lea.vmem %s1, %s394
      %p396 = scmp.lt.s32.totalorder %s25, 1
      %s397 = scalar_select %p396, %s25, 1
      %p398 = scmp.lt.s32.totalorder %s26, 0
      %s399 = scalar_select %p398, %s26, 0
      %s400 = sadd.s32 %s399, %s397
      %s401 = smul.addr %s400, 4
      %s402 = scalar_lea.vmem %s10, %s401
      %v404 = vld [vmem:[%s391] sm:$0xf]
      %v405 = vld [vmem:[%s395] sm:$0xf]
      %v406 = vld [vmem:[%s2] sm:$0xf]
      %v407 = vld [vmem:[%s2 + $0x4] sm:$0xf]
      %v408 = vld [vmem:[%s2 + $0x8] sm:$0xf]
      %v409 = vld [vmem:[%s2 + $0xc] sm:$0xf]
      %v410 = vld [vmem:[%s3] sm:$0x1]
      %v412 = vlaneseq
      %v413 = vshrl.u32 %v412, 7
      %v414 = vsub.s32 0, %v413
      %v415 = vrot.slane %v410, %v414
      %v421 = vunpack.c.l.b16 %v406
      %v422 = vunpack.c.l.b16 %v407
      %v423 = vunpack.c.l.b16 %v408
      %v424 = vunpack.c.l.b16 %v409
      %v425 = vpack.c.b16 %v422, %v421
      %v426 = vpack.c.b16 %v424, %v423
      %vm429 = vcmask 261120
      %v431 = vsel %vm429, %v404, 0
      %433 = vmatprep.subr.bf16.mxu0 0
      %434 = vmatpush1.bf16.msra.mxu0 %v425
      %435 = vmatprep.subr.bf16.mxu0 0
      %436 = vmatpush1.bf16.msra.mxu0 %v426
      %437 = vmatprep.subr.bf16.mxu0 0
      %438 = vmatpush1.bf16.msra.mxu0 0
      %439 = vmatprep.subr.bf16.mxu0 0
      %440 = vmatpush1.bf16.msra.mxu0 0
      %441 = vmatprep.subr.bf16.mxu0 0
      %442 = vmatpush1.bf16.msra.mxu0 0
      %443 = vmatprep.subr.bf16.mxu0 0
      %444 = vmatpush1.bf16.msra.mxu0 0
      %445 = vmatprep.subr.bf16.mxu0 0
      %446 = vmatpush1.bf16.msra.mxu0 0
      %447 = vmatprep.subr.bf16.mxu0 0
      %448 = vmatpush1.bf16.msra.mxu0 0
      %449 = vmatprep.subr.bf16.mxu0 0
      %450 = vmatpush1.bf16.msra.mxu0 0
      %451 = vmatprep.subr.bf16.mxu0 0
      %452 = vmatpush1.bf16.msra.mxu0 0
      %453 = vmatprep.subr.bf16.mxu0 0
      %454 = vmatpush1.bf16.msra.mxu0 0
      %455 = vmatprep.subr.bf16.mxu0 0
      %456 = vmatpush1.bf16.msra.mxu0 0
      %457 = vmatprep.subr.bf16.mxu0 0
      %458 = vmatpush1.bf16.msra.mxu0 0
      %459 = vmatprep.subr.bf16.mxu0 0
      %460 = vmatpush1.bf16.msra.mxu0 0
      %461 = vmatprep.subr.bf16.mxu0 0
      %462 = vmatpush1.bf16.msra.mxu0 0
      %463 = vmatprep.subr.bf16.mxu0 0
      %464 = vmatpush1.bf16.msra.mxu0 0
      %465 = vmatprep.mubr.bf16.mxu0 0
      %466 = vmatmul.mubr.bf16.gmra.mrb[0].mxu0 %v431
      %v467 = vpop.f32.mrb[0].mxu0
      %v468 = vadd.f32 %v415, %v467
      %v469 = vpop.f32.mrb[0].mxu0
      %v470 = vpop.f32.mrb[0].mxu0
      %v471 = vpop.f32.mrb[0].mxu0
      %472 = vdwg.mxu0
      %v473 = vld [vmem:[%s4] sm:$0xf]
      %v474 = vld [vmem:[%s4 + $0x4] sm:$0xf]
      %v475 = vld [vmem:[%s4 + $0x8] sm:$0xf]
      %v476 = vld [vmem:[%s4 + $0xc] sm:$0xf]
      %v477 = vld [vmem:[%s5] sm:$0x1]
      %v479 = vlaneseq
      %v480 = vshrl.u32 %v479, 7
      %v481 = vsub.s32 0, %v480
      %v482 = vrot.slane %v477, %v481
      %v488 = vunpack.c.l.b16 %v473
      %v489 = vunpack.c.l.b16 %v474
      %v490 = vunpack.c.l.b16 %v475
      %v491 = vunpack.c.l.b16 %v476
      %v492 = vpack.c.b16 %v489, %v488
      %v493 = vpack.c.b16 %v491, %v490
      %v497 = vsel %vm429, %v405, 0
      %499 = vmatprep.subr.bf16.mxu0 0
      %500 = vmatpush1.bf16.msra.mxu0 %v492
      %501 = vmatprep.subr.bf16.mxu0 0
      %502 = vmatpush1.bf16.msra.mxu0 %v493
      %503 = vmatprep.subr.bf16.mxu0 0
      %504 = vmatpush1.bf16.msra.mxu0 0
      %505 = vmatprep.subr.bf16.mxu0 0
      %506 = vmatpush1.bf16.msra.mxu0 0
      %507 = vmatprep.subr.bf16.mxu0 0
      %508 = vmatpush1.bf16.msra.mxu0 0
      %509 = vmatprep.subr.bf16.mxu0 0
      %510 = vmatpush1.bf16.msra.mxu0 0
      %511 = vmatprep.subr.bf16.mxu0 0
      %512 = vmatpush1.bf16.msra.mxu0 0
      %513 = vmatprep.subr.bf16.mxu0 0
      %514 = vmatpush1.bf16.msra.mxu0 0
      %515 = vmatprep.subr.bf16.mxu0 0
      %516 = vmatpush1.bf16.msra.mxu0 0
      %517 = vmatprep.subr.bf16.mxu0 0
      %518 = vmatpush1.bf16.msra.mxu0 0
      %519 = vmatprep.subr.bf16.mxu0 0
      %520 = vmatpush1.bf16.msra.mxu0 0
      %521 = vmatprep.subr.bf16.mxu0 0
      %522 = vmatpush1.bf16.msra.mxu0 0
      %523 = vmatprep.subr.bf16.mxu0 0
      %524 = vmatpush1.bf16.msra.mxu0 0
      %525 = vmatprep.subr.bf16.mxu0 0
      %526 = vmatpush1.bf16.msra.mxu0 0
      %527 = vmatprep.subr.bf16.mxu0 0
      %528 = vmatpush1.bf16.msra.mxu0 0
      %529 = vmatprep.subr.bf16.mxu0 0
      %530 = vmatpush1.bf16.msra.mxu0 0
      %531 = vmatprep.mubr.bf16.mxu0 0
      %532 = vmatmul.mubr.bf16.gmra.mrb[0].mxu0 %v497
      %v533 = vpop.f32.mrb[0].mxu0
      %v534 = vadd.f32 %v482, %v533
      %v535 = vpop.f32.mrb[0].mxu0
      %v536 = vpop.f32.mrb[0].mxu0
      %v537 = vpop.f32.mrb[0].mxu0
      %538 = vdwg.mxu0
      %v539 = vld [vmem:[%s6] sm:$0xf]
      %v540 = vld [vmem:[%s6 + $0x4] sm:$0xf]
      %v541 = vld [vmem:[%s6 + $0x8] sm:$0xf]
      %v542 = vld [vmem:[%s6 + $0xc] sm:$0xf]
      %v543 = vld [vmem:[%s7] sm:$0x1]
      %v544 = vpack.c.bf16 %v468, %v468
      %v545 = vpack.c.bf16 %v534, %v534
      %vm546 = vcmask 64512
      %v548 = vsel %vm546, %v544, 0
      %v551 = vsel %vm546, %v545, 0
      %553 = vmatprep.subr.bf16.mxu0 0
      %554 = vmatpush1.bf16.xpose.msra.mxu0 %v551
      %555 = vmatprep.subr.bf16.mxu0 0
      %556 = vmatpush1.bf16.xpose.msra.mxu0 0
      %557 = vmatprep.subr.bf16.mxu0 0
      %558 = vmatpush1.bf16.xpose.msra.mxu0 0
      %559 = vmatprep.subr.bf16.mxu0 0
      %560 = vmatpush1.bf16.xpose.msra.mxu0 0
      %561 = vmatprep.subr.bf16.mxu0 0
      %562 = vmatpush1.bf16.xpose.msra.mxu0 0
      %563 = vmatprep.subr.bf16.mxu0 0
      %564 = vmatpush1.bf16.xpose.msra.mxu0 0
      %565 = vmatprep.subr.bf16.mxu0 0
      %566 = vmatpush1.bf16.xpose.msra.mxu0 0
      %567 = vmatprep.subr.bf16.mxu0 0
      %568 = vmatpush1.bf16.xpose.msra.mxu0 0
      %569 = vmatprep.subr.bf16.mxu0 0
      %570 = vmatpush1.bf16.xpose.msra.mxu0 0
      %571 = vmatprep.subr.bf16.mxu0 0
      %572 = vmatpush1.bf16.xpose.msra.mxu0 0
      %573 = vmatprep.subr.bf16.mxu0 0
      %574 = vmatpush1.bf16.xpose.msra.mxu0 0
      %575 = vmatprep.subr.bf16.mxu0 0
      %576 = vmatpush1.bf16.xpose.msra.mxu0 0
      %577 = vmatprep.subr.bf16.mxu0 0
      %578 = vmatpush1.bf16.xpose.msra.mxu0 0
      %579 = vmatprep.subr.bf16.mxu0 0
      %580 = vmatpush1.bf16.xpose.msra.mxu0 0
      %581 = vmatprep.subr.bf16.mxu0 0
      %582 = vmatpush1.bf16.xpose.msra.mxu0 0
      %583 = vmatprep.subr.bf16.mxu0 0
      %584 = vmatpush1.bf16.xpose.msra.mxu0 0
      %585 = vmatprep.mubr.bf16.mxu0 0
      %586 = vmatmul.mubr.bf16.gmra.mrb[0].mxu0 %v548
      %v587 = vpop.f32.mrb[0].mxu0
      %v588 = vadd.f32 0.0, %v587
      %v589 = vpop.f32.mrb[0].mxu0
      %v590 = vpop.f32.mrb[0].mxu0
      %v591 = vpop.f32.mrb[0].mxu0
      %592 = vdwg.mxu0
      %v593 = vsel %vm546, %v588, -inf
      %594 = vmax.xlane.f32.xlu0 %v593
      %v595 = vpop.xlane.xlu0 %594
      %v596 = vsub.f32 %v588, %v595
      %v597 = vmul.f32 %v596, 1.442695
      %v598 = vpow.pop %v597
      %v599 = vsel %vm546, %v598, 0.0
      %600 = vadd.xlane.f32.xlu0 %v599
      %v601 = vpop.xlane.xlu0 %600
      %v602 = vrcp.pop %v601
      %v603 = vmul.f32 %v598, %v602
      %v604 = vpack.c.bf16 %v603, %v603
      %606 = vrot.lane.b32.xlu0 %v545, 96
      %v607 = vpop.permute.xlu0 %606
      %v609 = vsel %vm546, %v604, 0
      %vm611 = vcmask 1043456
      %v613 = vsel %vm611, %v607, 0
      %615 = vmatprep.subr.bf16.mxu0 0
      %616 = vmatpush1.bf16.msra.mxu0 %v613
      %617 = vmatprep.subr.bf16.mxu0 0
      %618 = vmatpush1.bf16.msra.mxu0 0
      %619 = vmatprep.subr.bf16.mxu0 0
      %620 = vmatpush1.bf16.msra.mxu0 0
      %621 = vmatprep.subr.bf16.mxu0 0
      %622 = vmatpush1.bf16.msra.mxu0 0
      %623 = vmatprep.subr.bf16.mxu0 0
      %624 = vmatpush1.bf16.msra.mxu0 0
      %625 = vmatprep.subr.bf16.mxu0 0
      %626 = vmatpush1.bf16.msra.mxu0 0
      %627 = vmatprep.subr.bf16.mxu0 0
      %628 = vmatpush1.bf16.msra.mxu0 0
      %629 = vmatprep.subr.bf16.mxu0 0
      %630 = vmatpush1.bf16.msra.mxu0 0
      %631 = vmatprep.subr.bf16.mxu0 0
      %632 = vmatpush1.bf16.msra.mxu0 0
      %633 = vmatprep.subr.bf16.mxu0 0
      %634 = vmatpush1.bf16.msra.mxu0 0
      %635 = vmatprep.subr.bf16.mxu0 0
      %636 = vmatpush1.bf16.msra.mxu0 0
      %637 = vmatprep.subr.bf16.mxu0 0
      %638 = vmatpush1.bf16.msra.mxu0 0
      %639 = vmatprep.subr.bf16.mxu0 0
      %640 = vmatpush1.bf16.msra.mxu0 0
      %641 = vmatprep.subr.bf16.mxu0 0
      %642 = vmatpush1.bf16.msra.mxu0 0
      %643 = vmatprep.subr.bf16.mxu0 0
      %644 = vmatpush1.bf16.msra.mxu0 0
      %645 = vmatprep.subr.bf16.mxu0 0
      %646 = vmatpush1.bf16.msra.mxu0 0
      %647 = vmatprep.mubr.bf16.mxu0 0
      %648 = vmatmul.mubr.bf16.gmra.mrb[0].mxu0 %v609
      %v649 = vpop.f32.mrb[0].mxu0
      %v650 = vadd.f32 0.0, %v649
      %v651 = vpop.f32.mrb[0].mxu0
      %v652 = vpop.f32.mrb[0].mxu0
      %v653 = vpop.f32.mrb[0].mxu0
      %654 = vdwg.mxu0
      %656 = vrot.lane.b32.xlu0 %v544, 120
      %v657 = vpop.permute.xlu0 %656
      %658 = vrot.lane.b32.xlu0 %v545, 120
      %v659 = vpop.permute.xlu0 %658
      %v661 = vsel %vm546, %v657, 0
      %v664 = vsel %vm546, %v659, 0
      %666 = vmatprep.subr.bf16.mxu0 0
      %667 = vmatpush1.bf16.xpose.msra.mxu0 %v664
      %668 = vmatprep.subr.bf16.mxu0 0
      %669 = vmatpush1.bf16.xpose.msra.mxu0 0
      %670 = vmatprep.subr.bf16.mxu0 0
      %671 = vmatpush1.bf16.xpose.msra.mxu0 0
      %672 = vmatprep.subr.bf16.mxu0 0
      %673 = vmatpush1.bf16.xpose.msra.mxu0 0
      %674 = vmatprep.subr.bf16.mxu0 0
      %675 = vmatpush1.bf16.xpose.msra.mxu0 0
      %676 = vmatprep.subr.bf16.mxu0 0
      %677 = vmatpush1.bf16.xpose.msra.mxu0 0
      %678 = vmatprep.subr.bf16.mxu0 0
      %679 = vmatpush1.bf16.xpose.msra.mxu0 0
      %680 = vmatprep.subr.bf16.mxu0 0
      %681 = vmatpush1.bf16.xpose.msra.mxu0 0
      %682 = vmatprep.subr.bf16.mxu0 0
      %683 = vmatpush1.bf16.xpose.msra.mxu0 0
      %684 = vmatprep.subr.bf16.mxu0 0
      %685 = vmatpush1.bf16.xpose.msra.mxu0 0
      %686 = vmatprep.subr.bf16.mxu0 0
      %687 = vmatpush1.bf16.xpose.msra.mxu0 0
      %688 = vmatprep.subr.bf16.mxu0 0
      %689 = vmatpush1.bf16.xpose.msra.mxu0 0
      %690 = vmatprep.subr.bf16.mxu0 0
      %691 = vmatpush1.bf16.xpose.msra.mxu0 0
      %692 = vmatprep.subr.bf16.mxu0 0
      %693 = vmatpush1.bf16.xpose.msra.mxu0 0
      %694 = vmatprep.subr.bf16.mxu0 0
      %695 = vmatpush1.bf16.xpose.msra.mxu0 0
      %696 = vmatprep.subr.bf16.mxu0 0
      %697 = vmatpush1.bf16.xpose.msra.mxu0 0
      %698 = vmatprep.mubr.bf16.mxu0 0
      %699 = vmatmul.mubr.bf16.gmra.mrb[0].mxu0 %v661
      %v700 = vpop.f32.mrb[0].mxu0
      %v701 = vadd.f32 0.0, %v700
      %v702 = vpop.f32.mrb[0].mxu0
      %v703 = vpop.f32.mrb[0].mxu0
      %v704 = vpop.f32.mrb[0].mxu0
      %705 = vdwg.mxu0
      %v706 = vsel %vm546, %v701, -inf
      %707 = vmax.xlane.f32.xlu0 %v706
      %v708 = vpop.xlane.xlu0 %707
      %v709 = vsub.f32 %v701, %v708
      %v710 = vmul.f32 %v709, 1.442695
      %v711 = vpow.pop %v710
      %v712 = vsel %vm546, %v711, 0.0
      %713 = vadd.xlane.f32.xlu0 %v712
      %v714 = vpop.xlane.xlu0 %713
      %v715 = vrcp.pop %v714
      %v716 = vmul.f32 %v711, %v715
      %v717 = vpack.c.bf16 %v716, %v716
      %718 = vrot.lane.b32.xlu0 %v545, 88
      %v719 = vpop.permute.xlu0 %718
      %v721 = vsel %vm546, %v717, 0
      %v724 = vsel %vm611, %v719, 0
      %726 = vmatprep.subr.bf16.mxu0 0
      %727 = vmatpush1.bf16.msra.mxu0 %v724
      %728 = vmatprep.subr.bf16.mxu0 0
      %729 = vmatpush1.bf16.msra.mxu0 0
      %730 = vmatprep.subr.bf16.mxu0 0
      %731 = vmatpush1.bf16.msra.mxu0 0
      %732 = vmatprep.subr.bf16.mxu0 0
      %733 = vmatpush1.bf16.msra.mxu0 0
      %734 = vmatprep.subr.bf16.mxu0 0
      %735 = vmatpush1.bf16.msra.mxu0 0
      %736 = vmatprep.subr.bf16.mxu0 0
      %737 = vmatpush1.bf16.msra.mxu0 0
      %738 = vmatprep.subr.bf16.mxu0 0
      %739 = vmatpush1.bf16.msra.mxu0 0
      %740 = vmatprep.subr.bf16.mxu0 0
      %741 = vmatpush1.bf16.msra.mxu0 0
      %742 = vmatprep.subr.bf16.mxu0 0
      %743 = vmatpush1.bf16.msra.mxu0 0
      %744 = vmatprep.subr.bf16.mxu0 0
      %745 = vmatpush1.bf16.msra.mxu0 0
      %746 = vmatprep.subr.bf16.mxu0 0
      %747 = vmatpush1.bf16.msra.mxu0 0
      %748 = vmatprep.subr.bf16.mxu0 0
      %749 = vmatpush1.bf16.msra.mxu0 0
      %750 = vmatprep.subr.bf16.mxu0 0
      %751 = vmatpush1.bf16.msra.mxu0 0
      %752 = vmatprep.subr.bf16.mxu0 0
      %753 = vmatpush1.bf16.msra.mxu0 0
      %754 = vmatprep.subr.bf16.mxu0 0
      %755 = vmatpush1.bf16.msra.mxu0 0
      %756 = vmatprep.subr.bf16.mxu0 0
      %757 = vmatpush1.bf16.msra.mxu0 0
      %758 = vmatprep.mubr.bf16.mxu0 0
      %759 = vmatmul.mubr.bf16.gmra.mrb[0].mxu0 %v721
      %v760 = vpop.f32.mrb[0].mxu0
      %v761 = vadd.f32 0.0, %v760
      %v762 = vpop.f32.mrb[0].mxu0
      %v763 = vpop.f32.mrb[0].mxu0
      %v764 = vpop.f32.mrb[0].mxu0
      %765 = vdwg.mxu0
      %766 = vrot.lane.b32.xlu0 %v544, 112
      %v767 = vpop.permute.xlu0 %766
      %768 = vrot.lane.b32.xlu0 %v545, 112
      %v769 = vpop.permute.xlu0 %768
      %v771 = vsel %vm546, %v767, 0
      %v774 = vsel %vm546, %v769, 0
      %776 = vmatprep.subr.bf16.mxu0 0
      %777 = vmatpush1.bf16.xpose.msra.mxu0 %v774
      %778 = vmatprep.subr.bf16.mxu0 0
      %779 = vmatpush1.bf16.xpose.msra.mxu0 0
      %780 = vmatprep.subr.bf16.mxu0 0
      %781 = vmatpush1.bf16.xpose.msra.mxu0 0
      %782 = vmatprep.subr.bf16.mxu0 0
      %783 = vmatpush1.bf16.xpose.msra.mxu0 0
      %784 = vmatprep.subr.bf16.mxu0 0
      %785 = vmatpush1.bf16.xpose.msra.mxu0 0
      %786 = vmatprep.subr.bf16.mxu0 0
      %787 = vmatpush1.bf16.xpose.msra.mxu0 0
      %788 = vmatprep.subr.bf16.mxu0 0
      %789 = vmatpush1.bf16.xpose.msra.mxu0 0
      %790 = vmatprep.subr.bf16.mxu0 0
      %791 = vmatpush1.bf16.xpose.msra.mxu0 0
      %792 = vmatprep.subr.bf16.mxu0 0
      %793 = vmatpush1.bf16.xpose.msra.mxu0 0
      %794 = vmatprep.subr.bf16.mxu0 0
      %795 = vmatpush1.bf16.xpose.msra.mxu0 0
      %796 = vmatprep.subr.bf16.mxu0 0
      %797 = vmatpush1.bf16.xpose.msra.mxu0 0
      %798 = vmatprep.subr.bf16.mxu0 0
      %799 = vmatpush1.bf16.xpose.msra.mxu0 0
      %800 = vmatprep.subr.bf16.mxu0 0
      %801 = vmatpush1.bf16.xpose.msra.mxu0 0
      %802 = vmatprep.subr.bf16.mxu0 0
      %803 = vmatpush1.bf16.xpose.msra.mxu0 0
      %804 = vmatprep.subr.bf16.mxu0 0
      %805 = vmatpush1.bf16.xpose.msra.mxu0 0
      %806 = vmatprep.subr.bf16.mxu0 0
      %807 = vmatpush1.bf16.xpose.msra.mxu0 0
      %808 = vmatprep.mubr.bf16.mxu0 0
      %809 = vmatmul.mubr.bf16.gmra.mrb[0].mxu0 %v771
      %v810 = vpop.f32.mrb[0].mxu0
      %v811 = vadd.f32 0.0, %v810
      %v812 = vpop.f32.mrb[0].mxu0
      %v813 = vpop.f32.mrb[0].mxu0
      %v814 = vpop.f32.mrb[0].mxu0
      %815 = vdwg.mxu0
      %v816 = vsel %vm546, %v811, -inf
      %817 = vmax.xlane.f32.xlu0 %v816
      %v818 = vpop.xlane.xlu0 %817
      %v819 = vsub.f32 %v811, %v818
      %v820 = vmul.f32 %v819, 1.442695
      %v821 = vpow.pop %v820
      %v822 = vsel %vm546, %v821, 0.0
      %823 = vadd.xlane.f32.xlu0 %v822
      %v824 = vpop.xlane.xlu0 %823
      %v825 = vrcp.pop %v824
      %v826 = vmul.f32 %v821, %v825
      %v827 = vpack.c.bf16 %v826, %v826
      %828 = vrot.lane.b32.xlu0 %v545, 80
      %v829 = vpop.permute.xlu0 %828
      %v831 = vsel %vm546, %v827, 0
      %v834 = vsel %vm611, %v829, 0
      %836 = vmatprep.subr.bf16.mxu0 0
      %837 = vmatpush1.bf16.msra.mxu0 %v834
      %838 = vmatprep.subr.bf16.mxu0 0
      %839 = vmatpush1.bf16.msra.mxu0 0
      %840 = vmatprep.subr.bf16.mxu0 0
      %841 = vmatpush1.bf16.msra.mxu0 0
      %842 = vmatprep.subr.bf16.mxu0 0
      %843 = vmatpush1.bf16.msra.mxu0 0
      %844 = vmatprep.subr.bf16.mxu0 0
      %845 = vmatpush1.bf16.msra.mxu0 0
      %846 = vmatprep.subr.bf16.mxu0 0
      %847 = vmatpush1.bf16.msra.mxu0 0
      %848 = vmatprep.subr.bf16.mxu0 0
      %849 = vmatpush1.bf16.msra.mxu0 0
      %850 = vmatprep.subr.bf16.mxu0 0
      %851 = vmatpush1.bf16.msra.mxu0 0
      %852 = vmatprep.subr.bf16.mxu0 0
      %853 = vmatpush1.bf16.msra.mxu0 0
      %854 = vmatprep.subr.bf16.mxu0 0
      %855 = vmatpush1.bf16.msra.mxu0 0
      %856 = vmatprep.subr.bf16.mxu0 0
      %857 = vmatpush1.bf16.msra.mxu0 0
      %858 = vmatprep.subr.bf16.mxu0 0
      %859 = vmatpush1.bf16.msra.mxu0 0
      %860 = vmatprep.subr.bf16.mxu0 0
      %861 = vmatpush1.bf16.msra.mxu0 0
      %862 = vmatprep.subr.bf16.mxu0 0
      %863 = vmatpush1.bf16.msra.mxu0 0
      %864 = vmatprep.subr.bf16.mxu0 0
      %865 = vmatpush1.bf16.msra.mxu0 0
      %866 = vmatprep.subr.bf16.mxu0 0
      %867 = vmatpush1.bf16.msra.mxu0 0
      %868 = vmatprep.mubr.bf16.mxu0 0
      %869 = vmatmul.mubr.bf16.gmra.mrb[0].mxu0 %v831
      %v870 = vpop.f32.mrb[0].mxu0
      %v871 = vadd.f32 0.0, %v870
      %v872 = vpop.f32.mrb[0].mxu0
      %v873 = vpop.f32.mrb[0].mxu0
      %v874 = vpop.f32.mrb[0].mxu0
      %875 = vdwg.mxu0
      %876 = vrot.lane.b32.xlu0 %v544, 104
      %v877 = vpop.permute.xlu0 %876
      %878 = vrot.lane.b32.xlu0 %v545, 104
      %v879 = vpop.permute.xlu0 %878
      %v881 = vsel %vm546, %v877, 0
      %v884 = vsel %vm546, %v879, 0
      %886 = vmatprep.subr.bf16.mxu0 0
      %887 = vmatpush1.bf16.xpose.msra.mxu0 %v884
      %888 = vmatprep.subr.bf16.mxu0 0
      %889 = vmatpush1.bf16.xpose.msra.mxu0 0
      %890 = vmatprep.subr.bf16.mxu0 0
      %891 = vmatpush1.bf16.xpose.msra.mxu0 0
      %892 = vmatprep.subr.bf16.mxu0 0
      %893 = vmatpush1.bf16.xpose.msra.mxu0 0
      %894 = vmatprep.subr.bf16.mxu0 0
      %895 = vmatpush1.bf16.xpose.msra.mxu0 0
      %896 = vmatprep.subr.bf16.mxu0 0
      %897 = vmatpush1.bf16.xpose.msra.mxu0 0
      %898 = vmatprep.subr.bf16.mxu0 0
      %899 = vmatpush1.bf16.xpose.msra.mxu0 0
      %900 = vmatprep.subr.bf16.mxu0 0
      %901 = vmatpush1.bf16.xpose.msra.mxu0 0
      %902 = vmatprep.subr.bf16.mxu0 0
      %903 = vmatpush1.bf16.xpose.msra.mxu0 0
      %904 = vmatprep.subr.bf16.mxu0 0
      %905 = vmatpush1.bf16.xpose.msra.mxu0 0
      %906 = vmatprep.subr.bf16.mxu0 0
      %907 = vmatpush1.bf16.xpose.msra.mxu0 0
      %908 = vmatprep.subr.bf16.mxu0 0
      %909 = vmatpush1.bf16.xpose.msra.mxu0 0
      %910 = vmatprep.subr.bf16.mxu0 0
      %911 = vmatpush1.bf16.xpose.msra.mxu0 0
      %912 = vmatprep.subr.bf16.mxu0 0
      %913 = vmatpush1.bf16.xpose.msra.mxu0 0
      %914 = vmatprep.subr.bf16.mxu0 0
      %915 = vmatpush1.bf16.xpose.msra.mxu0 0
      %916 = vmatprep.subr.bf16.mxu0 0
      %917 = vmatpush1.bf16.xpose.msra.mxu0 0
      %918 = vmatprep.mubr.bf16.mxu0 0
      %919 = vmatmul.mubr.bf16.gmra.mrb[0].mxu0 %v881
      %v920 = vpop.f32.mrb[0].mxu0
      %v921 = vadd.f32 0.0, %v920
      %v922 = vpop.f32.mrb[0].mxu0
      %v923 = vpop.f32.mrb[0].mxu0
      %v924 = vpop.f32.mrb[0].mxu0
      %925 = vdwg.mxu0
      %v926 = vsel %vm546, %v921, -inf
      %927 = vmax.xlane.f32.xlu0 %v926
      %v928 = vpop.xlane.xlu0 %927
      %v929 = vsub.f32 %v921, %v928
      %v930 = vmul.f32 %v929, 1.442695
      %v931 = vpow.pop %v930
      %v932 = vsel %vm546, %v931, 0.0
      %933 = vadd.xlane.f32.xlu0 %v932
      %v934 = vpop.xlane.xlu0 %933
      %v935 = vrcp.pop %v934
      %v936 = vmul.f32 %v931, %v935
      %v937 = vpack.c.bf16 %v936, %v936
      %938 = vrot.lane.b32.xlu0 %v545, 72
      %v939 = vpop.permute.xlu0 %938
      %v941 = vsel %vm546, %v937, 0
      %v944 = vsel %vm611, %v939, 0
      %946 = vmatprep.subr.bf16.mxu0 0
      %947 = vmatpush1.bf16.msra.mxu0 %v944
      %948 = vmatprep.subr.bf16.mxu0 0
      %949 = vmatpush1.bf16.msra.mxu0 0
      %950 = vmatprep.subr.bf16.mxu0 0
      %951 = vmatpush1.bf16.msra.mxu0 0
      %952 = vmatprep.subr.bf16.mxu0 0
      %953 = vmatpush1.bf16.msra.mxu0 0
      %954 = vmatprep.subr.bf16.mxu0 0
      %955 = vmatpush1.bf16.msra.mxu0 0
      %956 = vmatprep.subr.bf16.mxu0 0
      %957 = vmatpush1.bf16.msra.mxu0 0
      %958 = vmatprep.subr.bf16.mxu0 0
      %959 = vmatpush1.bf16.msra.mxu0 0
      %960 = vmatprep.subr.bf16.mxu0 0
      %961 = vmatpush1.bf16.msra.mxu0 0
      %962 = vmatprep.subr.bf16.mxu0 0
      %963 = vmatpush1.bf16.msra.mxu0 0
      %964 = vmatprep.subr.bf16.mxu0 0
      %965 = vmatpush1.bf16.msra.mxu0 0
      %966 = vmatprep.subr.bf16.mxu0 0
      %967 = vmatpush1.bf16.msra.mxu0 0
      %968 = vmatprep.subr.bf16.mxu0 0
      %969 = vmatpush1.bf16.msra.mxu0 0
      %970 = vmatprep.subr.bf16.mxu0 0
      %971 = vmatpush1.bf16.msra.mxu0 0
      %972 = vmatprep.subr.bf16.mxu0 0
      %973 = vmatpush1.bf16.msra.mxu0 0
      %974 = vmatprep.subr.bf16.mxu0 0
      %975 = vmatpush1.bf16.msra.mxu0 0
      %976 = vmatprep.subr.bf16.mxu0 0
      %977 = vmatpush1.bf16.msra.mxu0 0
      %978 = vmatprep.mubr.bf16.mxu0 0
      %979 = vmatmul.mubr.bf16.gmra.mrb[0].mxu0 %v941
      %v980 = vpop.f32.mrb[0].mxu0
      %v981 = vadd.f32 0.0, %v980
      %v982 = vpop.f32.mrb[0].mxu0
      %v983 = vpop.f32.mrb[0].mxu0
      %v984 = vpop.f32.mrb[0].mxu0
      %985 = vdwg.mxu0
      %987 = vrot.lane.b32.xlu0 %v761, 8
      %v988 = vpop.permute.xlu0 %987
      %991 = vrot.lane.b32.xlu0 %v871, 16
      %v992 = vpop.permute.xlu0 %991
      %995 = vrot.lane.b32.xlu0 %v981, 24
      %v996 = vpop.permute.xlu0 %995
      %v998 = vsel %vm546, %v650, %v988
      %vm999 = vcmask 130048
      %v1000 = vsel %vm999, %v998, %v992
      %vm1001 = vcmask 195584
      %v1002 = vsel %vm1001, %v1000, %v996
      %v1003 = vpack.c.bf16 %v1002, %v1002
      %v1005 = vlaneseq
      %v1006 = vshrl.u32 %v1005, 7
      %v1007 = vsub.s32 0, %v1006
      %v1008 = vrot.slane %v543, %v1007
      %v1014 = vunpack.c.l.b16 %v539
      %v1015 = vunpack.c.l.b16 %v540
      %v1016 = vunpack.c.l.b16 %v541
      %v1017 = vunpack.c.l.b16 %v542
      %v1018 = vpack.c.b16 %v1015, %v1014
      %v1019 = vpack.c.b16 %v1017, %v1016
      %v1023 = vsel %vm429, %v1003, 0
      %1025 = vmatprep.subr.bf16.mxu0 0
      %1026 = vmatpush1.bf16.msra.mxu0 %v1018
      %1027 = vmatprep.subr.bf16.mxu0 0
      %1028 = vmatpush1.bf16.msra.mxu0 %v1019
      %1029 = vmatprep.subr.bf16.mxu0 0
      %1030 = vmatpush1.bf16.msra.mxu0 0
      %1031 = vmatprep.subr.bf16.mxu0 0
      %1032 = vmatpush1.bf16.msra.mxu0 0
      %1033 = vmatprep.subr.bf16.mxu0 0
      %1034 = vmatpush1.bf16.msra.mxu0 0
      %1035 = vmatprep.subr.bf16.mxu0 0
      %1036 = vmatpush1.bf16.msra.mxu0 0
      %1037 = vmatprep.subr.bf16.mxu0 0
      %1038 = vmatpush1.bf16.msra.mxu0 0
      %1039 = vmatprep.subr.bf16.mxu0 0
      %1040 = vmatpush1.bf16.msra.mxu0 0
      %1041 = vmatprep.subr.bf16.mxu0 0
      %1042 = vmatpush1.bf16.msra.mxu0 0
      %1043 = vmatprep.subr.bf16.mxu0 0
      %1044 = vmatpush1.bf16.msra.mxu0 0
      %1045 = vmatprep.subr.bf16.mxu0 0
      %1046 = vmatpush1.bf16.msra.mxu0 0
      %1047 = vmatprep.subr.bf16.mxu0 0
      %1048 = vmatpush1.bf16.msra.mxu0 0
      %1049 = vmatprep.subr.bf16.mxu0 0
      %1050 = vmatpush1.bf16.msra.mxu0 0
      %1051 = vmatprep.subr.bf16.mxu0 0
      %1052 = vmatpush1.bf16.msra.mxu0 0
      %1053 = vmatprep.subr.bf16.mxu0 0
      %1054 = vmatpush1.bf16.msra.mxu0 0
      %1055 = vmatprep.subr.bf16.mxu0 0
      %1056 = vmatpush1.bf16.msra.mxu0 0
      %1057 = vmatprep.mubr.bf16.mxu0 0
      %1058 = vmatmul.mubr.bf16.gmra.mrb[0].mxu0 %v1023
      %v1059 = vpop.f32.mrb[0].mxu0
      %v1060 = vadd.f32 %v1008, %v1059
      %v1061 = vpop.f32.mrb[0].mxu0
      %v1062 = vpop.f32.mrb[0].mxu0
      %v1063 = vpop.f32.mrb[0].mxu0
      %1064 = vdwg.mxu0
      %v1065 = vunpack.c.l.bf16 %v404
      %v1066 = vadd.f32 %v1065, %v1060
      %v1067 = vld [vmem:[%s8] sm:$0x1]
      %v1068 = vld [vmem:[%s9] sm:$0x1]
      %v1069 = vsel %vm429, %v1066, 0.0
      %1070 = vadd.xlane.f32.xlu0 %v1069
      %v1071 = vpop.xlane.xlu0 %1070
      %v1072 = vrcp.pop 32.0
      %v1073 = vmul.f32 %v1071, %v1072
      %v1074 = vsub.f32 %v1066, %v1073
      %v1075 = vmul.f32 %v1074, %v1074
      %v1076 = vsel %vm429, %v1075, 0.0
      %1077 = vadd.xlane.f32.xlu0 %v1076
      %v1078 = vpop.xlane.xlu0 %1077
      %v1079 = vmul.f32 %v1078, %v1072
      %v1080 = vadd.f32 %v1079, 1e-05
      %v1081 = vrsqrt.pop %v1080
      %v1082 = vmul.f32 %v1074, %v1081
      %v1084 = vlaneseq
      %v1085 = vshrl.u32 %v1084, 7
      %v1086 = vsub.s32 0, %v1085
      %v1087 = vrot.slane %v1067, %v1086
      %v1089 = vmul.f32 %v1082, %v1087
      %v1091 = vlaneseq
      %v1092 = vshrl.u32 %v1091, 7
      %v1093 = vsub.s32 0, %v1092
      %v1094 = vrot.slane %v1068, %v1093
      %v1096 = vadd.f32 %v1089, %v1094
      %v1097 = vpack.c.bf16 %v1096, %v1096
      %vm1098 = vcmask 257024
      %1099 = vst.msk [vmem:[%s402] sm:$0xf] %vm1098, %v1097
      %p1100 = scmp.lt.s32.totalorder %s25, 1
      %s1101 = scalar_select %p1100, %s25, 1
      %p1102 = scmp.lt.s32.totalorder %s26, 0
      %s1103 = scalar_select %p1102, %s26, 0
      %s1104 = sadd.s32 %s1103, %s1101
      %s1105 = smul.addr %s1104, 4
      %s1106 = scalar_lea.vmem %s10, %s1105
      // Predicated region
      $region61: #{decoder_forward.8} parent=59 // pred_check
        %p1107 = pneg %p275
      $region62: #{decoder_forward.8} parent=59 // pred_check_branch
        %1109 = sbr.rel (%p1107) target = $region64
      $region63: #{decoder_forward.8} parent=59 // pred_region
        _
      $region64: #{decoder_forward.8} parent=59 // pred_fallthru
        _
    $region60: #{decoder_forward.8} parent=5 // pred_fallthru
      _
    %p1110 = scmp.le.s32.totalorder 2, %s16
    // Predicated region
    $region65: #{decoder_forward.8} parent=5 // pred_check
      %p1111 = pneg %p1110
    $region66: #{decoder_forward.8} parent=5 // pred_check_branch
      %1113 = sbr.rel (%p1111) target = $region68
    $region67: #{decoder_forward.8} parent=5 // pred_region
      %s1114 = ssub.s32 %s16, 2
      // Predicated region
      $region69: #{decoder_forward.8} parent=67 // pred_check
        %p1115 = pneg %p281
      $region70: #{decoder_forward.8} parent=67 // pred_check_branch
        %1117 = sbr.rel (%p1115) target = $region72
      $region71: #{decoder_forward.8} parent=67 // pred_region
        %p1118 = scmp.lt.s32.totalorder %s27, 1
        %s1119 = scalar_select %p1118, %s27, 1
        %p1120 = scmp.lt.s32.totalorder %s28, 0
        %s1121 = scalar_select %p1120, %s28, 0
        %s1122 = sadd.s32 %s1121, %s1119
        %s1123 = smul.addr %s1122, 4
        %s1124 = scalar_lea.vmem %s10, %s1123
      $region72: #{decoder_forward.8} parent=67 // pred_fallthru
        _
    $region68: #{decoder_forward.8} parent=5 // pred_fallthru
      _
  $region6: #{decoder_forward.8} parent=0 // loop_footer
    %s20 = sadd.s32 1, %s16
  $region7: #{decoder_forward.8} parent=0 // loop_footer_branch
    %15 = sbr.rel target = $region3
  $region8: #{decoder_forward.8} parent=0 // loop_exit
    _

// kernel: decoder_forward.13
$region0: #{decoder_forward.13}
  #allocation0 [shape = 'u32[]', space=smem, size = 0x4, offset = 0x4, fixed_abs, tag = 'smem constant byte address 0x4 - core index']
  #allocation1 [shape = 'u32[144,128]{1,0:T(1,128)}', space=vmem, size = 0x12000, scoped, tag = 'internal scratch']
  %s0 = inlined_call_operand.vmem [shape: bf16[16,32], index: 0, kind: input, shape index: {}]
  %s1 = inlined_call_operand.vmem [shape: f32[1,32], index: 1, kind: input, shape index: {}]
  %s2 = inlined_call_operand.vmem [shape: f32[1,32], index: 2, kind: input, shape index: {}]
  %s3 = inlined_call_operand.vmem [shape: bf16[32,128], index: 3, kind: input, shape index: {}]
  %s4 = inlined_call_operand.vmem [shape: f32[1,128], index: 4, kind: input, shape index: {}]
  %s5 = inlined_call_operand.vmem [shape: f32[16,128], index: 5, kind: output, shape index: {}]
  %s6 = sld [smem:[#allocation0]]
  $region53: #{decoder_forward.13} parent=0
    _
  %s8 = ssub.s32 1, %s6
  %s9 = scalar_select 0, %s8, %s6
  loop: start=0, step=1, limit=4
  $region2: #{decoder_forward.13} parent=0 // loop_pre_header
    _
  $region3: #{decoder_forward.13} parent=0 // loop_header
    %s11 = sphi 0, %s15
    %p12 = scmp.ge.s32.totalorder %s11, 4
    %s21 = sphi 0, %s23
    %s24 = sphi 0, %s21
    %s25 = sphi 0, %s24
    %s41 = sphi 0, %s25
    %s45 = sphi 0, %s45
    %s47 = sphi 0, %s45
    %s48 = sphi 0, %s47
    %s62 = sphi 0, %s48
    %s66 = sphi 0, %s66
    %s68 = sphi 0, %s66
    %s69 = sphi 0, %s68
    %s83 = sphi 0, %s69
    %s87 = sphi 0, %s87
    %s89 = sphi 0, %s87
    %s90 = sphi 0, %s89
    %s104 = sphi 0, %s90
    %s108 = sphi 0, %s108
    %s110 = sphi 0, %s108
    %s111 = sphi 0, %s110
    %s125 = sphi 0, %s111
    %s131 = sphi 0, %s133
    %s134 = sphi 0, %s131
    %s135 = sphi 0, %s134
    %s151 = sphi 0, %s135
  $region4: #{decoder_forward.13} parent=0 // loop_header_branch
    %14 = sbr.rel (%p12) target = $region8
  $region5: #{decoder_forward.13} parent=0 // loop_body
    %s16 = ssub.s32 %s11, 1
    %s17 = ssub.s32 %s11, 2
    %s18 = sadd.s32 %s11, 1
    %s19 = ssub.s32 %s11, %s18
    %p20 = scmp.eq.s32.totalorder %s19, 0
    %s22 = sadd.s32 %s21, 1
    %s23 = scalar_select %p20, %s21, %s22
    %p26 = pneg %p20
    %p27 = scmp.eq.s32.totalorder %s11, 1
    %p28 = por %p26, %p27
    %p29 = scmp.ne.s32.totalorder %s21, %s24
    %p30 = scmp.eq.s32.totalorder %s11, 0
    %p31 = por %p29, %p30
    %p32 = scmp.ne.s32.totalorder %s21, %s24
    %p33 = scmp.eq.s32.totalorder %s16, 1
    %p34 = por %p32, %p33
    %p35 = scmp.ne.s32.totalorder %s24, %s25
    %p36 = scmp.eq.s32.totalorder %s16, 0
    %p37 = por %p35, %p36
    %p38 = scmp.ne.s32.totalorder %s24, %s25
    %p39 = scmp.eq.s32.totalorder %s17, 1
    %p40 = por %p38, %p39
    %p42 = scmp.ne.s32.totalorder %s25, %s41
    %p43 = scmp.eq.s32.totalorder %s17, 0
    %p44 = por %p42, %p43
    %s46 = sadd.s32 %s45, 1
    %p49 = scmp.eq.s32.totalorder %s11, 1
    %p50 = scmp.ne.s32.totalorder %s45, %s47
    %p51 = scmp.eq.s32.totalorder %s11, 0
    %p52 = por %p50, %p51
    %p53 = scmp.ne.s32.totalorder %s45, %s47
    %p54 = scmp.eq.s32.totalorder %s16, 1
    %p55 = por %p53, %p54
    %p56 = scmp.ne.s32.totalorder %s47, %s48
    %p57 = scmp.eq.s32.totalorder %s16, 0
    %p58 = por %p56, %p57
    %p59 = scmp.ne.s32.totalorder %s47, %s48
    %p60 = scmp.eq.s32.totalorder %s17, 1
    %p61 = por %p59, %p60
    %p63 = scmp.ne.s32.totalorder %s48, %s62
    %p64 = scmp.eq.s32.totalorder %s17, 0
    %p65 = por %p63, %p64
    %s67 = sadd.s32 %s66, 1
    %p70 = scmp.eq.s32.totalorder %s11, 1
    %p71 = scmp.ne.s32.totalorder %s66, %s68
    %p72 = scmp.eq.s32.totalorder %s11, 0
    %p73 = por %p71, %p72
    %p74 = scmp.ne.s32.totalorder %s66, %s68
    %p75 = scmp.eq.s32.totalorder %s16, 1
    %p76 = por %p74, %p75
    %p77 = scmp.ne.s32.totalorder %s68, %s69
    %p78 = scmp.eq.s32.totalorder %s16, 0
    %p79 = por %p77, %p78
    %p80 = scmp.ne.s32.totalorder %s68, %s69
    %p81 = scmp.eq.s32.totalorder %s17, 1
    %p82 = por %p80, %p81
    %p84 = scmp.ne.s32.totalorder %s69, %s83
    %p85 = scmp.eq.s32.totalorder %s17, 0
    %p86 = por %p84, %p85
    %s88 = sadd.s32 %s87, 1
    %p91 = scmp.eq.s32.totalorder %s11, 1
    %p92 = scmp.ne.s32.totalorder %s87, %s89
    %p93 = scmp.eq.s32.totalorder %s11, 0
    %p94 = por %p92, %p93
    %p95 = scmp.ne.s32.totalorder %s87, %s89
    %p96 = scmp.eq.s32.totalorder %s16, 1
    %p97 = por %p95, %p96
    %p98 = scmp.ne.s32.totalorder %s89, %s90
    %p99 = scmp.eq.s32.totalorder %s16, 0
    %p100 = por %p98, %p99
    %p101 = scmp.ne.s32.totalorder %s89, %s90
    %p102 = scmp.eq.s32.totalorder %s17, 1
    %p103 = por %p101, %p102
    %p105 = scmp.ne.s32.totalorder %s90, %s104
    %p106 = scmp.eq.s32.totalorder %s17, 0
    %p107 = por %p105, %p106
    %s109 = sadd.s32 %s108, 1
    %p112 = scmp.eq.s32.totalorder %s11, 1
    %p113 = scmp.ne.s32.totalorder %s108, %s110
    %p114 = scmp.eq.s32.totalorder %s11, 0
    %p115 = por %p113, %p114
    %p116 = scmp.ne.s32.totalorder %s108, %s110
    %p117 = scmp.eq.s32.totalorder %s16, 1
    %p118 = por %p116, %p117
    %p119 = scmp.ne.s32.totalorder %s110, %s111
    %p120 = scmp.eq.s32.totalorder %s16, 0
    %p121 = por %p119, %p120
    %p122 = scmp.ne.s32.totalorder %s110, %s111
    %p123 = scmp.eq.s32.totalorder %s17, 1
    %p124 = por %p122, %p123
    %p126 = scmp.ne.s32.totalorder %s111, %s125
    %p127 = scmp.eq.s32.totalorder %s17, 0
    %p128 = por %p126, %p127
    %s129 = ssub.s32 %s11, %s18
    %p130 = scmp.eq.s32.totalorder %s129, 0
    %s132 = sadd.s32 %s131, 1
    %s133 = scalar_select %p130, %s131, %s132
    %p136 = pneg %p130
    %p137 = scmp.eq.s32.totalorder %s11, 1
    %p138 = por %p136, %p137
    %p139 = scmp.ne.s32.totalorder %s131, %s134
    %p140 = scmp.eq.s32.totalorder %s11, 0
    %p141 = por %p139, %p140
    %p142 = scmp.ne.s32.totalorder %s131, %s134
    %p143 = scmp.eq.s32.totalorder %s16, 1
    %p144 = por %p142, %p143
    %p145 = scmp.ne.s32.totalorder %s134, %s135
    %p146 = scmp.eq.s32.totalorder %s16, 0
    %p147 = por %p145, %p146
    %p148 = scmp.ne.s32.totalorder %s134, %s135
    %p149 = scmp.eq.s32.totalorder %s17, 1
    %p150 = por %p148, %p149
    %p152 = scmp.ne.s32.totalorder %s135, %s151
    %p153 = scmp.eq.s32.totalorder %s17, 0
    %p154 = por %p152, %p153
    %p155 = scmp.le.s32.totalorder 1, %s11
    %p156 = scmp.lt.s32.totalorder %s11, 3
    %p157 = pnand %p155, %p156
    %p158 = pneg %p157
    // Predicated region
    $region9: #{decoder_forward.13} parent=5 // pred_check
      _
    $region10: #{decoder_forward.13} parent=5 // pred_check_branch
      %160 = sbr.rel (%p157) target = $region12
    $region11: #{decoder_forward.13} parent=5 // pred_region
      %s161 = ssub.s32 %s11, 1
      // Predicated region
      $region13: #{decoder_forward.13} parent=11 // pred_check
        %p162 = pneg %p58
      $region14: #{decoder_forward.13} parent=11 // pred_check_branch
        %164 = sbr.rel (%p162) target = $region16
      $region15: #{decoder_forward.13} parent=11 // pred_region
        _
      $region16: #{decoder_forward.13} parent=11 // pred_fallthru
        _
      // Predicated region
      $region17: #{decoder_forward.13} parent=11 // pred_check
        %p165 = pneg %p79
      $region18: #{decoder_forward.13} parent=11 // pred_check_branch
        %167 = sbr.rel (%p165) target = $region20
      $region19: #{decoder_forward.13} parent=11 // pred_region
        _
      $region20: #{decoder_forward.13} parent=11 // pred_fallthru
        _
      // Predicated region
      $region21: #{decoder_forward.13} parent=11 // pred_check
        %p168 = pneg %p100
      $region22: #{decoder_forward.13} parent=11 // pred_check_branch
        %170 = sbr.rel (%p168) target = $region24
      $region23: #{decoder_forward.13} parent=11 // pred_region
        _
      $region24: #{decoder_forward.13} parent=11 // pred_fallthru
        _
      // Predicated region
      $region25: #{decoder_forward.13} parent=11 // pred_check
        %p171 = pneg %p121
      $region26: #{decoder_forward.13} parent=11 // pred_check_branch
        %173 = sbr.rel (%p171) target = $region28
      $region27: #{decoder_forward.13} parent=11 // pred_region
        _
      $region28: #{decoder_forward.13} parent=11 // pred_fallthru
        _
    $region12: #{decoder_forward.13} parent=5 // pred_fallthru
      _
    %p174 = scmp.lt.s32.totalorder %s11, 2
    // Predicated region
    $region29: #{decoder_forward.13} parent=5 // pred_check
      %p175 = pneg %p174
    $region30: #{decoder_forward.13} parent=5 // pred_check_branch
      %177 = sbr.rel (%p175) target = $region32
    $region31: #{decoder_forward.13} parent=5 // pred_region
      // Predicated region
      $region33: #{decoder_forward.13} parent=31 // pred_check
        %p178 = pneg %p31
      $region34: #{decoder_forward.13} parent=31 // pred_check_branch
        %180 = sbr.rel (%p178) target = $region36
      $region35: #{decoder_forward.13} parent=31 // pred_region
        %p181 = scmp.lt.s32.totalorder %s11, 1
        %s182 = scalar_select %p181, %s11, 1
        %s183 = smul.addr %s182, 4
        %s184 = scalar_lea.vmem %s0, %s183
      $region36: #{decoder_forward.13} parent=31 // pred_fallthru
        _
    $region32: #{decoder_forward.13} parent=5 // pred_fallthru
      _
    %p185 = scmp.le.s32.totalorder 1, %s11
    %p186 = scmp.lt.s32.totalorder %s11, 3
    %p187 = pnand %p185, %p186
    %p188 = pneg %p187
    // Predicated region
    $region37: #{decoder_forward.13} parent=5 // pred_check
      _
    $region38: #{decoder_forward.13} parent=5 // pred_check_branch
      %190 = sbr.rel (%p187) target = $region40
    $region39: #{decoder_forward.13} parent=5 // pred_region
      %s191 = ssub.s32 %s11, 1
      %p192 = scmp.lt.s32.totalorder %s16, 1
      %s193 = scalar_select %p192, %s16, 1
      %s194 = smul.addr %s193, 4
      %s195 = scalar_lea.vmem %s0, %s194
      %p196 = pneg %p37
      %p197 = pneg %p34
      %p198 = pneg %p58
      %p199 = pneg %p55
      %p200 = pneg %p79
      %p201 = pneg %p76
      %p202 = pneg %p100
      %p203 = pneg %p97
      %p204 = pneg %p121
      %p205 = pneg %p118
      %p206 = pneg %p147
      %p207 = pneg %p144
      %p208 = scmp.lt.s32.totalorder %s16, 1
      %s209 = scalar_select %p208, %s16, 1
      %s210 = smul.addr %s209, 8
      %s211 = scalar_lea.vmem %s5, %s210
      %p212 = scmp.lt.s32.totalorder %s16, 1
      %s213 = scalar_select %p212, %s16, 1
      %s214 = smul.addr %s213, 4
      %s215 = scalar_lea.vmem %s0, %s214
      %p216 = scmp.lt.s32.totalorder %s16, 1
      %s217 = scalar_select %p216, %s16, 1
      %s218 = smul.addr %s217, 8
      %s219 = scalar_lea.vmem %s5, %s218
      %v221 = vld [vmem:[%s215] sm:$0xf]
      %v222 = vunpack.c.l.bf16 %v221
      %v223 = vld [vmem:[%s1] sm:$0x1]
      %v224 = vld [vmem:[%s2] sm:$0x1]
      %vm225 = vcmask 261120
      %v226 = vsel %vm225, %v222, 0.0
      %227 = vadd.xlane.f32.xlu0 %v226
      %v228 = vpop.xlane.xlu0 %227
      %v229 = vrcp.pop 32.0
      %v230 = vmul.f32 %v228, %v229
      %v231 = vsub.f32 %v222, %v230
      %v232 = vmul.f32 %v231, %v231
      %v233 = vsel %vm225, %v232, 0.0
      %234 = vadd.xlane.f32.xlu0 %v233
      %v235 = vpop.xlane.xlu0 %234
      %v236 = vmul.f32 %v235, %v229
      %v237 = vadd.f32 %v236, 1e-05
      %v238 = vrsqrt.pop %v237
      %v239 = vmul.f32 %v231, %v238
      %v241 = vlaneseq
      %v242 = vshrl.u32 %v241, 7
      %v243 = vsub.s32 0, %v242
      %v244 = vrot.slane %v223, %v243
      %v246 = vmul.f32 %v239, %v244
      %v248 = vlaneseq
      %v249 = vshrl.u32 %v248, 7
      %v250 = vsub.s32 0, %v249
      %v251 = vrot.slane %v224, %v250
      %v253 = vadd.f32 %v246, %v251
      %v254 = vld [vmem:[%s3] sm:$0xf]
      %v255 = vld [vmem:[%s3 + $0x4] sm:$0xf]
      %v256 = vld [vmem:[%s3 + $0x8] sm:$0xf]
      %v257 = vld [vmem:[%s3 + $0xc] sm:$0xf]
      %v258 = vpack.c.bf16 %v253, %v253
      %v259 = vld [vmem:[%s4] sm:$0x1]
      %v261 = vlaneseq
      %v262 = vshrl.u32 %v261, 7
      %v263 = vsub.s32 0, %v262
      %v264 = vrot.slane %v259, %v263
      %v270 = vunpack.c.l.b16 %v254
      %v271 = vunpack.c.l.b16 %v255
      %v272 = vunpack.c.l.b16 %v256
      %v273 = vunpack.c.l.b16 %v257
      %v274 = vpack.c.b16 %v271, %v270
      %v275 = vpack.c.b16 %v273, %v272
      %v279 = vsel %vm225, %v258, 0
      %281 = vmatprep.subr.bf16.mxu0 0
      %282 = vmatpush1.bf16.msra.mxu0 %v274
      %283 = vmatprep.subr.bf16.mxu0 0
      %284 = vmatpush1.bf16.msra.mxu0 %v275
      %285 = vmatprep.subr.bf16.mxu0 0
      %286 = vmatpush1.bf16.msra.mxu0 0
      %287 = vmatprep.subr.bf16.mxu0 0
      %288 = vmatpush1.bf16.msra.mxu0 0
      %289 = vmatprep.subr.bf16.mxu0 0
      %290 = vmatpush1.bf16.msra.mxu0 0
      %291 = vmatprep.subr.bf16.mxu0 0
      %292 = vmatpush1.bf16.msra.mxu0 0
      %293 = vmatprep.subr.bf16.mxu0 0
      %294 = vmatpush1.bf16.msra.mxu0 0
      %295 = vmatprep.subr.bf16.mxu0 0
      %296 = vmatpush1.bf16.msra.mxu0 0
      %297 = vmatprep.subr.bf16.mxu0 0
      %298 = vmatpush1.bf16.msra.mxu0 0
      %299 = vmatprep.subr.bf16.mxu0 0
      %300 = vmatpush1.bf16.msra.mxu0 0
      %301 = vmatprep.subr.bf16.mxu0 0
      %302 = vmatpush1.bf16.msra.mxu0 0
      %303 = vmatprep.subr.bf16.mxu0 0
      %304 = vmatpush1.bf16.msra.mxu0 0
      %305 = vmatprep.subr.bf16.mxu0 0
      %306 = vmatpush1.bf16.msra.mxu0 0
      %307 = vmatprep.subr.bf16.mxu0 0
      %308 = vmatpush1.bf16.msra.mxu0 0
      %309 = vmatprep.subr.bf16.mxu0 0
      %310 = vmatpush1.bf16.msra.mxu0 0
      %311 = vmatprep.subr.bf16.mxu0 0
      %312 = vmatpush1.bf16.msra.mxu0 0
      %313 = vmatprep.mubr.bf16.mxu0 0
      %314 = vmatmul.mubr.bf16.gmra.mrb[0].mxu0 %v279
      %v315 = vpop.f32.mrb[0].mxu0
      %v316 = vadd.f32 %v264, %v315
      %v317 = vpop.f32.mrb[0].mxu0
      %v318 = vpop.f32.mrb[0].mxu0
      %v319 = vpop.f32.mrb[0].mxu0
      %320 = vdwg.mxu0
      %321 = vst [vmem:[%s219] sm:$0xff] %v316
      %p322 = scmp.lt.s32.totalorder %s16, 1
      %s323 = scalar_select %p322, %s16, 1
      %s324 = smul.addr %s323, 8
      %s325 = scalar_lea.vmem %s5, %s324
      // Predicated region
      $region41: #{decoder_forward.13} parent=39 // pred_check
        %p326 = pneg %p144
      $region42: #{decoder_forward.13} parent=39 // pred_check_branch
        %328 = sbr.rel (%p326) target = $region44
      $region43: #{decoder_forward.13} parent=39 // pred_region
        _
      $region44: #{decoder_forward.13} parent=39 // pred_fallthru
        _
    $region40: #{decoder_forward.13} parent=5 // pred_fallthru
      _
    %p329 = scmp.le.s32.totalorder 2, %s11
    // Predicated region
    $region45: #{decoder_forward.13} parent=5 // pred_check
      %p330 = pneg %p329
    $region46: #{decoder_forward.13} parent=5 // pred_check_branch
      %332 = sbr.rel (%p330) target = $region48
    $region47: #{decoder_forward.13} parent=5 // pred_region
      %s333 = ssub.s32 %s11, 2
      // Predicated region
      $region49: #{decoder_forward.13} parent=47 // pred_check
        %p334 = pneg %p150
      $region50: #{decoder_forward.13} parent=47 // pred_check_branch
        %336 = sbr.rel (%p334) target = $region52
      $region51: #{decoder_forward.13} parent=47 // pred_region
        %p337 = scmp.lt.s32.totalorder %s17, 1
        %s338 = scalar_select %p337, %s17, 1
        %s339 = smul.addr %s338, 8
        %s340 = scalar_lea.vmem %s5, %s339
      $region52: #{decoder_forward.13} parent=47 // pred_fallthru
        _
    $region48: #{decoder_forward.13} parent=5 // pred_fallthru
      _
  $region6: #{decoder_forward.13} parent=0 // loop_footer
    %s15 = sadd.s32 1, %s11
  $region7: #{decoder_forward.13} parent=0 // loop_footer_branch
    %10 = sbr.rel target = $region3
  $region8: #{decoder_forward.13} parent=0 // loop_exit
    _

// kernel: decoder_forward.7
$region0: #{decoder_forward.7}
  #allocation0 [shape = 'u32[]', space=smem, size = 0x4, offset = 0x4, fixed_abs, tag = 'smem constant byte address 0x4 - core index']
  #allocation1 [shape = 'u32[144,128]{1,0:T(1,128)}', space=vmem, size = 0x12000, scoped, tag = 'internal scratch']
  %s0 = inlined_call_operand.vmem [shape: bf16[2,8,32], index: 0, kind: input, shape index: {}]
  %s1 = inlined_call_operand.vmem [shape: bf16[32,96], index: 1, kind: input, shape index: {}]
  %s2 = inlined_call_operand.vmem [shape: f32[1,96], index: 2, kind: input, shape index: {}]
  %s3 = inlined_call_operand.vmem [shape: bf16[32,32], index: 3, kind: input, shape index: {}]
  %s4 = inlined_call_operand.vmem [shape: f32[1,32], index: 4, kind: input, shape index: {}]
  %s5 = inlined_call_operand.vmem [shape: f32[1,32], index: 5, kind: input, shape index: {}]
  %s6 = inlined_call_operand.vmem [shape: f32[1,32], index: 6, kind: input, shape index: {}]
  %s7 = inlined_call_operand.vmem [shape: bf16[2,8,32], index: 7, kind: output, shape index: {}]
  %s8 = sld [smem:[#allocation0]]
  $region61: #{decoder_forward.7} parent=0
    _
  %s10 = ssub.s32 1, %s8
  %s11 = scalar_select 0, %s10, %s8
  loop: start=0, step=1, limit=4
  $region2: #{decoder_forward.7} parent=0 // loop_pre_header
    _
  $region3: #{decoder_forward.7} parent=0 // loop_header
    %s13 = sphi 0, %s17
    %p14 = scmp.ge.s32.totalorder %s13, 4
    %s20 = sphi 0, %s32
    %s21 = sphi 0, %s28
    %s22 = sphi 0, %s20
    %s23 = sphi 0, %s21
    %s24 = sphi 0, %s22
    %s25 = sphi 0, %s23
    %s35 = sphi 0, %s37
    %s38 = sphi 0, %s35
    %s39 = sphi 0, %s38
    %s55 = sphi 0, %s39
    %s59 = sphi 0, %s59
    %s61 = sphi 0, %s59
    %s62 = sphi 0, %s61
    %s76 = sphi 0, %s62
    %s80 = sphi 0, %s80
    %s82 = sphi 0, %s80
    %s83 = sphi 0, %s82
    %s97 = sphi 0, %s83
    %s101 = sphi 0, %s101
    %s103 = sphi 0, %s101
    %s104 = sphi 0, %s103
    %s118 = sphi 0, %s104
    %s122 = sphi 0, %s122
    %s124 = sphi 0, %s122
    %s125 = sphi 0, %s124
    %s139 = sphi 0, %s125
    %s143 = sphi 0, %s143
    %s145 = sphi 0, %s143
    %s146 = sphi 0, %s145
    %s160 = sphi 0, %s146
    %s164 = sphi 0, %s164
    %s166 = sphi 0, %s164
    %s167 = sphi 0, %s166
    %s181 = sphi 0, %s167
    %s189 = sphi 0, %s191
    %s192 = sphi 0, %s189
    %s193 = sphi 0, %s192
    %s209 = sphi 0, %s193
  $region4: #{decoder_forward.7} parent=0 // loop_header_branch
    %16 = sbr.rel (%p14) target = $region8
  $region5: #{decoder_forward.7} parent=0 // loop_body
    %s18 = ssub.s32 %s13, 1
    %s19 = ssub.s32 %s13, 2
    %s26 = sadd.s32 1, %s21
    %p27 = scmp.ge.s32.totalorder %s26, 1
    %s28 = scalar_select %p27, 0, %s26
    %s29 = sadd.s32 1, %s20
    %s30 = scalar_select %p27, %s29, %s20
    %p31 = scmp.ge.s32.totalorder %s30, 2
    %s32 = scalar_select %p31, 0, %s30
    %s33 = ssub.s32 %s20, %s32
    %p34 = scmp.eq.s32.totalorder %s33, 0
    %s36 = sadd.s32 %s35, 1
    %s37 = scalar_select %p34, %s35, %s36
    %p40 = pneg %p34
    %p41 = scmp.eq.s32.totalorder %s13, 1
    %p42 = por %p40, %p41
    %p43 = scmp.ne.s32.totalorder %s35, %s38
    %p44 = scmp.eq.s32.totalorder %s13, 0
    %p45 = por %p43, %p44
    %p46 = scmp.ne.s32.totalorder %s35, %s38
    %p47 = scmp.eq.s32.totalorder %s18, 1
    %p48 = por %p46, %p47
    %p49 = scmp.ne.s32.totalorder %s38, %s39
    %p50 = scmp.eq.s32.totalorder %s18, 0
    %p51 = por %p49, %p50
    %p52 = scmp.ne.s32.totalorder %s38, %s39
    %p53 = scmp.eq.s32.totalorder %s19, 1
    %p54 = por %p52, %p53
    %p56 = scmp.ne.s32.totalorder %s39, %s55
    %p57 = scmp.eq.s32.totalorder %s19, 0
    %p58 = por %p56, %p57
    %s60 = sadd.s32 %s59, 1
    %p63 = scmp.eq.s32.totalorder %s13, 1
    %p64 = scmp.ne.s32.totalorder %s59, %s61
    %p65 = scmp.eq.s32.totalorder %s13, 0
    %p66 = por %p64, %p65
    %p67 = scmp.ne.s32.totalorder %s59, %s61
    %p68 = scmp.eq.s32.totalorder %s18, 1
    %p69 = por %p67, %p68
    %p70 = scmp.ne.s32.totalorder %s61, %s62
    %p71 = scmp.eq.s32.totalorder %s18, 0
    %p72 = por %p70, %p71
    %p73 = scmp.ne.s32.totalorder %s61, %s62
    %p74 = scmp.eq.s32.totalorder %s19, 1
    %p75 = por %p73, %p74
    %p77 = scmp.ne.s32.totalorder %s62, %s76
    %p78 = scmp.eq.s32.totalorder %s19, 0
    %p79 = por %p77, %p78
    %s81 = sadd.s32 %s80, 1
    %p84 = scmp.eq.s32.totalorder %s13, 1
    %p85 = scmp.ne.s32.totalorder %s80, %s82
    %p86 = scmp.eq.s32.totalorder %s13, 0
    %p87 = por %p85, %p86
    %p88 = scmp.ne.s32.totalorder %s80, %s82
    %p89 = scmp.eq.s32.totalorder %s18, 1
    %p90 = por %p88, %p89
    %p91 = scmp.ne.s32.totalorder %s82, %s83
    %p92 = scmp.eq.s32.totalorder %s18, 0
    %p93 = por %p91, %p92
    %p94 = scmp.ne.s32.totalorder %s82, %s83
    %p95 = scmp.eq.s32.totalorder %s19, 1
    %p96 = por %p94, %p95
    %p98 = scmp.ne.s32.totalorder %s83, %s97
    %p99 = scmp.eq.s32.totalorder %s19, 0
    %p100 = por %p98, %p99
    %s102 = sadd.s32 %s101, 1
    %p105 = scmp.eq.s32.totalorder %s13, 1
    %p106 = scmp.ne.s32.totalorder %s101, %s103
    %p107 = scmp.eq.s32.totalorder %s13, 0
    %p108 = por %p106, %p107
    %p109 = scmp.ne.s32.totalorder %s101, %s103
    %p110 = scmp.eq.s32.totalorder %s18, 1
    %p111 = por %p109, %p110
    %p112 = scmp.ne.s32.totalorder %s103, %s104
    %p113 = scmp.eq.s32.totalorder %s18, 0
    %p114 = por %p112, %p113
    %p115 = scmp.ne.s32.totalorder %s103, %s104
    %p116 = scmp.eq.s32.totalorder %s19, 1
    %p117 = por %p115, %p116
    %p119 = scmp.ne.s32.totalorder %s104, %s118
    %p120 = scmp.eq.s32.totalorder %s19, 0
    %p121 = por %p119, %p120
    %s123 = sadd.s32 %s122, 1
    %p126 = scmp.eq.s32.totalorder %s13, 1
    %p127 = scmp.ne.s32.totalorder %s122, %s124
    %p128 = scmp.eq.s32.totalorder %s13, 0
    %p129 = por %p127, %p128
    %p130 = scmp.ne.s32.totalorder %s122, %s124
    %p131 = scmp.eq.s32.totalorder %s18, 1
    %p132 = por %p130, %p131
    %p133 = scmp.ne.s32.totalorder %s124, %s125
    %p134 = scmp.eq.s32.totalorder %s18, 0
    %p135 = por %p133, %p134
    %p136 = scmp.ne.s32.totalorder %s124, %s125
    %p137 = scmp.eq.s32.totalorder %s19, 1
    %p138 = por %p136, %p137
    %p140 = scmp.ne.s32.totalorder %s125, %s139
    %p141 = scmp.eq.s32.totalorder %s19, 0
    %p142 = por %p140, %p141
    %s144 = sadd.s32 %s143, 1
    %p147 = scmp.eq.s32.totalorder %s13, 1
    %p148 = scmp.ne.s32.totalorder %s143, %s145
    %p149 = scmp.eq.s32.totalorder %s13, 0
    %p150 = por %p148, %p149
    %p151 = scmp.ne.s32.totalorder %s143, %s145
    %p152 = scmp.eq.s32.totalorder %s18, 1
    %p153 = por %p151, %p152
    %p154 = scmp.ne.s32.totalorder %s145, %s146
    %p155 = scmp.eq.s32.totalorder %s18, 0
    %p156 = por %p154, %p155
    %p157 = scmp.ne.s32.totalorder %s145, %s146
    %p158 = scmp.eq.s32.totalorder %s19, 1
    %p159 = por %p157, %p158
    %p161 = scmp.ne.s32.totalorder %s146, %s160
    %p162 = scmp.eq.s32.totalorder %s19, 0
    %p163 = por %p161, %p162
    %s165 = sadd.s32 %s164, 1
    %p168 = scmp.eq.s32.totalorder %s13, 1
    %p169 = scmp.ne.s32.totalorder %s164, %s166
    %p170 = scmp.eq.s32.totalorder %s13, 0
    %p171 = por %p169, %p170
    %p172 = scmp.ne.s32.totalorder %s164, %s166
    %p173 = scmp.eq.s32.totalorder %s18, 1
    %p174 = por %p172, %p173
    %p175 = scmp.ne.s32.totalorder %s166, %s167
    %p176 = scmp.eq.s32.totalorder %s18, 0
    %p177 = por %p175, %p176
    %p178 = scmp.ne.s32.totalorder %s166, %s167
    %p179 = scmp.eq.s32.totalorder %s19, 1
    %p180 = por %p178, %p179
    %p182 = scmp.ne.s32.totalorder %s167, %s181
    %p183 = scmp.eq.s32.totalorder %s19, 0
    %p184 = por %p182, %p183
    %s185 = ssub.s32 %s20, %s32
    %s186 = ssub.s32 %s21, %s28
    %s187 = sor.u32 %s185, %s186
    %p188 = scmp.eq.s32.totalorder %s187, 0
    %s190 = sadd.s32 %s189, 1
    %s191 = scalar_select %p188, %s189, %s190
    %p194 = pneg %p188
    %p195 = scmp.eq.s32.totalorder %s13, 1
    %p196 = por %p194, %p195
    %p197 = scmp.ne.s32.totalorder %s189, %s192
    %p198 = scmp.eq.s32.totalorder %s13, 0
    %p199 = por %p197, %p198
    %p200 = scmp.ne.s32.totalorder %s189, %s192
    %p201 = scmp.eq.s32.totalorder %s18, 1
    %p202 = por %p200, %p201
    %p203 = scmp.ne.s32.totalorder %s192, %s193
    %p204 = scmp.eq.s32.totalorder %s18, 0
    %p205 = por %p203, %p204
    %p206 = scmp.ne.s32.totalorder %s192, %s193
    %p207 = scmp.eq.s32.totalorder %s19, 1
    %p208 = por %p206, %p207
    %p210 = scmp.ne.s32.totalorder %s193, %s209
    %p211 = scmp.eq.s32.totalorder %s19, 0
    %p212 = por %p210, %p211
    %p213 = scmp.le.s32.totalorder 1, %s13
    %p214 = scmp.lt.s32.totalorder %s13, 3
    %p215 = pnand %p213, %p214
    %p216 = pneg %p215
    // Predicated region
    $region9: #{decoder_forward.7} parent=5 // pred_check
      _
    $region10: #{decoder_forward.7} parent=5 // pred_check_branch
      %218 = sbr.rel (%p215) target = $region12
    $region11: #{decoder_forward.7} parent=5 // pred_region
      %s219 = ssub.s32 %s13, 1
      // Predicated region
      $region13: #{decoder_forward.7} parent=11 // pred_check
        %p220 = pneg %p72
      $region14: #{decoder_forward.7} parent=11 // pred_check_branch
        %222 = sbr.rel (%p220) target = $region16
      $region15: #{decoder_forward.7} parent=11 // pred_region
        _
      $region16: #{decoder_forward.7} parent=11 // pred_fallthru
        _
      // Predicated region
      $region17: #{decoder_forward.7} parent=11 // pred_check
        %p223 = pneg %p93
      $region18: #{decoder_forward.7} parent=11 // pred_check_branch
        %225 = sbr.rel (%p223) target = $region20
      $region19: #{decoder_forward.7} parent=11 // pred_region
        _
      $region20: #{decoder_forward.7} parent=11 // pred_fallthru
        _
      // Predicated region
      $region21: #{decoder_forward.7} parent=11 // pred_check
        %p226 = pneg %p114
      $region22: #{decoder_forward.7} parent=11 // pred_check_branch
        %228 = sbr.rel (%p226) target = $region24
      $region23: #{decoder_forward.7} parent=11 // pred_region
        _
      $region24: #{decoder_forward.7} parent=11 // pred_fallthru
        _
      // Predicated region
      $region25: #{decoder_forward.7} parent=11 // pred_check
        %p229 = pneg %p135
      $region26: #{decoder_forward.7} parent=11 // pred_check_branch
        %231 = sbr.rel (%p229) target = $region28
      $region27: #{decoder_forward.7} parent=11 // pred_region
        _
      $region28: #{decoder_forward.7} parent=11 // pred_fallthru
        _
      // Predicated region
      $region29: #{decoder_forward.7} parent=11 // pred_check
        %p232 = pneg %p156
      $region30: #{decoder_forward.7} parent=11 // pred_check_branch
        %234 = sbr.rel (%p232) target = $region32
      $region31: #{decoder_forward.7} parent=11 // pred_region
        _
      $region32: #{decoder_forward.7} parent=11 // pred_fallthru
        _
      // Predicated region
      $region33: #{decoder_forward.7} parent=11 // pred_check
        %p235 = pneg %p177
      $region34: #{decoder_forward.7} parent=11 // pred_check_branch
        %237 = sbr.rel (%p235) target = $region36
      $region35: #{decoder_forward.7} parent=11 // pred_region
        _
      $region36: #{decoder_forward.7} parent=11 // pred_fallthru
        _
    $region12: #{decoder_forward.7} parent=5 // pred_fallthru
      _
    %p238 = scmp.lt.s32.totalorder %s13, 2
    // Predicated region
    $region37: #{decoder_forward.7} parent=5 // pred_check
      %p239 = pneg %p238
    $region38: #{decoder_forward.7} parent=5 // pred_check_branch
      %241 = sbr.rel (%p239) target = $region40
    $region39: #{decoder_forward.7} parent=5 // pred_region
      // Predicated region
      $region41: #{decoder_forward.7} parent=39 // pred_check
        %p242 = pneg %p45
      $region42: #{decoder_forward.7} parent=39 // pred_check_branch
        %244 = sbr.rel (%p242) target = $region44
      $region43: #{decoder_forward.7} parent=39 // pred_region
        %p245 = scmp.lt.s32.totalorder %s20, 1
        %s246 = scalar_select %p245, %s20, 1
        %s247 = smul.addr %s246, 4
        %s248 = scalar_lea.vmem %s0, %s247
      $region44: #{decoder_forward.7} parent=39 // pred_fallthru
        _
    $region40: #{decoder_forward.7} parent=5 // pred_fallthru
      _
    %p249 = scmp.le.s32.totalorder 1, %s13
    %p250 = scmp.lt.s32.totalorder %s13, 3
    %p251 = pnand %p249, %p250
    %p252 = pneg %p251
    // Predicated region
    $region45: #{decoder_forward.7} parent=5 // pred_check
      _
    $region46: #{decoder_forward.7} parent=5 // pred_check_branch
      %254 = sbr.rel (%p251) target = $region48
    $region47: #{decoder_forward.7} parent=5 // pred_region
      %s255 = ssub.s32 %s13, 1
      %p256 = scmp.lt.s32.totalorder %s22, 1
      %s257 = scalar_select %p256, %s22, 1
      %s258 = smul.addr %s257, 4
      %s259 = scalar_lea.vmem %s0, %s258
      %p260 = pneg %p51
      %p261 = pneg %p48
      %p262 = pneg %p72
      %p263 = pneg %p69
      %p264 = pneg %p93
      %p265 = pneg %p90
      %p266 = pneg %p114
      %p267 = pneg %p111
      %p268 = pneg %p135
      %p269 = pneg %p132
      %p270 = pneg %p156
      %p271 = pneg %p153
      %p272 = pneg %p177
      %p273 = pneg %p174
      %p274 = pneg %p205
      %p275 = pneg %p202
      %p276 = scmp.lt.s32.totalorder %s22, 1
      %s277 = scalar_select %p276, %s22, 1
      %p278 = scmp.lt.s32.totalorder %s23, 0
      %s279 = scalar_select %p278, %s23, 0
      %s280 = sadd.s32 %s279, %s277
      %s281 = smul.addr %s280, 4
      %s282 = scalar_lea.vmem %s7, %s281
      %p283 = scmp.lt.s32.totalorder %s22, 1
      %s284 = scalar_select %p283, %s22, 1
      %s285 = smul.addr %s284, 4
      %s286 = scalar_lea.vmem %s0, %s285
      %p287 = scmp.lt.s32.totalorder %s22, 1
      %s288 = scalar_select %p287, %s22, 1
      %p289 = scmp.lt.s32.totalorder %s23, 0
      %s290 = scalar_select %p289, %s23, 0
      %s291 = sadd.s32 %s290, %s288
      %s292 = smul.addr %s291, 4
      %s293 = scalar_lea.vmem %s7, %s292
      %s295 = smul.u32 %s23, 8
      %v296 = vld [vmem:[%s286] sm:$0xf]
      %v297 = vld [vmem:[%s1] sm:$0xf]
      %v298 = vld [vmem:[%s1 + $0x4] sm:$0xf]
      %v299 = vld [vmem:[%s1 + $0x8] sm:$0xf]
      %v300 = vld [vmem:[%s1 + $0xc] sm:$0xf]
      %v301 = vld [vmem:[%s2] sm:$0x1]
      %v303 = vlaneseq
      %v304 = vshrl.u32 %v303, 7
      %v305 = vsub.s32 0, %v304
      %v306 = vrot.slane %v301, %v305
      %v312 = vunpack.c.l.b16 %v297
      %v313 = vunpack.c.l.b16 %v298
      %v314 = vunpack.c.l.b16 %v299
      %v315 = vunpack.c.l.b16 %v300
      %v316 = vpack.c.b16 %v313, %v312
      %v317 = vpack.c.b16 %v315, %v314
      %vm320 = vcmask 261120
      %v322 = vsel %vm320, %v296, 0
      %324 = vmatprep.subr.bf16.mxu0 0
      %325 = vmatpush1.bf16.msra.mxu0 %v316
      %326 = vmatprep.subr.bf16.mxu0 0
      %327 = vmatpush1.bf16.msra.mxu0 %v317
      %328 = vmatprep.subr.bf16.mxu0 0
      %329 = vmatpush1.bf16.msra.mxu0 0
      %330 = vmatprep.subr.bf16.mxu0 0
      %331 = vmatpush1.bf16.msra.mxu0 0
      %332 = vmatprep.subr.bf16.mxu0 0
      %333 = vmatpush1.bf16.msra.mxu0 0
      %334 = vmatprep.subr.bf16.mxu0 0
      %335 = vmatpush1.bf16.msra.mxu0 0
      %336 = vmatprep.subr.bf16.mxu0 0
      %337 = vmatpush1.bf16.msra.mxu0 0
      %338 = vmatprep.subr.bf16.mxu0 0
      %339 = vmatpush1.bf16.msra.mxu0 0
      %340 = vmatprep.subr.bf16.mxu0 0
      %341 = vmatpush1.bf16.msra.mxu0 0
      %342 = vmatprep.subr.bf16.mxu0 0
      %343 = vmatpush1.bf16.msra.mxu0 0
      %344 = vmatprep.subr.bf16.mxu0 0
      %345 = vmatpush1.bf16.msra.mxu0 0
      %346 = vmatprep.subr.bf16.mxu0 0
      %347 = vmatpush1.bf16.msra.mxu0 0
      %348 = vmatprep.subr.bf16.mxu0 0
      %349 = vmatpush1.bf16.msra.mxu0 0
      %350 = vmatprep.subr.bf16.mxu0 0
      %351 = vmatpush1.bf16.msra.mxu0 0
      %352 = vmatprep.subr.bf16.mxu0 0
      %353 = vmatpush1.bf16.msra.mxu0 0
      %354 = vmatprep.subr.bf16.mxu0 0
      %355 = vmatpush1.bf16.msra.mxu0 0
      %356 = vmatprep.mubr.bf16.mxu0 0
      %357 = vmatmul.mubr.bf16.gmra.mrb[0].mxu0 %v322
      %v358 = vpop.f32.mrb[0].mxu0
      %v359 = vadd.f32 %v306, %v358
      %v360 = vpop.f32.mrb[0].mxu0
      %v361 = vpop.f32.mrb[0].mxu0
      %v362 = vpop.f32.mrb[0].mxu0
      %363 = vdwg.mxu0
      %v364 = vlaneseq
      %v365 = vshrl.u32 %v364, 7
      %v366 = vstv %s295
      %v367 = vadd.s32 %v366, %v365
      %v368 = vlaneseq
      %v369 = vand.u32 %v368, 127
      %vm370 = vcmp.le.s32.totalorder %v369, %v367
      %v371 = vld [vmem:[%s3] sm:$0xf]
      %v372 = vld [vmem:[%s3 + $0x4] sm:$0xf]
      %v373 = vld [vmem:[%s3 + $0x8] sm:$0xf]
      %v374 = vld [vmem:[%s3 + $0xc] sm:$0xf]
      %v375 = vld [vmem:[%s4] sm:$0x1]
      %v376 = vpack.c.bf16 %v359, %v359
      %378 = vrot.lane.b32.xlu0 %v376, 96
      %v379 = vpop.permute.xlu0 %378
      %vm380 = vcmask 64512
      %v382 = vsel %vm380, %v376, 0
      %v385 = vsel %vm380, %v379, 0
      %387 = vmatprep.subr.bf16.mxu0 0
      %388 = vmatpush1.bf16.xpose.msra.mxu0 %v385
      %389 = vmatprep.subr.bf16.mxu0 0
      %390 = vmatpush1.bf16.xpose.msra.mxu0 0
      %391 = vmatprep.subr.bf16.mxu0 0
      %392 = vmatpush1.bf16.xpose.msra.mxu0 0
      %393 = vmatprep.subr.bf16.mxu0 0
      %394 = vmatpush1.bf16.xpose.msra.mxu0 0
      %395 = vmatprep.subr.bf16.mxu0 0
      %396 = vmatpush1.bf16.xpose.msra.mxu0 0
      %397 = vmatprep.subr.bf16.mxu0 0
      %398 = vmatpush1.bf16.xpose.msra.mxu0 0
      %399 = vmatprep.subr.bf16.mxu0 0
      %400 = vmatpush1.bf16.xpose.msra.mxu0 0
      %401 = vmatprep.subr.bf16.mxu0 0
      %402 = vmatpush1.bf16.xpose.msra.mxu0 0
      %403 = vmatprep.subr.bf16.mxu0 0
      %404 = vmatpush1.bf16.xpose.msra.mxu0 0
      %405 = vmatprep.subr.bf16.mxu0 0
      %406 = vmatpush1.bf16.xpose.msra.mxu0 0
      %407 = vmatprep.subr.bf16.mxu0 0
      %408 = vmatpush1.bf16.xpose.msra.mxu0 0
      %409 = vmatprep.subr.bf16.mxu0 0
      %410 = vmatpush1.bf16.xpose.msra.mxu0 0
      %411 = vmatprep.subr.bf16.mxu0 0
      %412 = vmatpush1.bf16.xpose.msra.mxu0 0
      %413 = vmatprep.subr.bf16.mxu0 0
      %414 = vmatpush1.bf16.xpose.msra.mxu0 0
      %415 = vmatprep.subr.bf16.mxu0 0
      %416 = vmatpush1.bf16.xpose.msra.mxu0 0
      %417 = vmatprep.subr.bf16.mxu0 0
      %418 = vmatpush1.bf16.xpose.msra.mxu0 0
      %419 = vmatprep.mubr.bf16.mxu0 0
      %420 = vmatmul.mubr.bf16.gmra.mrb[0].mxu0 %v382
      %v421 = vpop.f32.mrb[0].mxu0
      %v422 = vadd.f32 0.0, %v421
      %v423 = vpop.f32.mrb[0].mxu0
      %v424 = vpop.f32.mrb[0].mxu0
      %v425 = vpop.f32.mrb[0].mxu0
      %426 = vdwg.mxu0
      %v427 = vsel %vm370, %v422, -1e+30
      %v428 = vsel %vm380, %v427, -inf
      %429 = vmax.xlane.f32.xlu0 %v428
      %v430 = vpop.xlane.xlu0 %429
      %v431 = vsub.f32 %v427, %v430
      %v432 = vmul.f32 %v431, 1.442695
      %v433 = vpow.pop %v432
      %v434 = vsel %vm380, %v433, 0.0
      %435 = vadd.xlane.f32.xlu0 %v434
      %v436 = vpop.xlane.xlu0 %435
      %v437 = vrcp.pop %v436
      %v438 = vmul.f32 %v433, %v437
      %v439 = vpack.c.bf16 %v438, %v438
      %440 = vrot.lane.b32.xlu0 %v376, 64
      %v441 = vpop.permute.xlu0 %440
      %v443 = vsel %vm380, %v439, 0
      %vm445 = vcmask 1043456
      %v447 = vsel %vm445, %v441, 0
      %449 = vmatprep.subr.bf16.mxu0 0
      %450 = vmatpush1.bf16.msra.mxu0 %v447
      %451 = vmatprep.subr.bf16.mxu0 0
      %452 = vmatpush1.bf16.msra.mxu0 0
      %453 = vmatprep.subr.bf16.mxu0 0
      %454 = vmatpush1.bf16.msra.mxu0 0
      %455 = vmatprep.subr.bf16.mxu0 0
      %456 = vmatpush1.bf16.msra.mxu0 0
      %457 = vmatprep.subr.bf16.mxu0 0
      %458 = vmatpush1.bf16.msra.mxu0 0
      %459 = vmatprep.subr.bf16.mxu0 0
      %460 = vmatpush1.bf16.msra.mxu0 0
      %461 = vmatprep.subr.bf16.mxu0 0
      %462 = vmatpush1.bf16.msra.mxu0 0
      %463 = vmatprep.subr.bf16.mxu0 0
      %464 = vmatpush1.bf16.msra.mxu0 0
      %465 = vmatprep.subr.bf16.mxu0 0
      %466 = vmatpush1.bf16.msra.mxu0 0
      %467 = vmatprep.subr.bf16.mxu0 0
      %468 = vmatpush1.bf16.msra.mxu0 0
      %469 = vmatprep.subr.bf16.mxu0 0
      %470 = vmatpush1.bf16.msra.mxu0 0
      %471 = vmatprep.subr.bf16.mxu0 0
      %472 = vmatpush1.bf16.msra.mxu0 0
      %473 = vmatprep.subr.bf16.mxu0 0
      %474 = vmatpush1.bf16.msra.mxu0 0
      %475 = vmatprep.subr.bf16.mxu0 0
      %476 = vmatpush1.bf16.msra.mxu0 0
      %477 = vmatprep.subr.bf16.mxu0 0
      %478 = vmatpush1.bf16.msra.mxu0 0
      %479 = vmatprep.subr.bf16.mxu0 0
      %480 = vmatpush1.bf16.msra.mxu0 0
      %481 = vmatprep.mubr.bf16.mxu0 0
      %482 = vmatmul.mubr.bf16.gmra.mrb[0].mxu0 %v443
      %v483 = vpop.f32.mrb[0].mxu0
      %v484 = vadd.f32 0.0, %v483
      %v485 = vpop.f32.mrb[0].mxu0
      %v486 = vpop.f32.mrb[0].mxu0
      %v487 = vpop.f32.mrb[0].mxu0
      %488 = vdwg.mxu0
      %489 = vrot.lane.b32.xlu0 %v376, 120
      %v490 = vpop.permute.xlu0 %489
      %491 = vrot.lane.b32.xlu0 %v376, 88
      %v492 = vpop.permute.xlu0 %491
      %v494 = vsel %vm380, %v490, 0
      %v497 = vsel %vm380, %v492, 0
      %499 = vmatprep.subr.bf16.mxu0 0
      %500 = vmatpush1.bf16.xpose.msra.mxu0 %v497
      %501 = vmatprep.subr.bf16.mxu0 0
      %502 = vmatpush1.bf16.xpose.msra.mxu0 0
      %503 = vmatprep.subr.bf16.mxu0 0
      %504 = vmatpush1.bf16.xpose.msra.mxu0 0
      %505 = vmatprep.subr.bf16.mxu0 0
      %506 = vmatpush1.bf16.xpose.msra.mxu0 0
      %507 = vmatprep.subr.bf16.mxu0 0
      %508 = vmatpush1.bf16.xpose.msra.mxu0 0
      %509 = vmatprep.subr.bf16.mxu0 0
      %510 = vmatpush1.bf16.xpose.msra.mxu0 0
      %511 = vmatprep.subr.bf16.mxu0 0
      %512 = vmatpush1.bf16.xpose.msra.mxu0 0
      %513 = vmatprep.subr.bf16.mxu0 0
      %514 = vmatpush1.bf16.xpose.msra.mxu0 0
      %515 = vmatprep.subr.bf16.mxu0 0
      %516 = vmatpush1.bf16.xpose.msra.mxu0 0
      %517 = vmatprep.subr.bf16.mxu0 0
      %518 = vmatpush1.bf16.xpose.msra.mxu0 0
      %519 = vmatprep.subr.bf16.mxu0 0
      %520 = vmatpush1.bf16.xpose.msra.mxu0 0
      %521 = vmatprep.subr.bf16.mxu0 0
      %522 = vmatpush1.bf16.xpose.msra.mxu0 0
      %523 = vmatprep.subr.bf16.mxu0 0
      %524 = vmatpush1.bf16.xpose.msra.mxu0 0
      %525 = vmatprep.subr.bf16.mxu0 0
      %526 = vmatpush1.bf16.xpose.msra.mxu0 0
      %527 = vmatprep.subr.bf16.mxu0 0
      %528 = vmatpush1.bf16.xpose.msra.mxu0 0
      %529 = vmatprep.subr.bf16.mxu0 0
      %530 = vmatpush1.bf16.xpose.msra.mxu0 0
      %531 = vmatprep.mubr.bf16.mxu0 0
      %532 = vmatmul.mubr.bf16.gmra.mrb[0].mxu0 %v494
      %v533 = vpop.f32.mrb[0].mxu0
      %v534 = vadd.f32 0.0, %v533
      %v535 = vpop.f32.mrb[0].mxu0
      %v536 = vpop.f32.mrb[0].mxu0
      %v537 = vpop.f32.mrb[0].mxu0
      %538 = vdwg.mxu0
      %v539 = vsel %vm370, %v534, -1e+30
      %v540 = vsel %vm380, %v539, -inf
      %541 = vmax.xlane.f32.xlu0 %v540
      %v542 = vpop.xlane.xlu0 %541
      %v543 = vsub.f32 %v539, %v542
      %v544 = vmul.f32 %v543, 1.442695
      %v545 = vpow.pop %v544
      %v546 = vsel %vm380, %v545, 0.0
      %547 = vadd.xlane.f32.xlu0 %v546
      %v548 = vpop.xlane.xlu0 %547
      %v549 = vrcp.pop %v548
      %v550 = vmul.f32 %v545, %v549
      %v551 = vpack.c.bf16 %v550, %v550
      %552 = vrot.lane.b32.xlu0 %v376, 56
      %v553 = vpop.permute.xlu0 %552
      %v555 = vsel %vm380, %v551, 0
      %v558 = vsel %vm445, %v553, 0
      %560 = vmatprep.subr.bf16.mxu0 0
      %561 = vmatpush1.bf16.msra.mxu0 %v558
      %562 = vmatprep.subr.bf16.mxu0 0
      %563 = vmatpush1.bf16.msra.mxu0 0
      %564 = vmatprep.subr.bf16.mxu0 0
      %565 = vmatpush1.bf16.msra.mxu0 0
      %566 = vmatprep.subr.bf16.mxu0 0
      %567 = vmatpush1.bf16.msra.mxu0 0
      %568 = vmatprep.subr.bf16.mxu0 0
      %569 = vmatpush1.bf16.msra.mxu0 0
      %570 = vmatprep.subr.bf16.mxu0 0
      %571 = vmatpush1.bf16.msra.mxu0 0
      %572 = vmatprep.subr.bf16.mxu0 0
      %573 = vmatpush1.bf16.msra.mxu0 0
      %574 = vmatprep.subr.bf16.mxu0 0
      %575 = vmatpush1.bf16.msra.mxu0 0
      %576 = vmatprep.subr.bf16.mxu0 0
      %577 = vmatpush1.bf16.msra.mxu0 0
      %578 = vmatprep.subr.bf16.mxu0 0
      %579 = vmatpush1.bf16.msra.mxu0 0
      %580 = vmatprep.subr.bf16.mxu0 0
      %581 = vmatpush1.bf16.msra.mxu0 0
      %582 = vmatprep.subr.bf16.mxu0 0
      %583 = vmatpush1.bf16.msra.mxu0 0
      %584 = vmatprep.subr.bf16.mxu0 0
      %585 = vmatpush1.bf16.msra.mxu0 0
      %586 = vmatprep.subr.bf16.mxu0 0
      %587 = vmatpush1.bf16.msra.mxu0 0
      %588 = vmatprep.subr.bf16.mxu0 0
      %589 = vmatpush1.bf16.msra.mxu0 0
      %590 = vmatprep.subr.bf16.mxu0 0
      %591 = vmatpush1.bf16.msra.mxu0 0
      %592 = vmatprep.mubr.bf16.mxu0 0
      %593 = vmatmul.mubr.bf16.gmra.mrb[0].mxu0 %v555
      %v594 = vpop.f32.mrb[0].mxu0
      %v595 = vadd.f32 0.0, %v594
      %v596 = vpop.f32.mrb[0].mxu0
      %v597 = vpop.f32.mrb[0].mxu0
      %v598 = vpop.f32.mrb[0].mxu0
      %599 = vdwg.mxu0
      %600 = vrot.lane.b32.xlu0 %v376, 112
      %v601 = vpop.permute.xlu0 %600
      %602 = vrot.lane.b32.xlu0 %v376, 80
      %v603 = vpop.permute.xlu0 %602
      %v605 = vsel %vm380, %v601, 0
      %v608 = vsel %vm380, %v603, 0
      %610 = vmatprep.subr.bf16.mxu0 0
      %611 = vmatpush1.bf16.xpose.msra.mxu0 %v608
      %612 = vmatprep.subr.bf16.mxu0 0
      %613 = vmatpush1.bf16.xpose.msra.mxu0 0
      %614 = vmatprep.subr.bf16.mxu0 0
      %615 = vmatpush1.bf16.xpose.msra.mxu0 0
      %616 = vmatprep.subr.bf16.mxu0 0
      %617 = vmatpush1.bf16.xpose.msra.mxu0 0
      %618 = vmatprep.subr.bf16.mxu0 0
      %619 = vmatpush1.bf16.xpose.msra.mxu0 0
      %620 = vmatprep.subr.bf16.mxu0 0
      %621 = vmatpush1.bf16.xpose.msra.mxu0 0
      %622 = vmatprep.subr.bf16.mxu0 0
      %623 = vmatpush1.bf16.xpose.msra.mxu0 0
      %624 = vmatprep.subr.bf16.mxu0 0
      %625 = vmatpush1.bf16.xpose.msra.mxu0 0
      %626 = vmatprep.subr.bf16.mxu0 0
      %627 = vmatpush1.bf16.xpose.msra.mxu0 0
      %628 = vmatprep.subr.bf16.mxu0 0
      %629 = vmatpush1.bf16.xpose.msra.mxu0 0
      %630 = vmatprep.subr.bf16.mxu0 0
      %631 = vmatpush1.bf16.xpose.msra.mxu0 0
      %632 = vmatprep.subr.bf16.mxu0 0
      %633 = vmatpush1.bf16.xpose.msra.mxu0 0
      %634 = vmatprep.subr.bf16.mxu0 0
      %635 = vmatpush1.bf16.xpose.msra.mxu0 0
      %636 = vmatprep.subr.bf16.mxu0 0
      %637 = vmatpush1.bf16.xpose.msra.mxu0 0
      %638 = vmatprep.subr.bf16.mxu0 0
      %639 = vmatpush1.bf16.xpose.msra.mxu0 0
      %640 = vmatprep.subr.bf16.mxu0 0
      %641 = vmatpush1.bf16.xpose.msra.mxu0 0
      %642 = vmatprep.mubr.bf16.mxu0 0
      %643 = vmatmul.mubr.bf16.gmra.mrb[0].mxu0 %v605
      %v644 = vpop.f32.mrb[0].mxu0
      %v645 = vadd.f32 0.0, %v644
      %v646 = vpop.f32.mrb[0].mxu0
      %v647 = vpop.f32.mrb[0].mxu0
      %v648 = vpop.f32.mrb[0].mxu0
      %649 = vdwg.mxu0
      %v650 = vsel %vm370, %v645, -1e+30
      %v651 = vsel %vm380, %v650, -inf
      %652 = vmax.xlane.f32.xlu0 %v651
      %v653 = vpop.xlane.xlu0 %652
      %v654 = vsub.f32 %v650, %v653
      %v655 = vmul.f32 %v654, 1.442695
      %v656 = vpow.pop %v655
      %v657 = vsel %vm380, %v656, 0.0
      %658 = vadd.xlane.f32.xlu0 %v657
      %v659 = vpop.xlane.xlu0 %658
      %v660 = vrcp.pop %v659
      %v661 = vmul.f32 %v656, %v660
      %v662 = vpack.c.bf16 %v661, %v661
      %663 = vrot.lane.b32.xlu0 %v376, 48
      %v664 = vpop.permute.xlu0 %663
      %v666 = vsel %vm380, %v662, 0
      %v669 = vsel %vm445, %v664, 0
      %671 = vmatprep.subr.bf16.mxu0 0
      %672 = vmatpush1.bf16.msra.mxu0 %v669
      %673 = vmatprep.subr.bf16.mxu0 0
      %674 = vmatpush1.bf16.msra.mxu0 0
      %675 = vmatprep.subr.bf16.mxu0 0
      %676 = vmatpush1.bf16.msra.mxu0 0
      %677 = vmatprep.subr.bf16.mxu0 0
      %678 = vmatpush1.bf16.msra.mxu0 0
      %679 = vmatprep.subr.bf16.mxu0 0
      %680 = vmatpush1.bf16.msra.mxu0 0
      %681 = vmatprep.subr.bf16.mxu0 0
      %682 = vmatpush1.bf16.msra.mxu0 0
      %683 = vmatprep.subr.bf16.mxu0 0
      %684 = vmatpush1.bf16.msra.mxu0 0
      %685 = vmatprep.subr.bf16.mxu0 0
      %686 = vmatpush1.bf16.msra.mxu0 0
      %687 = vmatprep.subr.bf16.mxu0 0
      %688 = vmatpush1.bf16.msra.mxu0 0
      %689 = vmatprep.subr.bf16.mxu0 0
      %690 = vmatpush1.bf16.msra.mxu0 0
      %691 = vmatprep.subr.bf16.mxu0 0
      %692 = vmatpush1.bf16.msra.mxu0 0
      %693 = vmatprep.subr.bf16.mxu0 0
      %694 = vmatpush1.bf16.msra.mxu0 0
      %695 = vmatprep.subr.bf16.mxu0 0
      %696 = vmatpush1.bf16.msra.mxu0 0
      %697 = vmatprep.subr.bf16.mxu0 0
      %698 = vmatpush1.bf16.msra.mxu0 0
      %699 = vmatprep.subr.bf16.mxu0 0
      %700 = vmatpush1.bf16.msra.mxu0 0
      %701 = vmatprep.subr.bf16.mxu0 0
      %702 = vmatpush1.bf16.msra.mxu0 0
      %703 = vmatprep.mubr.bf16.mxu0 0
      %704 = vmatmul.mubr.bf16.gmra.mrb[0].mxu0 %v666
      %v705 = vpop.f32.mrb[0].mxu0
      %v706 = vadd.f32 0.0, %v705
      %v707 = vpop.f32.mrb[0].mxu0
      %v708 = vpop.f32.mrb[0].mxu0
      %v709 = vpop.f32.mrb[0].mxu0
      %710 = vdwg.mxu0
      %711 = vrot.lane.b32.xlu0 %v376, 104
      %v712 = vpop.permute.xlu0 %711
      %713 = vrot.lane.b32.xlu0 %v376, 72
      %v714 = vpop.permute.xlu0 %713
      %v716 = vsel %vm380, %v712, 0
      %v719 = vsel %vm380, %v714, 0
      %721 = vmatprep.subr.bf16.mxu0 0
      %722 = vmatpush1.bf16.xpose.msra.mxu0 %v719
      %723 = vmatprep.subr.bf16.mxu0 0
      %724 = vmatpush1.bf16.xpose.msra.mxu0 0
      %725 = vmatprep.subr.bf16.mxu0 0
      %726 = vmatpush1.bf16.xpose.msra.mxu0 0
      %727 = vmatprep.subr.bf16.mxu0 0
      %728 = vmatpush1.bf16.xpose.msra.mxu0 0
      %729 = vmatprep.subr.bf16.mxu0 0
      %730 = vmatpush1.bf16.xpose.msra.mxu0 0
      %731 = vmatprep.subr.bf16.mxu0 0
      %732 = vmatpush1.bf16.xpose.msra.mxu0 0
      %733 = vmatprep.subr.bf16.mxu0 0
      %734 = vmatpush1.bf16.xpose.msra.mxu0 0
      %735 = vmatprep.subr.bf16.mxu0 0
      %736 = vmatpush1.bf16.xpose.msra.mxu0 0
      %737 = vmatprep.subr.bf16.mxu0 0
      %738 = vmatpush1.bf16.xpose.msra.mxu0 0
      %739 = vmatprep.subr.bf16.mxu0 0
      %740 = vmatpush1.bf16.xpose.msra.mxu0 0
      %741 = vmatprep.subr.bf16.mxu0 0
      %742 = vmatpush1.bf16.xpose.msra.mxu0 0
      %743 = vmatprep.subr.bf16.mxu0 0
      %744 = vmatpush1.bf16.xpose.msra.mxu0 0
      %745 = vmatprep.subr.bf16.mxu0 0
      %746 = vmatpush1.bf16.xpose.msra.mxu0 0
      %747 = vmatprep.subr.bf16.mxu0 0
      %748 = vmatpush1.bf16.xpose.msra.mxu0 0
      %749 = vmatprep.subr.bf16.mxu0 0
      %750 = vmatpush1.bf16.xpose.msra.mxu0 0
      %751 = vmatprep.subr.bf16.mxu0 0
      %752 = vmatpush1.bf16.xpose.msra.mxu0 0
      %753 = vmatprep.mubr.bf16.mxu0 0
      %754 = vmatmul.mubr.bf16.gmra.mrb[0].mxu0 %v716
      %v755 = vpop.f32.mrb[0].mxu0
      %v756 = vadd.f32 0.0, %v755
      %v757 = vpop.f32.mrb[0].mxu0
      %v758 = vpop.f32.mrb[0].mxu0
      %v759 = vpop.f32.mrb[0].mxu0
      %760 = vdwg.mxu0
      %v761 = vsel %vm370, %v756, -1e+30
      %v762 = vsel %vm380, %v761, -inf
      %763 = vmax.xlane.f32.xlu0 %v762
      %v764 = vpop.xlane.xlu0 %763
      %v765 = vsub.f32 %v761, %v764
      %v766 = vmul.f32 %v765, 1.442695
      %v767 = vpow.pop %v766
      %v768 = vsel %vm380, %v767, 0.0
      %769 = vadd.xlane.f32.xlu0 %v768
      %v770 = vpop.xlane.xlu0 %769
      %v771 = vrcp.pop %v770
      %v772 = vmul.f32 %v767, %v771
      %v773 = vpack.c.bf16 %v772, %v772
      %774 = vrot.lane.b32.xlu0 %v376, 40
      %v775 = vpop.permute.xlu0 %774
      %v777 = vsel %vm380, %v773, 0
      %v780 = vsel %vm445, %v775, 0
      %782 = vmatprep.subr.bf16.mxu0 0
      %783 = vmatpush1.bf16.msra.mxu0 %v780
      %784 = vmatprep.subr.bf16.mxu0 0
      %785 = vmatpush1.bf16.msra.mxu0 0
      %786 = vmatprep.subr.bf16.mxu0 0
      %787 = vmatpush1.bf16.msra.mxu0 0
      %788 = vmatprep.subr.bf16.mxu0 0
      %789 = vmatpush1.bf16.msra.mxu0 0
      %790 = vmatprep.subr.bf16.mxu0 0
      %791 = vmatpush1.bf16.msra.mxu0 0
      %792 = vmatprep.subr.bf16.mxu0 0
      %793 = vmatpush1.bf16.msra.mxu0 0
      %794 = vmatprep.subr.bf16.mxu0 0
      %795 = vmatpush1.bf16.msra.mxu0 0
      %796 = vmatprep.subr.bf16.mxu0 0
      %797 = vmatpush1.bf16.msra.mxu0 0
      %798 = vmatprep.subr.bf16.mxu0 0
      %799 = vmatpush1.bf16.msra.mxu0 0
      %800 = vmatprep.subr.bf16.mxu0 0
      %801 = vmatpush1.bf16.msra.mxu0 0
      %802 = vmatprep.subr.bf16.mxu0 0
      %803 = vmatpush1.bf16.msra.mxu0 0
      %804 = vmatprep.subr.bf16.mxu0 0
      %805 = vmatpush1.bf16.msra.mxu0 0
      %806 = vmatprep.subr.bf16.mxu0 0
      %807 = vmatpush1.bf16.msra.mxu0 0
      %808 = vmatprep.subr.bf16.mxu0 0
      %809 = vmatpush1.bf16.msra.mxu0 0
      %810 = vmatprep.subr.bf16.mxu0 0
      %811 = vmatpush1.bf16.msra.mxu0 0
      %812 = vmatprep.subr.bf16.mxu0 0
      %813 = vmatpush1.bf16.msra.mxu0 0
      %814 = vmatprep.mubr.bf16.mxu0 0
      %815 = vmatmul.mubr.bf16.gmra.mrb[0].mxu0 %v777
      %v816 = vpop.f32.mrb[0].mxu0
      %v817 = vadd.f32 0.0, %v816
      %v818 = vpop.f32.mrb[0].mxu0
      %v819 = vpop.f32.mrb[0].mxu0
      %v820 = vpop.f32.mrb[0].mxu0
      %821 = vdwg.mxu0
      %823 = vrot.lane.b32.xlu0 %v595, 8
      %v824 = vpop.permute.xlu0 %823
      %827 = vrot.lane.b32.xlu0 %v706, 16
      %v828 = vpop.permute.xlu0 %827
      %831 = vrot.lane.b32.xlu0 %v817, 24
      %v832 = vpop.permute.xlu0 %831
      %v834 = vsel %vm380, %v484, %v824
      %vm835 = vcmask 130048
      %v836 = vsel %vm835, %v834, %v828
      %vm837 = vcmask 195584
      %v838 = vsel %vm837, %v836, %v832
      %v839 = vpack.c.bf16 %v838, %v838
      %v841 = vlaneseq
      %v842 = vshrl.u32 %v841, 7
      %v843 = vsub.s32 0, %v842
      %v844 = vrot.slane %v375, %v843
      %v850 = vunpack.c.l.b16 %v371
      %v851 = vunpack.c.l.b16 %v372
      %v852 = vunpack.c.l.b16 %v373
      %v853 = vunpack.c.l.b16 %v374
      %v854 = vpack.c.b16 %v851, %v850
      %v855 = vpack.c.b16 %v853, %v852
      %v859 = vsel %vm320, %v839, 0
      %861 = vmatprep.subr.bf16.mxu0 0
      %862 = vmatpush1.bf16.msra.mxu0 %v854
      %863 = vmatprep.subr.bf16.mxu0 0
      %864 = vmatpush1.bf16.msra.mxu0 %v855
      %865 = vmatprep.subr.bf16.mxu0 0
      %866 = vmatpush1.bf16.msra.mxu0 0
      %867 = vmatprep.subr.bf16.mxu0 0
      %868 = vmatpush1.bf16.msra.mxu0 0
      %869 = vmatprep.subr.bf16.mxu0 0
      %870 = vmatpush1.bf16.msra.mxu0 0
      %871 = vmatprep.subr.bf16.mxu0 0
      %872 = vmatpush1.bf16.msra.mxu0 0
      %873 = vmatprep.subr.bf16.mxu0 0
      %874 = vmatpush1.bf16.msra.mxu0 0
      %875 = vmatprep.subr.bf16.mxu0 0
      %876 = vmatpush1.bf16.msra.mxu0 0
      %877 = vmatprep.subr.bf16.mxu0 0
      %878 = vmatpush1.bf16.msra.mxu0 0
      %879 = vmatprep.subr.bf16.mxu0 0
      %880 = vmatpush1.bf16.msra.mxu0 0
      %881 = vmatprep.subr.bf16.mxu0 0
      %882 = vmatpush1.bf16.msra.mxu0 0
      %883 = vmatprep.subr.bf16.mxu0 0
      %884 = vmatpush1.bf16.msra.mxu0 0
      %885 = vmatprep.subr.bf16.mxu0 0
      %886 = vmatpush1.bf16.msra.mxu0 0
      %887 = vmatprep.subr.bf16.mxu0 0
      %888 = vmatpush1.bf16.msra.mxu0 0
      %889 = vmatprep.subr.bf16.mxu0 0
      %890 = vmatpush1.bf16.msra.mxu0 0
      %891 = vmatprep.subr.bf16.mxu0 0
      %892 = vmatpush1.bf16.msra.mxu0 0
      %893 = vmatprep.mubr.bf16.mxu0 0
      %894 = vmatmul.mubr.bf16.gmra.mrb[0].mxu0 %v859
      %v895 = vpop.f32.mrb[0].mxu0
      %v896 = vadd.f32 %v844, %v895
      %v897 = vpop.f32.mrb[0].mxu0
      %v898 = vpop.f32.mrb[0].mxu0
      %v899 = vpop.f32.mrb[0].mxu0
      %900 = vdwg.mxu0
      %v901 = vunpack.c.l.bf16 %v296
      %v902 = vadd.f32 %v901, %v896
      %v903 = vld [vmem:[%s5] sm:$0x1]
      %v904 = vld [vmem:[%s6] sm:$0x1]
      %v905 = vsel %vm320, %v902, 0.0
      %906 = vadd.xlane.f32.xlu0 %v905
      %v907 = vpop.xlane.xlu0 %906
      %v908 = vrcp.pop 32.0
      %v909 = vmul.f32 %v907, %v908
      %v910 = vsub.f32 %v902, %v909
      %v911 = vmul.f32 %v910, %v910
      %v912 = vsel %vm320, %v911, 0.0
      %913 = vadd.xlane.f32.xlu0 %v912
      %v914 = vpop.xlane.xlu0 %913
      %v915 = vmul.f32 %v914, %v908
      %v916 = vadd.f32 %v915, 1e-05
      %v917 = vrsqrt.pop %v916
      %v918 = vmul.f32 %v910, %v917
      %v920 = vlaneseq
      %v921 = vshrl.u32 %v920, 7
      %v922 = vsub.s32 0, %v921
      %v923 = vrot.slane %v903, %v922
      %v925 = vmul.f32 %v918, %v923
      %v927 = vlaneseq
      %v928 = vshrl.u32 %v927, 7
      %v929 = vsub.s32 0, %v928
      %v930 = vrot.slane %v904, %v929
      %v932 = vadd.f32 %v925, %v930
      %v933 = vpack.c.bf16 %v932, %v932
      %vm934 = vcmask 257024
      %935 = vst.msk [vmem:[%s293] sm:$0xf] %vm934, %v933
      %p936 = scmp.lt.s32.totalorder %s22, 1
      %s937 = scalar_select %p936, %s22, 1
      %p938 = scmp.lt.s32.totalorder %s23, 0
      %s939 = scalar_select %p938, %s23, 0
      %s940 = sadd.s32 %s939, %s937
      %s941 = smul.addr %s940, 4
      %s942 = scalar_lea.vmem %s7, %s941
      // Predicated region
      $region49: #{decoder_forward.7} parent=47 // pred_check
        %p943 = pneg %p202
      $region50: #{decoder_forward.7} parent=47 // pred_check_branch
        %945 = sbr.rel (%p943) target = $region52
      $region51: #{decoder_forward.7} parent=47 // pred_region
        _
      $region52: #{decoder_forward.7} parent=47 // pred_fallthru
        _
    $region48: #{decoder_forward.7} parent=5 // pred_fallthru
      _
    %p946 = scmp.le.s32.totalorder 2, %s13
    // Predicated region
    $region53: #{decoder_forward.7} parent=5 // pred_check
      %p947 = pneg %p946
    $region54: #{decoder_forward.7} parent=5 // pred_check_branch
      %949 = sbr.rel (%p947) target = $region56
    $region55: #{decoder_forward.7} parent=5 // pred_region
      %s950 = ssub.s32 %s13, 2
      // Predicated region
      $region57: #{decoder_forward.7} parent=55 // pred_check
        %p951 = pneg %p208
      $region58: #{decoder_forward.7} parent=55 // pred_check_branch
        %953 = sbr.rel (%p951) target = $region60
      $region59: #{decoder_forward.7} parent=55 // pred_region
        %p954 = scmp.lt.s32.totalorder %s24, 1
        %s955 = scalar_select %p954, %s24, 1
        %p956 = scmp.lt.s32.totalorder %s25, 0
        %s957 = scalar_select %p956, %s25, 0
        %s958 = sadd.s32 %s957, %s955
        %s959 = smul.addr %s958, 4
        %s960 = scalar_lea.vmem %s7, %s959
      $region60: #{decoder_forward.7} parent=55 // pred_fallthru
        _
    $region56: #{decoder_forward.7} parent=5 // pred_fallthru
      _
  $region6: #{decoder_forward.7} parent=0 // loop_footer
    %s17 = sadd.s32 1, %s13
  $region7: #{decoder_forward.7} parent=0 // loop_footer_branch
    %12 = sbr.rel target = $region3
  $region8: #{decoder_forward.7} parent=0 // loop_exit
    _

// kernel: decoder_forward.9
$region0: #{decoder_forward.9}
  #allocation0 [shape = 'u32[]', space=smem, size = 0x4, offset = 0x4, fixed_abs, tag = 'smem constant byte address 0x4 - core index']
  #allocation1 [shape = 'u32[144,128]{1,0:T(1,128)}', space=vmem, size = 0x12000, scoped, tag = 'internal scratch']
  #allocation2 [shape = 'f32[8,32]{1,0:T(8,128)}', space=vmem, size = 0x1000, scoped, tag = 'scratch operand']
  %s0 = inlined_call_operand.vmem [shape: bf16[16,32], index: 0, kind: input, shape index: {}]
  %s1 = inlined_call_operand.vmem [shape: bf16[32,64], index: 1, kind: input, shape index: {}]
  %s2 = inlined_call_operand.vmem [shape: f32[1,64], index: 2, kind: input, shape index: {}]
  %s3 = inlined_call_operand.vmem [shape: bf16[64,32], index: 3, kind: input, shape index: {}]
  %s4 = inlined_call_operand.vmem [shape: f32[1,32], index: 4, kind: input, shape index: {}]
  %s5 = inlined_call_operand.vmem [shape: f32[1,32], index: 5, kind: input, shape index: {}]
  %s6 = inlined_call_operand.vmem [shape: f32[1,32], index: 6, kind: input, shape index: {}]
  %s7 = inlined_call_operand.vmem [shape: bf16[16,32], index: 7, kind: output, shape index: {}]
  %s8 = sld [smem:[#allocation0]]
  $region69: #{decoder_forward.9} parent=0
    _
  %s10 = ssub.s32 1, %s8
  %s11 = scalar_select 0, %s10, %s8
  loop: start=0, step=1, limit=4
  $region2: #{decoder_forward.9} parent=0 // loop_pre_header
    _
  $region3: #{decoder_forward.9} parent=0 // loop_header
    %s13 = sphi 0, %s17
    %p14 = scmp.ge.s32.totalorder %s13, 4
    %s20 = sphi 0, %s32
    %s21 = sphi 0, %s28
    %s22 = sphi 0, %s20
    %s23 = sphi 0, %s21
    %s24 = sphi 0, %s22
    %s25 = sphi 0, %s23
    %s35 = sphi 0, %s37
    %s38 = sphi 0, %s35
    %s39 = sphi 0, %s38
    %s55 = sphi 0, %s39
    %s59 = sphi 0, %s59
    %s61 = sphi 0, %s59
    %s62 = sphi 0, %s61
    %s76 = sphi 0, %s62
    %s80 = sphi 0, %s80
    %s82 = sphi 0, %s80
    %s83 = sphi 0, %s82
    %s97 = sphi 0, %s83
    %s101 = sphi 0, %s101
    %s103 = sphi 0, %s101
    %s104 = sphi 0, %s103
    %s118 = sphi 0, %s104
    %s122 = sphi 0, %s122
    %s124 = sphi 0, %s122
    %s125 = sphi 0, %s124
    %s139 = sphi 0, %s125
    %s143 = sphi 0, %s143
    %s145 = sphi 0, %s143
    %s146 = sphi 0, %s145
    %s160 = sphi 0, %s146
    %s164 = sphi 0, %s164
    %s166 = sphi 0, %s164
    %s167 = sphi 0, %s166
    %s181 = sphi 0, %s167
    %s187 = sphi 0, %s189
    %s190 = sphi 0, %s187
    %s191 = sphi 0, %s190
    %s207 = sphi 0, %s191
  $region4: #{decoder_forward.9} parent=0 // loop_header_branch
    %16 = sbr.rel (%p14) target = $region8
  $region5: #{decoder_forward.9} parent=0 // loop_body
    %s18 = ssub.s32 %s13, 1
    %s19 = ssub.s32 %s13, 2
    %s26 = sadd.s32 1, %s21
    %p27 = scmp.ge.s32.totalorder %s26, 1
    %s28 = scalar_select %p27, 0, %s26
    %s29 = sadd.s32 1, %s20
    %s30 = scalar_select %p27, %s29, %s20
    %p31 = scmp.ge.s32.totalorder %s30, 2
    %s32 = scalar_select %p31, 0, %s30
    %s33 = ssub.s32 %s20, %s32
    %p34 = scmp.eq.s32.totalorder %s33, 0
    %s36 = sadd.s32 %s35, 1
    %s37 = scalar_select %p34, %s35, %s36
    %p40 = pneg %p34
    %p41 = scmp.eq.s32.totalorder %s13, 1
    %p42 = por %p40, %p41
    %p43 = scmp.ne.s32.totalorder %s35, %s38
    %p44 = scmp.eq.s32.totalorder %s13, 0
    %p45 = por %p43, %p44
    %p46 = scmp.ne.s32.totalorder %s35, %s38
    %p47 = scmp.eq.s32.totalorder %s18, 1
    %p48 = por %p46, %p47
    %p49 = scmp.ne.s32.totalorder %s38, %s39
    %p50 = scmp.eq.s32.totalorder %s18, 0
    %p51 = por %p49, %p50
    %p52 = scmp.ne.s32.totalorder %s38, %s39
    %p53 = scmp.eq.s32.totalorder %s19, 1
    %p54 = por %p52, %p53
    %p56 = scmp.ne.s32.totalorder %s39, %s55
    %p57 = scmp.eq.s32.totalorder %s19, 0
    %p58 = por %p56, %p57
    %s60 = sadd.s32 %s59, 1
    %p63 = scmp.eq.s32.totalorder %s13, 1
    %p64 = scmp.ne.s32.totalorder %s59, %s61
    %p65 = scmp.eq.s32.totalorder %s13, 0
    %p66 = por %p64, %p65
    %p67 = scmp.ne.s32.totalorder %s59, %s61
    %p68 = scmp.eq.s32.totalorder %s18, 1
    %p69 = por %p67, %p68
    %p70 = scmp.ne.s32.totalorder %s61, %s62
    %p71 = scmp.eq.s32.totalorder %s18, 0
    %p72 = por %p70, %p71
    %p73 = scmp.ne.s32.totalorder %s61, %s62
    %p74 = scmp.eq.s32.totalorder %s19, 1
    %p75 = por %p73, %p74
    %p77 = scmp.ne.s32.totalorder %s62, %s76
    %p78 = scmp.eq.s32.totalorder %s19, 0
    %p79 = por %p77, %p78
    %s81 = sadd.s32 %s80, 1
    %p84 = scmp.eq.s32.totalorder %s13, 1
    %p85 = scmp.ne.s32.totalorder %s80, %s82
    %p86 = scmp.eq.s32.totalorder %s13, 0
    %p87 = por %p85, %p86
    %p88 = scmp.ne.s32.totalorder %s80, %s82
    %p89 = scmp.eq.s32.totalorder %s18, 1
    %p90 = por %p88, %p89
    %p91 = scmp.ne.s32.totalorder %s82, %s83
    %p92 = scmp.eq.s32.totalorder %s18, 0
    %p93 = por %p91, %p92
    %p94 = scmp.ne.s32.totalorder %s82, %s83
    %p95 = scmp.eq.s32.totalorder %s19, 1
    %p96 = por %p94, %p95
    %p98 = scmp.ne.s32.totalorder %s83, %s97
    %p99 = scmp.eq.s32.totalorder %s19, 0
    %p100 = por %p98, %p99
    %s102 = sadd.s32 %s101, 1
    %p105 = scmp.eq.s32.totalorder %s13, 1
    %p106 = scmp.ne.s32.totalorder %s101, %s103
    %p107 = scmp.eq.s32.totalorder %s13, 0
    %p108 = por %p106, %p107
    %p109 = scmp.ne.s32.totalorder %s101, %s103
    %p110 = scmp.eq.s32.totalorder %s18, 1
    %p111 = por %p109, %p110
    %p112 = scmp.ne.s32.totalorder %s103, %s104
    %p113 = scmp.eq.s32.totalorder %s18, 0
    %p114 = por %p112, %p113
    %p115 = scmp.ne.s32.totalorder %s103, %s104
    %p116 = scmp.eq.s32.totalorder %s19, 1
    %p117 = por %p115, %p116
    %p119 = scmp.ne.s32.totalorder %s104, %s118
    %p120 = scmp.eq.s32.totalorder %s19, 0
    %p121 = por %p119, %p120
    %s123 = sadd.s32 %s122, 1
    %p126 = scmp.eq.s32.totalorder %s13, 1
    %p127 = scmp.ne.s32.totalorder %s122, %s124
    %p128 = scmp.eq.s32.totalorder %s13, 0
    %p129 = por %p127, %p128
    %p130 = scmp.ne.s32.totalorder %s122, %s124
    %p131 = scmp.eq.s32.totalorder %s18, 1
    %p132 = por %p130, %p131
    %p133 = scmp.ne.s32.totalorder %s124, %s125
    %p134 = scmp.eq.s32.totalorder %s18, 0
    %p135 = por %p133, %p134
    %p136 = scmp.ne.s32.totalorder %s124, %s125
    %p137 = scmp.eq.s32.totalorder %s19, 1
    %p138 = por %p136, %p137
    %p140 = scmp.ne.s32.totalorder %s125, %s139
    %p141 = scmp.eq.s32.totalorder %s19, 0
    %p142 = por %p140, %p141
    %s144 = sadd.s32 %s143, 1
    %p147 = scmp.eq.s32.totalorder %s13, 1
    %p148 = scmp.ne.s32.totalorder %s143, %s145
    %p149 = scmp.eq.s32.totalorder %s13, 0
    %p150 = por %p148, %p149
    %p151 = scmp.ne.s32.totalorder %s143, %s145
    %p152 = scmp.eq.s32.totalorder %s18, 1
    %p153 = por %p151, %p152
    %p154 = scmp.ne.s32.totalorder %s145, %s146
    %p155 = scmp.eq.s32.totalorder %s18, 0
    %p156 = por %p154, %p155
    %p157 = scmp.ne.s32.totalorder %s145, %s146
    %p158 = scmp.eq.s32.totalorder %s19, 1
    %p159 = por %p157, %p158
    %p161 = scmp.ne.s32.totalorder %s146, %s160
    %p162 = scmp.eq.s32.totalorder %s19, 0
    %p163 = por %p161, %p162
    %s165 = sadd.s32 %s164, 1
    %p168 = scmp.eq.s32.totalorder %s13, 1
    %p169 = scmp.ne.s32.totalorder %s164, %s166
    %p170 = scmp.eq.s32.totalorder %s13, 0
    %p171 = por %p169, %p170
    %p172 = scmp.ne.s32.totalorder %s164, %s166
    %p173 = scmp.eq.s32.totalorder %s18, 1
    %p174 = por %p172, %p173
    %p175 = scmp.ne.s32.totalorder %s166, %s167
    %p176 = scmp.eq.s32.totalorder %s18, 0
    %p177 = por %p175, %p176
    %p178 = scmp.ne.s32.totalorder %s166, %s167
    %p179 = scmp.eq.s32.totalorder %s19, 1
    %p180 = por %p178, %p179
    %p182 = scmp.ne.s32.totalorder %s167, %s181
    %p183 = scmp.eq.s32.totalorder %s19, 0
    %p184 = por %p182, %p183
    %s185 = ssub.s32 %s20, %s32
    %p186 = scmp.eq.s32.totalorder %s185, 0
    %s188 = sadd.s32 %s187, 1
    %s189 = scalar_select %p186, %s187, %s188
    %p192 = pneg %p186
    %p193 = scmp.eq.s32.totalorder %s13, 1
    %p194 = por %p192, %p193
    %p195 = scmp.ne.s32.totalorder %s187, %s190
    %p196 = scmp.eq.s32.totalorder %s13, 0
    %p197 = por %p195, %p196
    %p198 = scmp.ne.s32.totalorder %s187, %s190
    %p199 = scmp.eq.s32.totalorder %s18, 1
    %p200 = por %p198, %p199
    %p201 = scmp.ne.s32.totalorder %s190, %s191
    %p202 = scmp.eq.s32.totalorder %s18, 0
    %p203 = por %p201, %p202
    %p204 = scmp.ne.s32.totalorder %s190, %s191
    %p205 = scmp.eq.s32.totalorder %s19, 1
    %p206 = por %p204, %p205
    %p208 = scmp.ne.s32.totalorder %s191, %s207
    %p209 = scmp.eq.s32.totalorder %s19, 0
    %p210 = por %p208, %p209
    %p211 = scmp.le.s32.totalorder 1, %s13
    %p212 = scmp.lt.s32.totalorder %s13, 3
    %p213 = pnand %p211, %p212
    %p214 = pneg %p213
    // Predicated region
    $region9: #{decoder_forward.9} parent=5 // pred_check
      _
    $region10: #{decoder_forward.9} parent=5 // pred_check_branch
      %216 = sbr.rel (%p213) target = $region12
    $region11: #{decoder_forward.9} parent=5 // pred_region
      %s217 = ssub.s32 %s13, 1
      // Predicated region
      $region13: #{decoder_forward.9} parent=11 // pred_check
        %p218 = pneg %p72
      $region14: #{decoder_forward.9} parent=11 // pred_check_branch
        %220 = sbr.rel (%p218) target = $region16
      $region15: #{decoder_forward.9} parent=11 // pred_region
        _
      $region16: #{decoder_forward.9} parent=11 // pred_fallthru
        _
      // Predicated region
      $region17: #{decoder_forward.9} parent=11 // pred_check
        %p221 = pneg %p93
      $region18: #{decoder_forward.9} parent=11 // pred_check_branch
        %223 = sbr.rel (%p221) target = $region20
      $region19: #{decoder_forward.9} parent=11 // pred_region
        _
      $region20: #{decoder_forward.9} parent=11 // pred_fallthru
        _
      // Predicated region
      $region21: #{decoder_forward.9} parent=11 // pred_check
        %p224 = pneg %p114
      $region22: #{decoder_forward.9} parent=11 // pred_check_branch
        %226 = sbr.rel (%p224) target = $region24
      $region23: #{decoder_forward.9} parent=11 // pred_region
        _
      $region24: #{decoder_forward.9} parent=11 // pred_fallthru
        _
      // Predicated region
      $region25: #{decoder_forward.9} parent=11 // pred_check
        %p227 = pneg %p135
      $region26: #{decoder_forward.9} parent=11 // pred_check_branch
        %229 = sbr.rel (%p227) target = $region28
      $region27: #{decoder_forward.9} parent=11 // pred_region
        _
      $region28: #{decoder_forward.9} parent=11 // pred_fallthru
        _
      // Predicated region
      $region29: #{decoder_forward.9} parent=11 // pred_check
        %p230 = pneg %p156
      $region30: #{decoder_forward.9} parent=11 // pred_check_branch
        %232 = sbr.rel (%p230) target = $region32
      $region31: #{decoder_forward.9} parent=11 // pred_region
        _
      $region32: #{decoder_forward.9} parent=11 // pred_fallthru
        _
      // Predicated region
      $region33: #{decoder_forward.9} parent=11 // pred_check
        %p233 = pneg %p177
      $region34: #{decoder_forward.9} parent=11 // pred_check_branch
        %235 = sbr.rel (%p233) target = $region36
      $region35: #{decoder_forward.9} parent=11 // pred_region
        _
      $region36: #{decoder_forward.9} parent=11 // pred_fallthru
        _
    $region12: #{decoder_forward.9} parent=5 // pred_fallthru
      _
    %p236 = scmp.lt.s32.totalorder %s13, 2
    // Predicated region
    $region37: #{decoder_forward.9} parent=5 // pred_check
      %p237 = pneg %p236
    $region38: #{decoder_forward.9} parent=5 // pred_check_branch
      %239 = sbr.rel (%p237) target = $region40
    $region39: #{decoder_forward.9} parent=5 // pred_region
      // Predicated region
      $region41: #{decoder_forward.9} parent=39 // pred_check
        %p240 = pneg %p45
      $region42: #{decoder_forward.9} parent=39 // pred_check_branch
        %242 = sbr.rel (%p240) target = $region44
      $region43: #{decoder_forward.9} parent=39 // pred_region
        %p243 = scmp.lt.s32.totalorder %s20, 1
        %s244 = scalar_select %p243, %s20, 1
        %s245 = smul.addr %s244, 4
        %s246 = scalar_lea.vmem %s0, %s245
      $region44: #{decoder_forward.9} parent=39 // pred_fallthru
        _
    $region40: #{decoder_forward.9} parent=5 // pred_fallthru
      _
    %p247 = scmp.le.s32.totalorder 1, %s13
    %p248 = scmp.lt.s32.totalorder %s13, 3
    %p249 = pnand %p247, %p248
    %p250 = pneg %p249
    // Predicated region
    $region45: #{decoder_forward.9} parent=5 // pred_check
      _
    $region46: #{decoder_forward.9} parent=5 // pred_check_branch
      %252 = sbr.rel (%p249) target = $region48
    $region47: #{decoder_forward.9} parent=5 // pred_region
      %s253 = ssub.s32 %s13, 1
      %p254 = scmp.lt.s32.totalorder %s22, 1
      %s255 = scalar_select %p254, %s22, 1
      %s256 = smul.addr %s255, 4
      %s257 = scalar_lea.vmem %s0, %s256
      %p258 = pneg %p51
      %p259 = pneg %p48
      %p260 = pneg %p72
      %p261 = pneg %p69
      %p262 = pneg %p93
      %p263 = pneg %p90
      %p264 = pneg %p114
      %p265 = pneg %p111
      %p266 = pneg %p135
      %p267 = pneg %p132
      %p268 = pneg %p156
      %p269 = pneg %p153
      %p270 = pneg %p177
      %p271 = pneg %p174
      %p272 = pneg %p203
      %p273 = pneg %p200
      %p274 = scmp.lt.s32.totalorder %s22, 1
      %s275 = scalar_select %p274, %s22, 1
      %s276 = smul.addr %s275, 4
      %s277 = scalar_lea.vmem %s7, %s276
      %p278 = scmp.lt.s32.totalorder %s22, 1
      %s279 = scalar_select %p278, %s22, 1
      %s280 = smul.addr %s279, 4
      %s281 = scalar_lea.vmem %s0, %s280
      %p282 = scmp.lt.s32.totalorder %s22, 1
      %s283 = scalar_select %p282, %s22, 1
      %s284 = smul.addr %s283, 4
      %s285 = scalar_lea.vmem %s7, %s284
      %p287 = scmp.eq.s32.totalorder %s23, 0
      // Predicated region
      $region49: #{decoder_forward.9} parent=47 // pred_check
        %p288 = pneg %p287
      $region50: #{decoder_forward.9} parent=47 // pred_check_branch
        %290 = sbr.rel (%p288) target = $region52
      $region51: #{decoder_forward.9} parent=47 // pred_region
        %vm291 = vcmask 261120
        %292 = vst.msk [vmem:[#allocation2] sm:$0xff] %vm291, 0.0
      $region52: #{decoder_forward.9} parent=47 // pred_fallthru
        _
      %v293 = vld [vmem:[%s281] sm:$0xf]
      %v294 = vld [vmem:[%s1] sm:$0xf]
      %v295 = vld [vmem:[%s1 + $0x4] sm:$0xf]
      %v296 = vld [vmem:[%s1 + $0x8] sm:$0xf]
      %v297 = vld [vmem:[%s1 + $0xc] sm:$0xf]
      %v298 = vld [vmem:[%s2] sm:$0x1]
      %v300 = vlaneseq
      %v301 = vshrl.u32 %v300, 7
      %v302 = vsub.s32 0, %v301
      %v303 = vrot.slane %v298, %v302
      %v309 = vunpack.c.l.b16 %v294
      %v310 = vunpack.c.l.b16 %v295
      %v311 = vunpack.c.l.b16 %v296
      %v312 = vunpack.c.l.b16 %v297
      %v313 = vpack.c.b16 %v310, %v309
      %v314 = vpack.c.b16 %v312, %v311
      %vm317 = vcmask 261120
      %v319 = vsel %vm317, %v293, 0
      %321 = vmatprep.subr.bf16.mxu0 0
      %322 = vmatpush1.bf16.msra.mxu0 %v313
      %323 = vmatprep.subr.bf16.mxu0 0
      %324 = vmatpush1.bf16.msra.mxu0 %v314
      %325 = vmatprep.subr.bf16.mxu0 0
      %326 = vmatpush1.bf16.msra.mxu0 0
      %327 = vmatprep.subr.bf16.mxu0 0
      %328 = vmatpush1.bf16.msra.mxu0 0
      %329 = vmatprep.subr.bf16.mxu0 0
      %330 = vmatpush1.bf16.msra.mxu0 0
      %331 = vmatprep.subr.bf16.mxu0 0
      %332 = vmatpush1.bf16.msra.mxu0 0
      %333 = vmatprep.subr.bf16.mxu0 0
      %334 = vmatpush1.bf16.msra.mxu0 0
      %335 = vmatprep.subr.bf16.mxu0 0
      %336 = vmatpush1.bf16.msra.mxu0 0
      %337 = vmatprep.subr.bf16.mxu0 0
      %338 = vmatpush1.bf16.msra.mxu0 0
      %339 = vmatprep.subr.bf16.mxu0 0
      %340 = vmatpush1.bf16.msra.mxu0 0
      %341 = vmatprep.subr.bf16.mxu0 0
      %342 = vmatpush1.bf16.msra.mxu0 0
      %343 = vmatprep.subr.bf16.mxu0 0
      %344 = vmatpush1.bf16.msra.mxu0 0
      %345 = vmatprep.subr.bf16.mxu0 0
      %346 = vmatpush1.bf16.msra.mxu0 0
      %347 = vmatprep.subr.bf16.mxu0 0
      %348 = vmatpush1.bf16.msra.mxu0 0
      %349 = vmatprep.subr.bf16.mxu0 0
      %350 = vmatpush1.bf16.msra.mxu0 0
      %351 = vmatprep.subr.bf16.mxu0 0
      %352 = vmatpush1.bf16.msra.mxu0 0
      %353 = vmatprep.mubr.bf16.mxu0 0
      %354 = vmatmul.mubr.bf16.gmra.mrb[0].mxu0 %v319
      %v355 = vpop.f32.mrb[0].mxu0
      %v356 = vadd.f32 %v303, %v355
      %v357 = vpop.f32.mrb[0].mxu0
      %v358 = vpop.f32.mrb[0].mxu0
      %v359 = vpop.f32.mrb[0].mxu0
      %360 = vdwg.mxu0
      %v361 = vmax.f32 %v356, 0.0
      %v362 = vld [vmem:[#allocation2] sm:$0xff]
      %v363 = vld [vmem:[%s3] sm:$0xf]
      %v364 = vld [vmem:[%s3 + $0x4] sm:$0xf]
      %v365 = vld [vmem:[%s3 + $0x8] sm:$0xf]
      %v366 = vld [vmem:[%s3 + $0xc] sm:$0xf]
      %v367 = vld [vmem:[%s3 + $0x10] sm:$0xf]
      %v368 = vld [vmem:[%s3 + $0x14] sm:$0xf]
      %v369 = vld [vmem:[%s3 + $0x18] sm:$0xf]
      %v370 = vld [vmem:[%s3 + $0x1c] sm:$0xf]
      %v371 = vpack.c.bf16 %v361, %v361
      %v380 = vunpack.c.l.b16 %v363
      %v381 = vunpack.c.l.b16 %v364
      %v382 = vunpack.c.l.b16 %v365
      %v383 = vunpack.c.l.b16 %v366
      %v384 = vunpack.c.l.b16 %v367
      %v385 = vunpack.c.l.b16 %v368
      %v386 = vunpack.c.l.b16 %v369
      %v387 = vunpack.c.l.b16 %v370
      %v388 = vpack.c.b16 %v381, %v380
      %v389 = vpack.c.b16 %v383, %v382
      %v390 = vpack.c.b16 %v385, %v384
      %v391 = vpack.c.b16 %v387, %v386
      %vm396 = vcmask 523264
      %v398 = vsel %vm396, %v371, 0
      %400 = vmatprep.subr.bf16.mxu0 0
      %401 = vmatpush1.bf16.msra.mxu0 %v388
      %402 = vmatprep.subr.bf16.mxu0 0
      %403 = vmatpush1.bf16.msra.mxu0 %v389
      %404 = vmatprep.subr.bf16.mxu0 0
      %405 = vmatpush1.bf16.msra.mxu0 %v390
      %406 = vmatprep.subr.bf16.mxu0 0
      %407 = vmatpush1.bf16.msra.mxu0 %v391
      %408 = vmatprep.subr.bf16.mxu0 0
      %409 = vmatpush1.bf16.msra.mxu0 0
      %410 = vmatprep.subr.bf16.mxu0 0
      %411 = vmatpush1.bf16.msra.mxu0 0
      %412 = vmatprep.subr.bf16.mxu0 0
      %413 = vmatpush1.bf16.msra.mxu0 0
      %414 = vmatprep.subr.bf16.mxu0 0
      %415 = vmatpush1.bf16.msra.mxu0 0
      %416 = vmatprep.subr.bf16.mxu0 0
      %417 = vmatpush1.bf16.msra.mxu0 0
      %418 = vmatprep.subr.bf16.mxu0 0
      %419 = vmatpush1.bf16.msra.mxu0 0
      %420 = vmatprep.subr.bf16.mxu0 0
      %421 = vmatpush1.bf16.msra.mxu0 0
      %422 = vmatprep.subr.bf16.mxu0 0
      %423 = vmatpush1.bf16.msra.mxu0 0
      %424 = vmatprep.subr.bf16.mxu0 0
      %425 = vmatpush1.bf16.msra.mxu0 0
      %426 = vmatprep.subr.bf16.mxu0 0
      %427 = vmatpush1.bf16.msra.mxu0 0
      %428 = vmatprep.subr.bf16.mxu0 0
      %429 = vmatpush1.bf16.msra.mxu0 0
      %430 = vmatprep.subr.bf16.mxu0 0
      %431 = vmatpush1.bf16.msra.mxu0 0
      %432 = vmatprep.mubr.bf16.mxu0 0
      %433 = vmatmul.mubr.bf16.gmra.mrb[0].mxu0 %v398
      %v434 = vpop.f32.mrb[0].mxu0
      %v435 = vadd.f32 0.0, %v434
      %v436 = vpop.f32.mrb[0].mxu0
      %v437 = vpop.f32.mrb[0].mxu0
      %v438 = vpop.f32.mrb[0].mxu0
      %439 = vdwg.mxu0
      %v440 = vadd.f32 %v362, %v435
      %441 = vst.msk [vmem:[#allocation2] sm:$0xff] %vm317, %v440
      // Predicated region
      $region53: #{decoder_forward.9} parent=47 // pred_check
        %p442 = pneg %p287
      $region54: #{decoder_forward.9} parent=47 // pred_check_branch
        %444 = sbr.rel (%p442) target = $region56
      $region55: #{decoder_forward.9} parent=47 // pred_region
        %v445 = vunpack.c.l.bf16 %v293
        %v446 = vld [vmem:[#allocation2] sm:$0xff]
        %v447 = vadd.f32 %v445, %v446
        %v448 = vld [vmem:[%s4] sm:$0x1]
        %v450 = vlaneseq
        %v451 = vshrl.u32 %v450, 7
        %v452 = vsub.s32 0, %v451
        %v453 = vrot.slane %v448, %v452
        %v455 = vadd.f32 %v447, %v453
        %v456 = vld [vmem:[%s5] sm:$0x1]
        %v457 = vld [vmem:[%s6] sm:$0x1]
        %v458 = vsel %vm317, %v455, 0.0
        %459 = vadd.xlane.f32.xlu0 %v458
        %v460 = vpop.xlane.xlu0 %459
        %v461 = vrcp.pop 32.0
        %v462 = vmul.f32 %v460, %v461
        %v463 = vsub.f32 %v455, %v462
        %v464 = vmul.f32 %v463, %v463
        %v465 = vsel %vm317, %v464, 0.0
        %466 = vadd.xlane.f32.xlu0 %v465
        %v467 = vpop.xlane.xlu0 %466
        %v468 = vmul.f32 %v467, %v461
        %v469 = vadd.f32 %v468, 1e-05
        %v470 = vrsqrt.pop %v469
        %v471 = vmul.f32 %v463, %v470
        %v473 = vlaneseq
        %v474 = vshrl.u32 %v473, 7
        %v475 = vsub.s32 0, %v474
        %v476 = vrot.slane %v456, %v475
        %v478 = vmul.f32 %v471, %v476
        %v480 = vlaneseq
        %v481 = vshrl.u32 %v480, 7
        %v482 = vsub.s32 0, %v481
        %v483 = vrot.slane %v457, %v482
        %v485 = vadd.f32 %v478, %v483
        %v486 = vpack.c.bf16 %v485, %v485
        %vm487 = vcmask 257024
        %488 = vst.msk [vmem:[%s285] sm:$0xf] %vm487, %v486
      $region56: #{decoder_forward.9} parent=47 // pred_fallthru
        _
      %p489 = scmp.lt.s32.totalorder %s22, 1
      %s490 = scalar_select %p489, %s22, 1
      %s491 = smul.addr %s490, 4
      %s492 = scalar_lea.vmem %s7, %s491
      // Predicated region
      $region57: #{decoder_forward.9} parent=47 // pred_check
        %p493 = pneg %p200
      $region58: #{decoder_forward.9} parent=47 // pred_check_branch
        %495 = sbr.rel (%p493) target = $region60
      $region59: #{decoder_forward.9} parent=47 // pred_region
        _
      $region60: #{decoder_forward.9} parent=47 // pred_fallthru
        _
    $region48: #{decoder_forward.9} parent=5 // pred_fallthru
      _
    %p496 = scmp.le.s32.totalorder 2, %s13
    // Predicated region
    $region61: #{decoder_forward.9} parent=5 // pred_check
      %p497 = pneg %p496
    $region62: #{decoder_forward.9} parent=5 // pred_check_branch
      %499 = sbr.rel (%p497) target = $region64
    $region63: #{decoder_forward.9} parent=5 // pred_region
      %s500 = ssub.s32 %s13, 2
      // Predicated region
      $region65: #{decoder_forward.9} parent=63 // pred_check
        %p501 = pneg %p206
      $region66: #{decoder_forward.9} parent=63 // pred_check_branch
        %503 = sbr.rel (%p501) target = $region68
      $region67: #{decoder_forward.9} parent=63 // pred_region
        %p504 = scmp.lt.s32.totalorder %s24, 1
        %s505 = scalar_select %p504, %s24, 1
        %s506 = smul.addr %s505, 4
        %s507 = scalar_lea.vmem %s7, %s506
      $region68: #{decoder_forward.9} parent=63 // pred_fallthru
        _
    $region64: #{decoder_forward.9} parent=5 // pred_fallthru
      _
  $region6: #{decoder_forward.9} parent=0 // loop_footer
    %s17 = sadd.s32 1, %s13
  $region7: #{decoder_forward.9} parent=0 // loop_footer_branch
    %12 = sbr.rel target = $region3
  $region8: #{decoder_forward.9} parent=0 // loop_exit
    _

</llo_original>
